<compile_context>
chip_gen: v6e
topology: v6e:2x2x1
jax: 0.10.0
libtpu: 0.0.40
codegen_flags: <defaults>
</compile_context>

<pallas_src>
import numpy as np
import jax
import jax.numpy as jnp
from jax.experimental import pallas as pl
from jax.experimental.pallas import tpu as pltpu

# ----------------------------- configuration (small) -----------------------------
DIM = 32                 # channels C
NUM_HEADS = 4
WINDOW_SIZE = 4
N_TOK = WINDOW_SIZE * WINDOW_SIZE     # 16 tokens per window
HEAD_DIM = DIM // NUM_HEADS           # 8
MAX_BLOCKS = 2           # grid steps; 2 => both TensorCores on v7x. (Use 1 on v5e/v6e
                         # to fold everything into a single M=128 matmul if desired.)


# ------------------------------ host-side constants -------------------------------

def relative_position_index_np(ws):
    coords = np.stack(np.meshgrid(np.arange(ws), np.arange(ws), indexing="ij"))  # (2,ws,ws)
    coords_flatten = coords.reshape(2, -1)
    rel = coords_flatten[:, :, None] - coords_flatten[:, None, :]
    rel = rel.transpose(1, 2, 0).astype(np.int64)
    rel[:, :, 0] += ws - 1
    rel[:, :, 1] += ws - 1
    rel[:, :, 0] *= 2 * ws - 1
    return rel.sum(-1)                                      # (N, N)


REL_INDEX = relative_position_index_np(WINDOW_SIZE)


def compute_attn_mask_np(Hs, Ws, ws, ss):
    """Standard Swin shifted-window attention mask, shape (nW, N, N)."""
    img_mask = np.zeros((1, Hs, Ws, 1), np.float32)
    cnt = 0
    for h in (slice(0, -ws), slice(-ws, -ss), slice(-ss, None)):
        for w in (slice(0, -ws), slice(-ws, -ss), slice(-ss, None)):
            img_mask[:, h, w, :] = cnt
            cnt += 1
    mw = img_mask.reshape(1, Hs // ws, ws, Ws // ws, ws, 1)
    mw = mw.transpose(0, 1, 3, 2, 4, 5).reshape(-1, ws * ws)
    diff = mw[:, None, :] - mw[:, :, None]
    return np.where(diff != 0, -100.0, 0.0).astype(np.float32)


# ------------------------------ Pallas kernel --------------------------------------

def _window_attn_kernel(x_ref, wqkv_ref, bqkv_ref, wo_ref, bo_ref, bm_ref, o_ref):
    WB, N, C = x_ref.shape
    H = bm_ref.shape[0]
    hd = C // H
    M = WB * N

    x = x_ref[...].reshape(M, C)                            # all windows of this block

    # Single fused QKV matmul; q-scale already folded into the weights/bias.
    qkv = jnp.dot(x, wqkv_ref[...], preferred_element_type=jnp.float32) + bqkv_ref[...]

    head_outs = []
    for h in range(H):                                      # heads unrolled (static)
        q = qkv[:, h * hd:(h + 1) * hd].reshape(WB, N, hd)
        k = qkv[:, C + h * hd:C + (h + 1) * hd].reshape(WB, N, hd)
        v = qkv[:, 2 * C + h * hd:2 * C + (h + 1) * hd].reshape(WB, N, hd)

        s = jnp.einsum('wnd,wmd->wnm', q, k,
                       preferred_element_type=jnp.float32)  # (WB, N, N)
        s = s + bm_ref[h]                                   # rel-pos bias + mask (fused const)
        s = s - jnp.max(s, axis=-1, keepdims=True)
        p = jnp.exp(s)
        p = p * pl.reciprocal(jnp.sum(p, axis=-1, keepdims=True), approx=True)

        ov = jnp.einsum('wnm,wmd->wnd', p, v,
                        preferred_element_type=jnp.float32)  # (WB, N, hd)
        head_outs.append(ov.reshape(M, hd))

    o = jnp.concatenate(head_outs, axis=-1)                 # (M, C): concat over heads
    o = jnp.dot(o, wo_ref[...], preferred_element_type=jnp.float32) + bo_ref[...]
    o_ref[...] = o.reshape(WB, N, C).astype(o_ref.dtype)


def window_attention_pallas(x, wqkv, bqkv, wo, bo, bm):
    """x: (B_, N, C); bm: (H, WB, N, N) fused rel-bias+mask; returns (B_, N, C)."""
    B_, N, C = x.shape
    H, WB = bm.shape[0], bm.shape[1]
    n_blocks = B_ // WB
    return pl.pallas_call(
        _window_attn_kernel,
        out_shape=jax.ShapeDtypeStruct((B_, N, C), x.dtype),
        grid=(n_blocks,),
        in_specs=[
            pl.BlockSpec((WB, N, C), lambda i: (i, 0, 0)),
            pl.BlockSpec((C, 3 * C), lambda i: (0, 0)),
            pl.BlockSpec((1, 3 * C), lambda i: (0, 0)),
            pl.BlockSpec((C, C), lambda i: (0, 0)),
            pl.BlockSpec((1, C), lambda i: (0, 0)),
            pl.BlockSpec((H, WB, N, N), lambda i: (0, 0, 0, 0)),
        ],
        out_specs=pl.BlockSpec((WB, N, C), lambda i: (i, 0, 0)),
        compiler_params=pltpu.CompilerParams(dimension_semantics=("parallel",)),
    )(x, wqkv, bqkv, wo, bo, bm)


# --------------------------- parameter prep (host, once) ---------------------------

def init_params(key, dim, num_heads, ws):
    k1, k2, k3, k4, k5 = jax.random.split(key, 5)

    def rnd(k, shape, s=0.05):
        return jax.random.normal(k, shape, jnp.float32) * s

    return {
        "qkv_w": rnd(k1, (3 * dim, dim)),          # torch Linear(dim, 3*dim).weight
        "qkv_b": rnd(k2, (3 * dim,)),
        "proj_w": rnd(k3, (dim, dim)),             # torch Linear(dim, dim).weight
        "proj_b": rnd(k4, (dim,)),
        "rel_table": rnd(k5, ((2 * ws - 1) ** 2, num_heads), 0.02),
    }


def prepare_kernel_inputs(p, B_, mask=None, max_blocks=MAX_BLOCKS):
    """Fold q-scale into Wq/bq, transpose weights to (K, N) layout, and fuse the
    relative-position bias with the attention mask into one (H, WB, N, N) constant."""
    C = p["qkv_w"].shape[1]
    H = NUM_HEADS
    hd = C // H
    N = N_TOK
    scale = hd ** (-0.5)

    wqkv = jnp.concatenate([p["qkv_w"][:C] * scale, p["qkv_w"][C:]], axis=0).T    # (C, 3C)
    bqkv = jnp.concatenate([p["qkv_b"][:C] * scale, p["qkv_b"][C:]]).reshape(1, 3 * C)
    wo = p["proj_w"].T                                                            # (C, C)
    bo = p["proj_b"].reshape(1, C)

    rel_bias = (p["rel_table"][REL_INDEX.reshape(-1)]
                .reshape(N, N, H).transpose(2, 0, 1))                             # (H, N, N)

    if mask is None:
        mask = jnp.zeros((1, N, N), jnp.float32)
    nW = mask.shape[0]
    n_img = B_ // nW
    n_blocks = max(1, min(max_blocks, n_img))
    while n_img % n_blocks:
        n_blocks -= 1
    WB = B_ // n_blocks                                    # windows per grid block

    mask_tiled = jnp.tile(mask, (WB // nW, 1, 1))          # (WB, N, N); idx = window % nW
    bm = rel_bias[:, None, :, :] + mask_tiled[None, :, :, :]   # (H, WB, N, N)
    return wqkv, bqkv, wo, bo, bm


# ------------------------------ pure-JAX reference ---------------------------------

def window_attention_ref(x, p, mask=None):
    B_, N, C = x.shape
    H = NUM_HEADS
    hd = C // H
    qkv = x @ p["qkv_w"].T + p["qkv_b"]
    qkv = qkv.reshape(B_, N, 3, H, hd).transpose(2, 0, 3, 1, 4)
    q, k, v = qkv[0], qkv[1], qkv[2]                       # (B_, H, N, hd)
    q = q * (hd ** (-0.5))
    attn = q @ jnp.swapaxes(k, -2, -1)                     # (B_, H, N, N)
    rel_bias = (p["rel_table"][REL_INDEX.reshape(-1)]
                .reshape(N, N, H).transpose(2, 0, 1))
    attn = attn + rel_bias[None]
    if mask is not None:
        nW = mask.shape[0]
        attn = attn.reshape(B_ // nW, nW, H, N, N) + mask[None, :, None]
        attn = attn.reshape(B_, H, N, N)
    attn = jax.nn.softmax(attn, axis=-1)
    out = (attn @ v).transpose(0, 2, 1, 3).reshape(B_, N, C)
    return out @ p["proj_w"].T + p["proj_b"]


# ------------------------------------ main ------------------------------------------

if __name__ == "__main__":
    key = jax.random.PRNGKey(0)
    kx, kp = jax.random.split(key)

    B = 2
    H_FEAT = W_FEAT = 8
    nW = (H_FEAT // WINDOW_SIZE) * (W_FEAT // WINDOW_SIZE)   # 4 windows per image
    B_ = B * nW                                              # 8 windows total

    x = jax.random.normal(kx, (B_, N_TOK, DIM), jnp.float32)
    params = init_params(kp, DIM, NUM_HEADS, WINDOW_SIZE)
    mask = jnp.asarray(compute_attn_mask_np(H_FEAT, W_FEAT, WINDOW_SIZE, WINDOW_SIZE // 2))

    fwd = jax.jit(window_attention_pallas)

    # shifted-window path (mask given)
    kin_m = prepare_kernel_inputs(params, B_, mask=mask)
    out_m = jax.block_until_ready(fwd(x, *kin_m))
    ref_m = window_attention_ref(x, params, mask=mask)

    # plain path (mask=None)
    kin_0 = prepare_kernel_inputs(params, B_, mask=None)
    out_0 = jax.block_until_ready(fwd(x, *kin_0))
    ref_0 = window_attention_ref(x, params, mask=None)

    assert out_m.shape == (B_, N_TOK, DIM), out_m.shape
    assert out_m.dtype == jnp.float32
    assert bool(jnp.all(jnp.isfinite(out_m))) and bool(jnp.all(jnp.isfinite(out_0)))
    assert bool(jnp.allclose(out_m, ref_m, atol=2e-2, rtol=2e-2)), \
        float(jnp.max(jnp.abs(out_m - ref_m)))
    assert bool(jnp.allclose(out_0, ref_0, atol=2e-2, rtol=2e-2)), \
        float(jnp.max(jnp.abs(out_0 - ref_0)))
    print("KERNEL_OK")
</pallas_src>

<mosaic_0001>
module attributes {stable_mosaic.version = 11 : i64} {
  func.func @_window_attn_kernel(%arg0: i32, %arg1: memref<4x16x32xf32, #tpu.memory_space<vmem>>, %arg2: memref<32x96xf32, #tpu.memory_space<vmem>>, %arg3: memref<1x96xf32, #tpu.memory_space<vmem>>, %arg4: memref<32x32xf32, #tpu.memory_space<vmem>>, %arg5: memref<1x32xf32, #tpu.memory_space<vmem>>, %arg6: memref<4x4x16x16xf32, #tpu.memory_space<vmem>>, %arg7: memref<4x16x32xf32, #tpu.memory_space<vmem>>) attributes {dimension_semantics = [#tpu.dimension_semantics<parallel>], iteration_bounds = array<i64: 2>, scalar_prefetch = 0 : i64, scratch_operands = 0 : i64, tpu.core_type = #tpu.core_type<tc>, window_params = [{transform_indices = @transform_0, window_bounds = array<i64: 4, 16, 32>}, {pipeline_mode = #tpu.pipeline_mode<synchronous>, transform_indices = @transform_1, window_bounds = array<i64: 32, 96>}, {pipeline_mode = #tpu.pipeline_mode<synchronous>, transform_indices = @transform_2, window_bounds = array<i64: 1, 96>}, {pipeline_mode = #tpu.pipeline_mode<synchronous>, transform_indices = @transform_3, window_bounds = array<i64: 32, 32>}, {pipeline_mode = #tpu.pipeline_mode<synchronous>, transform_indices = @transform_4, window_bounds = array<i64: 1, 32>}, {pipeline_mode = #tpu.pipeline_mode<synchronous>, transform_indices = @transform_5, window_bounds = array<i64: 4, 4, 16, 16>}, {transform_indices = @transform_6, window_bounds = array<i64: 4, 16, 32>}]} {
    %c0 = arith.constant 0 : index
    %c0_0 = arith.constant 0 : index
    %c0_1 = arith.constant 0 : index
    %0 = vector.load %arg1[%c0, %c0_0, %c0_1] : memref<4x16x32xf32, #tpu.memory_space<vmem>>, vector<4x16x32xf32>
    %1 = vector.shape_cast %0 : vector<4x16x32xf32> to vector<64x32xf32>
    %c0_2 = arith.constant 0 : index
    %c0_3 = arith.constant 0 : index
    %2 = vector.load %arg2[%c0_2, %c0_3] : memref<32x96xf32, #tpu.memory_space<vmem>>, vector<32x96xf32>
    %cst = arith.constant dense<0.000000e+00> : vector<64x96xf32>
    %3 = tpu.matmul %1, %2, %cst {dimension_numbers = #tpu.dot_dimension_numbers<[1], [0], [0], [1], [0, 0, 1, 1], [], []>} : vector<64x32xf32>, vector<32x96xf32>, vector<64x96xf32> -> vector<64x96xf32>
    %c0_4 = arith.constant 0 : index
    %c0_5 = arith.constant 0 : index
    %4 = vector.load %arg3[%c0_4, %c0_5] : memref<1x96xf32, #tpu.memory_space<vmem>>, vector<1x96xf32>
    %5 = vector.broadcast %4 : vector<1x96xf32> to vector<64x96xf32>
    %6 = arith.addf %3, %5 : vector<64x96xf32>
    %7 = vector.extract_strided_slice %6 {offsets = [0, 0], sizes = [64, 8], strides = [1, 1]} : vector<64x96xf32> to vector<64x8xf32>
    %8 = vector.shape_cast %7 : vector<64x8xf32> to vector<4x16x8xf32>
    %9 = vector.extract_strided_slice %6 {offsets = [0, 32], sizes = [64, 8], strides = [1, 1]} : vector<64x96xf32> to vector<64x8xf32>
    %10 = vector.shape_cast %9 : vector<64x8xf32> to vector<4x16x8xf32>
    %11 = vector.extract_strided_slice %6 {offsets = [0, 64], sizes = [64, 8], strides = [1, 1]} : vector<64x96xf32> to vector<64x8xf32>
    %12 = vector.shape_cast %11 : vector<64x8xf32> to vector<4x16x8xf32>
    "tpu.trace_start"() <{level = 10 : i32, message = "wnd,wmd->wnm"}> : () -> ()
    %cst_6 = arith.constant dense<0.000000e+00> : vector<4x16x16xf32>
    %13 = tpu.matmul %8, %10, %cst_6 {dimension_numbers = #tpu.dot_dimension_numbers<[2], [2], [1], [1], [0, 0, 0, 1, 1, 1], [0], [0]>} : vector<4x16x8xf32>, vector<4x16x8xf32>, vector<4x16x16xf32> -> vector<4x16x16xf32>
    "tpu.trace_stop"() : () -> ()
    %c0_7 = arith.constant 0 : index
    %c0_8 = arith.constant 0 : index
    %c0_9 = arith.constant 0 : index
    %c0_10 = arith.constant 0 : index
    %14 = vector.load %arg6[%c0_7, %c0_8, %c0_9, %c0_10] : memref<4x4x16x16xf32, #tpu.memory_space<vmem>>, vector<1x4x16x16xf32>
    %15 = vector.shape_cast %14 : vector<1x4x16x16xf32> to vector<4x16x16xf32>
    %16 = arith.addf %13, %15 : vector<4x16x16xf32>
    %cst_11 = arith.constant dense<0xFF800000> : vector<4x16xf32>
    %17 = vector.multi_reduction <maximumf>, %16, %cst_11 [2] : vector<4x16x16xf32> to vector<4x16xf32>
    %18 = vector.shape_cast %17 : vector<4x16xf32> to vector<4x16x1xf32>
    %19 = vector.broadcast %18 : vector<4x16x1xf32> to vector<4x16x16xf32>
    %20 = arith.subf %16, %19 : vector<4x16x16xf32>
    %21 = math.exp %20 : vector<4x16x16xf32>
    %cst_12 = arith.constant dense<0.000000e+00> : vector<4x16xf32>
    %22 = vector.multi_reduction <add>, %21, %cst_12 [2] : vector<4x16x16xf32> to vector<4x16xf32>
    %23 = vector.shape_cast %22 : vector<4x16xf32> to vector<4x16x1xf32>
    %24 = tpu.reciprocal %23 {approx = true} : vector<4x16x1xf32> -> vector<4x16x1xf32>
    %25 = vector.broadcast %24 : vector<4x16x1xf32> to vector<4x16x16xf32>
    %26 = arith.mulf %21, %25 : vector<4x16x16xf32>
    "tpu.trace_start"() <{level = 10 : i32, message = "wnm,wmd->wnd"}> : () -> ()
    %cst_13 = arith.constant dense<0.000000e+00> : vector<4x16x8xf32>
    %27 = tpu.matmul %26, %12, %cst_13 {dimension_numbers = #tpu.dot_dimension_numbers<[2], [1], [1], [2], [0, 0, 0, 1, 1, 2], [0], [0]>} : vector<4x16x16xf32>, vector<4x16x8xf32>, vector<4x16x8xf32> -> vector<4x16x8xf32>
    "tpu.trace_stop"() : () -> ()
    %28 = vector.shape_cast %27 : vector<4x16x8xf32> to vector<64x8xf32>
    %29 = vector.extract_strided_slice %6 {offsets = [0, 8], sizes = [64, 8], strides = [1, 1]} : vector<64x96xf32> to vector<64x8xf32>
    %30 = vector.shape_cast %29 : vector<64x8xf32> to vector<4x16x8xf32>
    %31 = vector.extract_strided_slice %6 {offsets = [0, 40], sizes = [64, 8], strides = [1, 1]} : vector<64x96xf32> to vector<64x8xf32>
    %32 = vector.shape_cast %31 : vector<64x8xf32> to vector<4x16x8xf32>
    %33 = vector.extract_strided_slice %6 {offsets = [0, 72], sizes = [64, 8], strides = [1, 1]} : vector<64x96xf32> to vector<64x8xf32>
    %34 = vector.shape_cast %33 : vector<64x8xf32> to vector<4x16x8xf32>
    "tpu.trace_start"() <{level = 10 : i32, message = "wnd,wmd->wnm"}> : () -> ()
    %cst_14 = arith.constant dense<0.000000e+00> : vector<4x16x16xf32>
    %35 = tpu.matmul %30, %32, %cst_14 {dimension_numbers = #tpu.dot_dimension_numbers<[2], [2], [1], [1], [0, 0, 0, 1, 1, 1], [0], [0]>} : vector<4x16x8xf32>, vector<4x16x8xf32>, vector<4x16x16xf32> -> vector<4x16x16xf32>
    "tpu.trace_stop"() : () -> ()
    %c1 = arith.constant 1 : index
    %c0_15 = arith.constant 0 : index
    %c0_16 = arith.constant 0 : index
    %c0_17 = arith.constant 0 : index
    %36 = vector.load %arg6[%c1, %c0_15, %c0_16, %c0_17] : memref<4x4x16x16xf32, #tpu.memory_space<vmem>>, vector<1x4x16x16xf32>
    %37 = vector.shape_cast %36 : vector<1x4x16x16xf32> to vector<4x16x16xf32>
    %38 = arith.addf %35, %37 : vector<4x16x16xf32>
    %cst_18 = arith.constant dense<0xFF800000> : vector<4x16xf32>
    %39 = vector.multi_reduction <maximumf>, %38, %cst_18 [2] : vector<4x16x16xf32> to vector<4x16xf32>
    %40 = vector.shape_cast %39 : vector<4x16xf32> to vector<4x16x1xf32>
    %41 = vector.broadcast %40 : vector<4x16x1xf32> to vector<4x16x16xf32>
    %42 = arith.subf %38, %41 : vector<4x16x16xf32>
    %43 = math.exp %42 : vector<4x16x16xf32>
    %cst_19 = arith.constant dense<0.000000e+00> : vector<4x16xf32>
    %44 = vector.multi_reduction <add>, %43, %cst_19 [2] : vector<4x16x16xf32> to vector<4x16xf32>
    %45 = vector.shape_cast %44 : vector<4x16xf32> to vector<4x16x1xf32>
    %46 = tpu.reciprocal %45 {approx = true} : vector<4x16x1xf32> -> vector<4x16x1xf32>
    %47 = vector.broadcast %46 : vector<4x16x1xf32> to vector<4x16x16xf32>
    %48 = arith.mulf %43, %47 : vector<4x16x16xf32>
    "tpu.trace_start"() <{level = 10 : i32, message = "wnm,wmd->wnd"}> : () -> ()
    %cst_20 = arith.constant dense<0.000000e+00> : vector<4x16x8xf32>
    %49 = tpu.matmul %48, %34, %cst_20 {dimension_numbers = #tpu.dot_dimension_numbers<[2], [1], [1], [2], [0, 0, 0, 1, 1, 2], [0], [0]>} : vector<4x16x16xf32>, vector<4x16x8xf32>, vector<4x16x8xf32> -> vector<4x16x8xf32>
    "tpu.trace_stop"() : () -> ()
    %50 = vector.shape_cast %49 : vector<4x16x8xf32> to vector<64x8xf32>
    %51 = vector.extract_strided_slice %6 {offsets = [0, 16], sizes = [64, 8], strides = [1, 1]} : vector<64x96xf32> to vector<64x8xf32>
    %52 = vector.shape_cast %51 : vector<64x8xf32> to vector<4x16x8xf32>
    %53 = vector.extract_strided_slice %6 {offsets = [0, 48], sizes = [64, 8], strides = [1, 1]} : vector<64x96xf32> to vector<64x8xf32>
    %54 = vector.shape_cast %53 : vector<64x8xf32> to vector<4x16x8xf32>
    %55 = vector.extract_strided_slice %6 {offsets = [0, 80], sizes = [64, 8], strides = [1, 1]} : vector<64x96xf32> to vector<64x8xf32>
    %56 = vector.shape_cast %55 : vector<64x8xf32> to vector<4x16x8xf32>
    "tpu.trace_start"() <{level = 10 : i32, message = "wnd,wmd->wnm"}> : () -> ()
    %cst_21 = arith.constant dense<0.000000e+00> : vector<4x16x16xf32>
    %57 = tpu.matmul %52, %54, %cst_21 {dimension_numbers = #tpu.dot_dimension_numbers<[2], [2], [1], [1], [0, 0, 0, 1, 1, 1], [0], [0]>} : vector<4x16x8xf32>, vector<4x16x8xf32>, vector<4x16x16xf32> -> vector<4x16x16xf32>
    "tpu.trace_stop"() : () -> ()
    %c2 = arith.constant 2 : index
    %c0_22 = arith.constant 0 : index
    %c0_23 = arith.constant 0 : index
    %c0_24 = arith.constant 0 : index
    %58 = vector.load %arg6[%c2, %c0_22, %c0_23, %c0_24] : memref<4x4x16x16xf32, #tpu.memory_space<vmem>>, vector<1x4x16x16xf32>
    %59 = vector.shape_cast %58 : vector<1x4x16x16xf32> to vector<4x16x16xf32>
    %60 = arith.addf %57, %59 : vector<4x16x16xf32>
    %cst_25 = arith.constant dense<0xFF800000> : vector<4x16xf32>
    %61 = vector.multi_reduction <maximumf>, %60, %cst_25 [2] : vector<4x16x16xf32> to vector<4x16xf32>
    %62 = vector.shape_cast %61 : vector<4x16xf32> to vector<4x16x1xf32>
    %63 = vector.broadcast %62 : vector<4x16x1xf32> to vector<4x16x16xf32>
    %64 = arith.subf %60, %63 : vector<4x16x16xf32>
    %65 = math.exp %64 : vector<4x16x16xf32>
    %cst_26 = arith.constant dense<0.000000e+00> : vector<4x16xf32>
    %66 = vector.multi_reduction <add>, %65, %cst_26 [2] : vector<4x16x16xf32> to vector<4x16xf32>
    %67 = vector.shape_cast %66 : vector<4x16xf32> to vector<4x16x1xf32>
    %68 = tpu.reciprocal %67 {approx = true} : vector<4x16x1xf32> -> vector<4x16x1xf32>
    %69 = vector.broadcast %68 : vector<4x16x1xf32> to vector<4x16x16xf32>
    %70 = arith.mulf %65, %69 : vector<4x16x16xf32>
    "tpu.trace_start"() <{level = 10 : i32, message = "wnm,wmd->wnd"}> : () -> ()
    %cst_27 = arith.constant dense<0.000000e+00> : vector<4x16x8xf32>
    %71 = tpu.matmul %70, %56, %cst_27 {dimension_numbers = #tpu.dot_dimension_numbers<[2], [1], [1], [2], [0, 0, 0, 1, 1, 2], [0], [0]>} : vector<4x16x16xf32>, vector<4x16x8xf32>, vector<4x16x8xf32> -> vector<4x16x8xf32>
    "tpu.trace_stop"() : () -> ()
    %72 = vector.shape_cast %71 : vector<4x16x8xf32> to vector<64x8xf32>
    %73 = vector.extract_strided_slice %6 {offsets = [0, 24], sizes = [64, 8], strides = [1, 1]} : vector<64x96xf32> to vector<64x8xf32>
    %74 = vector.shape_cast %73 : vector<64x8xf32> to vector<4x16x8xf32>
    %75 = vector.extract_strided_slice %6 {offsets = [0, 56], sizes = [64, 8], strides = [1, 1]} : vector<64x96xf32> to vector<64x8xf32>
    %76 = vector.shape_cast %75 : vector<64x8xf32> to vector<4x16x8xf32>
    %77 = vector.extract_strided_slice %6 {offsets = [0, 88], sizes = [64, 8], strides = [1, 1]} : vector<64x96xf32> to vector<64x8xf32>
    %78 = vector.shape_cast %77 : vector<64x8xf32> to vector<4x16x8xf32>
    "tpu.trace_start"() <{level = 10 : i32, message = "wnd,wmd->wnm"}> : () -> ()
    %cst_28 = arith.constant dense<0.000000e+00> : vector<4x16x16xf32>
    %79 = tpu.matmul %74, %76, %cst_28 {dimension_numbers = #tpu.dot_dimension_numbers<[2], [2], [1], [1], [0, 0, 0, 1, 1, 1], [0], [0]>} : vector<4x16x8xf32>, vector<4x16x8xf32>, vector<4x16x16xf32> -> vector<4x16x16xf32>
    "tpu.trace_stop"() : () -> ()
    %c3 = arith.constant 3 : index
    %c0_29 = arith.constant 0 : index
    %c0_30 = arith.constant 0 : index
    %c0_31 = arith.constant 0 : index
    %80 = vector.load %arg6[%c3, %c0_29, %c0_30, %c0_31] : memref<4x4x16x16xf32, #tpu.memory_space<vmem>>, vector<1x4x16x16xf32>
    %81 = vector.shape_cast %80 : vector<1x4x16x16xf32> to vector<4x16x16xf32>
    %82 = arith.addf %79, %81 : vector<4x16x16xf32>
    %cst_32 = arith.constant dense<0xFF800000> : vector<4x16xf32>
    %83 = vector.multi_reduction <maximumf>, %82, %cst_32 [2] : vector<4x16x16xf32> to vector<4x16xf32>
    %84 = vector.shape_cast %83 : vector<4x16xf32> to vector<4x16x1xf32>
    %85 = vector.broadcast %84 : vector<4x16x1xf32> to vector<4x16x16xf32>
    %86 = arith.subf %82, %85 : vector<4x16x16xf32>
    %87 = math.exp %86 : vector<4x16x16xf32>
    %cst_33 = arith.constant dense<0.000000e+00> : vector<4x16xf32>
    %88 = vector.multi_reduction <add>, %87, %cst_33 [2] : vector<4x16x16xf32> to vector<4x16xf32>
    %89 = vector.shape_cast %88 : vector<4x16xf32> to vector<4x16x1xf32>
    %90 = tpu.reciprocal %89 {approx = true} : vector<4x16x1xf32> -> vector<4x16x1xf32>
    %91 = vector.broadcast %90 : vector<4x16x1xf32> to vector<4x16x16xf32>
    %92 = arith.mulf %87, %91 : vector<4x16x16xf32>
    "tpu.trace_start"() <{level = 10 : i32, message = "wnm,wmd->wnd"}> : () -> ()
    %cst_34 = arith.constant dense<0.000000e+00> : vector<4x16x8xf32>
    %93 = tpu.matmul %92, %78, %cst_34 {dimension_numbers = #tpu.dot_dimension_numbers<[2], [1], [1], [2], [0, 0, 0, 1, 1, 2], [0], [0]>} : vector<4x16x16xf32>, vector<4x16x8xf32>, vector<4x16x8xf32> -> vector<4x16x8xf32>
    "tpu.trace_stop"() : () -> ()
    %94 = vector.shape_cast %93 : vector<4x16x8xf32> to vector<64x8xf32>
    %95 = tpu.concatenate %28, %50, %72, %94 in 1 : vector<64x8xf32>, vector<64x8xf32>, vector<64x8xf32>, vector<64x8xf32> -> vector<64x32xf32>
    %c0_35 = arith.constant 0 : index
    %c0_36 = arith.constant 0 : index
    %96 = vector.load %arg4[%c0_35, %c0_36] : memref<32x32xf32, #tpu.memory_space<vmem>>, vector<32x32xf32>
    %cst_37 = arith.constant dense<0.000000e+00> : vector<64x32xf32>
    %97 = tpu.matmul %95, %96, %cst_37 {dimension_numbers = #tpu.dot_dimension_numbers<[1], [0], [0], [1], [0, 0, 1, 1], [], []>} : vector<64x32xf32>, vector<32x32xf32>, vector<64x32xf32> -> vector<64x32xf32>
    %c0_38 = arith.constant 0 : index
    %c0_39 = arith.constant 0 : index
    %98 = vector.load %arg5[%c0_38, %c0_39] : memref<1x32xf32, #tpu.memory_space<vmem>>, vector<1x32xf32>
    %99 = vector.broadcast %98 : vector<1x32xf32> to vector<64x32xf32>
    %100 = arith.addf %97, %99 : vector<64x32xf32>
    %101 = vector.shape_cast %100 : vector<64x32xf32> to vector<4x16x32xf32>
    %c0_40 = arith.constant 0 : index
    %c0_41 = arith.constant 0 : index
    %c0_42 = arith.constant 0 : index
    %102 = vector.load %arg7[%c0_40, %c0_41, %c0_42] : memref<4x16x32xf32, #tpu.memory_space<vmem>>, vector<4x16x32xf32>
    tpu.vector_store %arg7[%c0_40, %c0_41, %c0_42], %101 {strides = array<i32>} : memref<4x16x32xf32, #tpu.memory_space<vmem>>, vector<4x16x32xf32>,
    return
  }
  func.func @transform_0(%arg0: i32) -> (i32, i32, i32) {
    %c0_i32 = arith.constant 0 : i32
    %c0_i32_0 = arith.constant 0 : i32
    %c0_i32_1 = arith.constant 0 : i32
    return %arg0, %c0_i32, %c0_i32_0 : i32, i32, i32
  }
  func.func @transform_1(%arg0: i32) -> (i32, i32) {
    %c0_i32 = arith.constant 0 : i32
    %c0_i32_0 = arith.constant 0 : i32
    %c0_i32_1 = arith.constant 0 : i32
    return %c0_i32, %c0_i32_0 : i32, i32
  }
  func.func @transform_2(%arg0: i32) -> (i32, i32) {
    %c0_i32 = arith.constant 0 : i32
    %c0_i32_0 = arith.constant 0 : i32
    %c0_i32_1 = arith.constant 0 : i32
    return %c0_i32, %c0_i32_0 : i32, i32
  }
  func.func @transform_3(%arg0: i32) -> (i32, i32) {
    %c0_i32 = arith.constant 0 : i32
    %c0_i32_0 = arith.constant 0 : i32
    %c0_i32_1 = arith.constant 0 : i32
    return %c0_i32, %c0_i32_0 : i32, i32
  }
  func.func @transform_4(%arg0: i32) -> (i32, i32) {
    %c0_i32 = arith.constant 0 : i32
    %c0_i32_0 = arith.constant 0 : i32
    %c0_i32_1 = arith.constant 0 : i32
    return %c0_i32, %c0_i32_0 : i32, i32
  }
  func.func @transform_5(%arg0: i32) -> (i32, i32, i32, i32) {
    %c0_i32 = arith.constant 0 : i32
    %c0_i32_0 = arith.constant 0 : i32
    %c0_i32_1 = arith.constant 0 : i32
    %c0_i32_2 = arith.constant 0 : i32
    %c0_i32_3 = arith.constant 0 : i32
    return %c0_i32, %c0_i32_0, %c0_i32_1, %c0_i32_2 : i32, i32, i32, i32
  }
  func.func @transform_6(%arg0: i32) -> (i32, i32, i32) {
    %c0_i32 = arith.constant 0 : i32
    %c0_i32_0 = arith.constant 0 : i32
    %c0_i32_1 = arith.constant 0 : i32
    return %arg0, %c0_i32, %c0_i32_0 : i32, i32, i32
  }
}

</mosaic_0001>

<llo_original>
// kernel: window_attention_pallas.1
$region0: #{window_attention_pallas.1}
  #allocation0 [shape = 'u32[]', space=smem, size = 0x4, offset = 0x4, fixed_abs, tag = 'smem constant byte address 0x4 - core index']
  #allocation1 [shape = 'u32[144,128]{1,0:T(1,128)}', space=vmem, size = 0x12000, scoped, tag = 'internal scratch']
  %s0 = inlined_call_operand.hbm [shape: f32[8,16,32], index: 0, kind: input, shape index: {}]
  %s1 = inlined_call_operand.hbm [shape: f32[32,96], index: 1, kind: input, shape index: {}]
  %s2 = inlined_call_operand.vmem [shape: f32[1,96], index: 2, kind: input, shape index: {}]
  %s3 = inlined_call_operand.hbm [shape: f32[32,32], index: 3, kind: input, shape index: {}]
  %s4 = inlined_call_operand.vmem [shape: f32[1,32], index: 4, kind: input, shape index: {}]
  %s5 = inlined_call_operand.hbm [shape: f32[4,4,16,16], index: 5, kind: input, shape index: {}]
  %s6 = inlined_call_operand.hbm [shape: f32[8,16,32], index: 6, kind: output, shape index: {}]
  %s7 = sld [smem:[#allocation0]]
  $region73: #{window_attention_pallas.1} parent=0
    _
  %s9 = ssub.s32 1, %s7
  %s10 = scalar_select 0, %s9, %s7
  $region1: #{window_attention_pallas.1} parent=0
    #allocation2 [shape = 'u8[65536]{0}', space=vmem, size = 0x10000, scoped, tag = 'input window, operand 0']
    #allocation3 [shape = 's32[2]{0}', space=sflag, size = 0x8, scoped, tag = 'scoped memory for window_attention_pallas.1']
    #allocation4 [shape = 's32[2]{0}', space=sflag, size = 0x8, scoped, tag = 'scoped memory for window_attention_pallas.1']
    #allocation5 [shape = 'u8[16384]{0}', space=vmem, size = 0x4000, scoped, tag = 'input window, operand 1, single buffered']
    #allocation6 [shape = 's32[1]{0}', space=sflag, size = 0x4, scoped, tag = 'scoped memory for window_attention_pallas.1']
    #allocation7 [shape = 'u8[16384]{0}', space=vmem, size = 0x4000, scoped, tag = 'input window, operand 3, single buffered']
    #allocation8 [shape = 'u8[131072]{0}', space=vmem, size = 0x20000, scoped, tag = 'input window, operand 5, single buffered']
    #allocation9 [shape = 's32[1]{0}', space=sflag, size = 0x4, scoped, tag = 'scoped memory for window_attention_pallas.1']
    #allocation10 [shape = 'u8[65536]{0}', space=vmem, size = 0x10000, scoped, tag = 'output window, operand 0']
    %11 = vsyncpa [#allocation3], 0
    %s12 = scalar_lea.sflag [#allocation3], 1
    %13 = vsyncpa %s12, 0
    %14 = vsyncpa [#allocation6], 0
    %15 = vsyncpa [#allocation9], 0
    %16 = vsyncpa [#allocation4], 0
    %s17 = scalar_lea.sflag [#allocation4], 1
    %18 = vsyncpa %s17, 0
    loop: start=0, step=1, limit=4
    $region2: #{window_attention_pallas.1} parent=1 // loop_pre_header
      _
    $region3: #{window_attention_pallas.1} parent=1 // loop_header
      %s20 = sphi 0, %s24
      %p21 = scmp.ge.s32.totalorder %s20, 4
      %s30 = sphi 0, %s32
      %s33 = sphi 0, %s30
      %s34 = sphi 0, %s33
      %s50 = sphi 0, %s34
      %s54 = sphi 0, %s54
      %s56 = sphi 0, %s54
      %s57 = sphi 0, %s56
      %s71 = sphi 0, %s57
      %s75 = sphi 0, %s75
      %s77 = sphi 0, %s75
      %s78 = sphi 0, %s77
      %s92 = sphi 0, %s78
      %s96 = sphi 0, %s96
      %s98 = sphi 0, %s96
      %s99 = sphi 0, %s98
      %s113 = sphi 0, %s99
      %s117 = sphi 0, %s117
      %s119 = sphi 0, %s117
      %s120 = sphi 0, %s119
      %s134 = sphi 0, %s120
      %s138 = sphi 0, %s138
      %s140 = sphi 0, %s138
      %s141 = sphi 0, %s140
      %s155 = sphi 0, %s141
      %s161 = sphi 0, %s163
      %s164 = sphi 0, %s161
      %s165 = sphi 0, %s164
      %s181 = sphi 0, %s165
    $region4: #{window_attention_pallas.1} parent=1 // loop_header_branch
      %23 = sbr.rel (%p21) target = $region8
    $region5: #{window_attention_pallas.1} parent=1 // loop_body
      %s25 = ssub.s32 %s20, 1
      %s26 = ssub.s32 %s20, 2
      %s27 = sadd.s32 %s20, 1
      %s28 = ssub.s32 %s20, %s27
      %p29 = scmp.eq.s32.totalorder %s28, 0
      %s31 = sadd.s32 %s30, 1
      %s32 = scalar_select %p29, %s30, %s31
      %p35 = pneg %p29
      %p36 = scmp.eq.s32.totalorder %s20, 1
      %p37 = por %p35, %p36
      %p38 = scmp.ne.s32.totalorder %s30, %s33
      %p39 = scmp.eq.s32.totalorder %s20, 0
      %p40 = por %p38, %p39
      %p41 = scmp.ne.s32.totalorder %s30, %s33
      %p42 = scmp.eq.s32.totalorder %s25, 1
      %p43 = por %p41, %p42
      %p44 = scmp.ne.s32.totalorder %s33, %s34
      %p45 = scmp.eq.s32.totalorder %s25, 0
      %p46 = por %p44, %p45
      %p47 = scmp.ne.s32.totalorder %s33, %s34
      %p48 = scmp.eq.s32.totalorder %s26, 1
      %p49 = por %p47, %p48
      %p51 = scmp.ne.s32.totalorder %s34, %s50
      %p52 = scmp.eq.s32.totalorder %s26, 0
      %p53 = por %p51, %p52
      %s55 = sadd.s32 %s54, 1
      %p58 = scmp.eq.s32.totalorder %s20, 1
      %p59 = scmp.ne.s32.totalorder %s54, %s56
      %p60 = scmp.eq.s32.totalorder %s20, 0
      %p61 = por %p59, %p60
      %p62 = scmp.ne.s32.totalorder %s54, %s56
      %p63 = scmp.eq.s32.totalorder %s25, 1
      %p64 = por %p62, %p63
      %p65 = scmp.ne.s32.totalorder %s56, %s57
      %p66 = scmp.eq.s32.totalorder %s25, 0
      %p67 = por %p65, %p66
      %p68 = scmp.ne.s32.totalorder %s56, %s57
      %p69 = scmp.eq.s32.totalorder %s26, 1
      %p70 = por %p68, %p69
      %p72 = scmp.ne.s32.totalorder %s57, %s71
      %p73 = scmp.eq.s32.totalorder %s26, 0
      %p74 = por %p72, %p73
      %s76 = sadd.s32 %s75, 1
      %p79 = scmp.eq.s32.totalorder %s20, 1
      %p80 = scmp.ne.s32.totalorder %s75, %s77
      %p81 = scmp.eq.s32.totalorder %s20, 0
      %p82 = por %p80, %p81
      %p83 = scmp.ne.s32.totalorder %s75, %s77
      %p84 = scmp.eq.s32.totalorder %s25, 1
      %p85 = por %p83, %p84
      %p86 = scmp.ne.s32.totalorder %s77, %s78
      %p87 = scmp.eq.s32.totalorder %s25, 0
      %p88 = por %p86, %p87
      %p89 = scmp.ne.s32.totalorder %s77, %s78
      %p90 = scmp.eq.s32.totalorder %s26, 1
      %p91 = por %p89, %p90
      %p93 = scmp.ne.s32.totalorder %s78, %s92
      %p94 = scmp.eq.s32.totalorder %s26, 0
      %p95 = por %p93, %p94
      %s97 = sadd.s32 %s96, 1
      %p100 = scmp.eq.s32.totalorder %s20, 1
      %p101 = scmp.ne.s32.totalorder %s96, %s98
      %p102 = scmp.eq.s32.totalorder %s20, 0
      %p103 = por %p101, %p102
      %p104 = scmp.ne.s32.totalorder %s96, %s98
      %p105 = scmp.eq.s32.totalorder %s25, 1
      %p106 = por %p104, %p105
      %p107 = scmp.ne.s32.totalorder %s98, %s99
      %p108 = scmp.eq.s32.totalorder %s25, 0
      %p109 = por %p107, %p108
      %p110 = scmp.ne.s32.totalorder %s98, %s99
      %p111 = scmp.eq.s32.totalorder %s26, 1
      %p112 = por %p110, %p111
      %p114 = scmp.ne.s32.totalorder %s99, %s113
      %p115 = scmp.eq.s32.totalorder %s26, 0
      %p116 = por %p114, %p115
      %s118 = sadd.s32 %s117, 1
      %p121 = scmp.eq.s32.totalorder %s20, 1
      %p122 = scmp.ne.s32.totalorder %s117, %s119
      %p123 = scmp.eq.s32.totalorder %s20, 0
      %p124 = por %p122, %p123
      %p125 = scmp.ne.s32.totalorder %s117, %s119
      %p126 = scmp.eq.s32.totalorder %s25, 1
      %p127 = por %p125, %p126
      %p128 = scmp.ne.s32.totalorder %s119, %s120
      %p129 = scmp.eq.s32.totalorder %s25, 0
      %p130 = por %p128, %p129
      %p131 = scmp.ne.s32.totalorder %s119, %s120
      %p132 = scmp.eq.s32.totalorder %s26, 1
      %p133 = por %p131, %p132
      %p135 = scmp.ne.s32.totalorder %s120, %s134
      %p136 = scmp.eq.s32.totalorder %s26, 0
      %p137 = por %p135, %p136
      %s139 = sadd.s32 %s138, 1
      %p142 = scmp.eq.s32.totalorder %s20, 1
      %p143 = scmp.ne.s32.totalorder %s138, %s140
      %p144 = scmp.eq.s32.totalorder %s20, 0
      %p145 = por %p143, %p144
      %p146 = scmp.ne.s32.totalorder %s138, %s140
      %p147 = scmp.eq.s32.totalorder %s25, 1
      %p148 = por %p146, %p147
      %p149 = scmp.ne.s32.totalorder %s140, %s141
      %p150 = scmp.eq.s32.totalorder %s25, 0
      %p151 = por %p149, %p150
      %p152 = scmp.ne.s32.totalorder %s140, %s141
      %p153 = scmp.eq.s32.totalorder %s26, 1
      %p154 = por %p152, %p153
      %p156 = scmp.ne.s32.totalorder %s141, %s155
      %p157 = scmp.eq.s32.totalorder %s26, 0
      %p158 = por %p156, %p157
      %s159 = ssub.s32 %s20, %s27
      %p160 = scmp.eq.s32.totalorder %s159, 0
      %s162 = sadd.s32 %s161, 1
      %s163 = scalar_select %p160, %s161, %s162
      %p166 = pneg %p160
      %p167 = scmp.eq.s32.totalorder %s20, 1
      %p168 = por %p166, %p167
      %p169 = scmp.ne.s32.totalorder %s161, %s164
      %p170 = scmp.eq.s32.totalorder %s20, 0
      %p171 = por %p169, %p170
      %p172 = scmp.ne.s32.totalorder %s161, %s164
      %p173 = scmp.eq.s32.totalorder %s25, 1
      %p174 = por %p172, %p173
      %p175 = scmp.ne.s32.totalorder %s164, %s165
      %p176 = scmp.eq.s32.totalorder %s25, 0
      %p177 = por %p175, %p176
      %p178 = scmp.ne.s32.totalorder %s164, %s165
      %p179 = scmp.eq.s32.totalorder %s26, 1
      %p180 = por %p178, %p179
      %p182 = scmp.ne.s32.totalorder %s165, %s181
      %p183 = scmp.eq.s32.totalorder %s26, 0
      %p184 = por %p182, %p183
      %p185 = scmp.le.s32.totalorder 1, %s20
      %p186 = scmp.lt.s32.totalorder %s20, 3
      %p187 = pnand %p185, %p186
      %p188 = pneg %p187
      // Predicated region
      $region9: #{window_attention_pallas.1} parent=5 // pred_check
        _
      $region10: #{window_attention_pallas.1} parent=5 // pred_check_branch
        %190 = sbr.rel (%p187) target = $region12
      $region11: #{window_attention_pallas.1} parent=5 // pred_region
        %s191 = ssub.s32 %s20, 1
        // Predicated region
        $region13: #{window_attention_pallas.1} parent=11 // pred_check
          %p192 = pneg %p67
        $region14: #{window_attention_pallas.1} parent=11 // pred_check_branch
          %194 = sbr.rel (%p192) target = $region16
        $region15: #{window_attention_pallas.1} parent=11 // pred_region
          %s196 = ssub.s32 512, 512
          %197 = vsyncadd [#allocation6], %s196
          %s198 = sshll.u32 [#allocation5], 4
          %s199 = int_to_ptr.vmem [resolvable:$true] %s198
          %204 = dma.hbm_to_vmem [thread:$0]  %s1, 512, %s199, [#allocation6], 128, 128, 8
        $region16: #{window_attention_pallas.1} parent=11 // pred_fallthru
          _
        // Predicated region
        $region17: #{window_attention_pallas.1} parent=11 // pred_check
          %p205 = pneg %p88
        $region18: #{window_attention_pallas.1} parent=11 // pred_check_branch
          %207 = sbr.rel (%p205) target = $region20
        $region19: #{window_attention_pallas.1} parent=11 // pred_region
          _
        $region20: #{window_attention_pallas.1} parent=11 // pred_fallthru
          _
        // Predicated region
        $region21: #{window_attention_pallas.1} parent=11 // pred_check
          %p208 = pneg %p109
        $region22: #{window_attention_pallas.1} parent=11 // pred_check_branch
          %210 = sbr.rel (%p208) target = $region24
        $region23: #{window_attention_pallas.1} parent=11 // pred_region
          %s212 = ssub.s32 512, 512
          %213 = vsyncadd [#allocation6], %s212
          %s214 = sshll.u32 [#allocation7], 4
          %s215 = int_to_ptr.vmem [resolvable:$true] %s214
          %220 = dma.hbm_to_vmem [thread:$0]  %s3, 512, %s215, [#allocation6], 128, 128, 8
        $region24: #{window_attention_pallas.1} parent=11 // pred_fallthru
          _
        // Predicated region
        $region25: #{window_attention_pallas.1} parent=11 // pred_check
          %p221 = pneg %p130
        $region26: #{window_attention_pallas.1} parent=11 // pred_check_branch
          %223 = sbr.rel (%p221) target = $region28
        $region27: #{window_attention_pallas.1} parent=11 // pred_region
          _
        $region28: #{window_attention_pallas.1} parent=11 // pred_fallthru
          _
        // Predicated region
        $region29: #{window_attention_pallas.1} parent=11 // pred_check
          %p224 = pneg %p151
        $region30: #{window_attention_pallas.1} parent=11 // pred_check_branch
          %226 = sbr.rel (%p224) target = $region32
        $region31: #{window_attention_pallas.1} parent=11 // pred_region
          %s228 = ssub.s32 4096, 4096
          %229 = vsyncadd [#allocation9], %s228
          %s230 = sshll.u32 [#allocation8], 4
          %s231 = int_to_ptr.vmem [resolvable:$true] %s230
          %236 = dma.hbm_to_vmem [thread:$0]  %s5, 4096, %s231, [#allocation9], 128, 128, 8
        $region32: #{window_attention_pallas.1} parent=11 // pred_fallthru
          _
      $region12: #{window_attention_pallas.1} parent=5 // pred_fallthru
        _
      %p237 = scmp.lt.s32.totalorder %s20, 2
      // Predicated region
      $region33: #{window_attention_pallas.1} parent=5 // pred_check
        %p238 = pneg %p237
      $region34: #{window_attention_pallas.1} parent=5 // pred_check_branch
        %240 = sbr.rel (%p238) target = $region36
      $region35: #{window_attention_pallas.1} parent=5 // pred_region
        // Predicated region
        $region37: #{window_attention_pallas.1} parent=35 // pred_check
          %p241 = pneg %p40
        $region38: #{window_attention_pallas.1} parent=35 // pred_check_branch
          %243 = sbr.rel (%p241) target = $region40
        $region39: #{window_attention_pallas.1} parent=35 // pred_region
          %s244 = sand.u32 %s30, 1
          %s245 = scalar_lea.sflag [#allocation3], %s244
          %s246 = sand.u32 %s30, 1
          %s247 = smul.addr %s246, 64
          %s248 = scalar_lea.vmem [#allocation2], %s247
          %s249 = smul.u32 4, %s20
          %s251 = ssub.s32 1024, 1024
          %252 = vsyncadd %s245, %s251
          %s253 = smul.addr %s249, 2
          %s254 = smul.addr %s253, 128
          %s255 = scalar_lea.hbm %s0, %s254
          %s256 = sshll.u32 %s248, 4
          %s257 = int_to_ptr.vmem [resolvable:$true] %s256
          %262 = dma.hbm_to_vmem [thread:$0]  %s255, 1024, %s257, %s245, 128, 128, 8
        $region40: #{window_attention_pallas.1} parent=35 // pred_fallthru
          _
      $region36: #{window_attention_pallas.1} parent=5 // pred_fallthru
        _
      %p263 = scmp.le.s32.totalorder 1, %s20
      %p264 = scmp.lt.s32.totalorder %s20, 3
      %p265 = pnand %p263, %p264
      %p266 = pneg %p265
      // Predicated region
      $region41: #{window_attention_pallas.1} parent=5 // pred_check
        _
      $region42: #{window_attention_pallas.1} parent=5 // pred_check_branch
        %268 = sbr.rel (%p265) target = $region44
      $region43: #{window_attention_pallas.1} parent=5 // pred_region
        %s269 = ssub.s32 %s20, 1
        %s270 = sand.u32 %s33, 1
        %s271 = scalar_lea.sflag [#allocation3], %s270
        %s272 = sand.u32 %s33, 1
        %s273 = smul.addr %s272, 64
        %s274 = scalar_lea.vmem [#allocation2], %s273
        // Predicated region
        $region45: #{window_attention_pallas.1} parent=43 // pred_check
          %p275 = pneg %p46
        $region46: #{window_attention_pallas.1} parent=43 // pred_check_branch
          %277 = sbr.rel (%p275) target = $region48
        $region47: #{window_attention_pallas.1} parent=43 // pred_region
          %278 = dma.done %s271, 1024
        $region48: #{window_attention_pallas.1} parent=43 // pred_fallthru
          _
        // Predicated region
        $region49: #{window_attention_pallas.1} parent=43 // pred_check
          %p279 = pneg %p67
        $region50: #{window_attention_pallas.1} parent=43 // pred_check_branch
          %281 = sbr.rel (%p279) target = $region52
        $region51: #{window_attention_pallas.1} parent=43 // pred_region
          %282 = dma.done [#allocation6], 512
        $region52: #{window_attention_pallas.1} parent=43 // pred_fallthru
          _
        // Predicated region
        $region53: #{window_attention_pallas.1} parent=43 // pred_check
          %p283 = pneg %p109
        $region54: #{window_attention_pallas.1} parent=43 // pred_check_branch
          %285 = sbr.rel (%p283) target = $region56
        $region55: #{window_attention_pallas.1} parent=43 // pred_region
          %286 = dma.done [#allocation6], 512
        $region56: #{window_attention_pallas.1} parent=43 // pred_fallthru
          _
        // Predicated region
        $region57: #{window_attention_pallas.1} parent=43 // pred_check
          %p287 = pneg %p151
        $region58: #{window_attention_pallas.1} parent=43 // pred_check_branch
          %289 = sbr.rel (%p287) target = $region60
        $region59: #{window_attention_pallas.1} parent=43 // pred_region
          %290 = dma.done [#allocation9], 4096
        $region60: #{window_attention_pallas.1} parent=43 // pred_fallthru
          _
        %s291 = sand.u32 %s33, 1
        %s292 = scalar_lea.sflag [#allocation3], %s291
        %s293 = sand.u32 %s33, 1
        %s294 = smul.addr %s293, 64
        %s295 = scalar_lea.vmem [#allocation2], %s294
        %p296 = pneg %p46
        %p297 = pneg %p43
        %p298 = pneg %p67
        %p299 = pneg %p64
        %p300 = pneg %p88
        %p301 = pneg %p85
        %p302 = pneg %p109
        %p303 = pneg %p106
        %p304 = pneg %p130
        %p305 = pneg %p127
        %p306 = pneg %p151
        %p307 = pneg %p148
        %p308 = pneg %p177
        %p309 = pneg %p174
        %s310 = sand.u32 %s164, 1
        %s311 = scalar_lea.sflag [#allocation4], %s310
        %s312 = sand.u32 %s164, 1
        %s313 = smul.addr %s312, 64
        %s314 = scalar_lea.vmem [#allocation10], %s313
        %s315 = smul.u32 4, %s25
        %s316 = smul.u32 4, %s25
        %v317 = vld [vmem:[%s274] sm:$0xff]
        %v318 = vld [vmem:[%s274 + $0x8] sm:$0xff]
        %v319 = vld [vmem:[%s274 + $0x10] sm:$0xff]
        %v320 = vld [vmem:[%s274 + $0x18] sm:$0xff]
        %v321 = vld [vmem:[%s274 + $0x20] sm:$0xff]
        %v322 = vld [vmem:[%s274 + $0x28] sm:$0xff]
        %v323 = vld [vmem:[%s274 + $0x30] sm:$0xff]
        %v324 = vld [vmem:[%s274 + $0x38] sm:$0xff]
        %v325 = vld [vmem:[#allocation5] sm:$0xff]
        %v326 = vld [vmem:[#allocation5 + $0x8] sm:$0xff]
        %v327 = vld [vmem:[#allocation5 + $0x10] sm:$0xff]
        %v328 = vld [vmem:[#allocation5 + $0x18] sm:$0xff]
        %v329 = vld [vmem:[%s2] sm:$0x1]
        %v331 = vlaneseq
        %v332 = vshrl.u32 %v331, 7
        %v333 = vsub.s32 0, %v332
        %v334 = vrot.slane %v329, %v333
        %vm336 = vcmask 261120
        %v338 = vsel %vm336, %v317, 0
        %v341 = vsel %vm336, %v318, 0
        %v344 = vsel %vm336, %v319, 0
        %v347 = vsel %vm336, %v320, 0
        %v350 = vsel %vm336, %v321, 0
        %v353 = vsel %vm336, %v322, 0
        %v356 = vsel %vm336, %v323, 0
        %v359 = vsel %vm336, %v324, 0
        %361 = vmatprep.subr.mxu0 0.0
        %362 = vmatpush1.msra.mxu0 0.0
        %363 = vmatprep.subr.mxu0 0.0
        %364 = vmatpush1.msra.mxu0 0.0
        %365 = vmatprep.subr.mxu0 0.0
        %366 = vmatpush1.msra.mxu0 0.0
        %367 = vmatprep.subr.mxu0 0.0
        %368 = vmatpush1.msra.mxu0 0.0
        %369 = vmatprep.subr.mxu0 0.0
        %370 = vmatpush1.msra.mxu0 0.0
        %371 = vmatprep.subr.mxu0 0.0
        %372 = vmatpush1.msra.mxu0 0.0
        %373 = vmatprep.subr.mxu0 0.0
        %374 = vmatpush1.msra.mxu0 0.0
        %375 = vmatprep.subr.mxu0 0.0
        %376 = vmatpush1.msra.mxu0 0.0
        %377 = vmatprep.subr.mxu0 0.0
        %378 = vmatpush1.msra.mxu0 0.0
        %379 = vmatprep.subr.mxu0 0.0
        %380 = vmatpush1.msra.mxu0 0.0
        %381 = vmatprep.subr.mxu0 0.0
        %382 = vmatpush1.msra.mxu0 0.0
        %383 = vmatprep.subr.mxu0 0.0
        %384 = vmatpush1.msra.mxu0 0.0
        %385 = vmatprep.subr.mxu0 0.0
        %386 = vmatpush1.msra.mxu0 %v328
        %387 = vmatprep.subr.mxu0 0.0
        %388 = vmatpush1.msra.mxu0 %v327
        %389 = vmatprep.subr.mxu0 0.0
        %390 = vmatpush1.msra.mxu0 %v326
        %391 = vmatprep.subr.mxu0 0.0
        %392 = vmatpush1.msra.mxu0 %v325
        %393 = vmatprep.subr.mxu0 0.0
        %394 = vmatpush2.msra.mxu0 0.0
        %395 = vmatprep.subr.mxu0 0.0
        %396 = vmatpush2.msra.mxu0 0.0
        %397 = vmatprep.subr.mxu0 0.0
        %398 = vmatpush2.msra.mxu0 0.0
        %399 = vmatprep.subr.mxu0 0.0
        %400 = vmatpush2.msra.mxu0 0.0
        %401 = vmatprep.subr.mxu0 0.0
        %402 = vmatpush2.msra.mxu0 0.0
        %403 = vmatprep.subr.mxu0 0.0
        %404 = vmatpush2.msra.mxu0 0.0
        %405 = vmatprep.subr.mxu0 0.0
        %406 = vmatpush2.msra.mxu0 0.0
        %407 = vmatprep.subr.mxu0 0.0
        %408 = vmatpush2.msra.mxu0 0.0
        %409 = vmatprep.subr.mxu0 0.0
        %410 = vmatpush2.msra.mxu0 0.0
        %411 = vmatprep.subr.mxu0 0.0
        %412 = vmatpush2.msra.mxu0 0.0
        %413 = vmatprep.subr.mxu0 0.0
        %414 = vmatpush2.msra.mxu0 0.0
        %415 = vmatprep.subr.mxu0 0.0
        %416 = vmatpush2.msra.mxu0 0.0
        %417 = vmatprep.subr.mxu0 0.0
        %418 = vmatpush2.msra.mxu0 0.0
        %419 = vmatprep.subr.mxu0 0.0
        %420 = vmatpush2.msra.mxu0 0.0
        %421 = vmatprep.subr.mxu0 0.0
        %422 = vmatpush2.msra.mxu0 0.0
        %423 = vmatprep.subr.mxu0 0.0
        %424 = vmatpush2.msra.mxu0 0.0
        %425 = vmatprep.mubr.f32.mxu0 0.0
        %426 = vmatmul.mubr.f32.gmra.mxu0 %v338
        %v427 = vpop.f32.mrf.mxu0
        %v428 = vadd.f32 %v334, %v427
        %v429 = vpop.f32.mrf.mxu0
        %430 = vmatprep.mubr.f32.mxu0 0.0
        %431 = vmatmul.mubr.f32.gmra.mxu0 %v341
        %v432 = vpop.f32.mrf.mxu0
        %v433 = vadd.f32 %v334, %v432
        %v434 = vpop.f32.mrf.mxu0
        %435 = vmatprep.mubr.f32.mxu0 0.0
        %436 = vmatmul.mubr.f32.gmra.mxu0 %v344
        %v437 = vpop.f32.mrf.mxu0
        %v438 = vadd.f32 %v334, %v437
        %v439 = vpop.f32.mrf.mxu0
        %440 = vmatprep.mubr.f32.mxu0 0.0
        %441 = vmatmul.mubr.f32.gmra.mxu0 %v347
        %v442 = vpop.f32.mrf.mxu0
        %v443 = vadd.f32 %v334, %v442
        %v444 = vpop.f32.mrf.mxu0
        %445 = vmatprep.mubr.f32.mxu0 0.0
        %446 = vmatmul.mubr.f32.gmra.mxu0 %v350
        %v447 = vpop.f32.mrf.mxu0
        %v448 = vadd.f32 %v334, %v447
        %v449 = vpop.f32.mrf.mxu0
        %450 = vmatprep.mubr.f32.mxu0 0.0
        %451 = vmatmul.mubr.f32.gmra.mxu0 %v353
        %v452 = vpop.f32.mrf.mxu0
        %v453 = vadd.f32 %v334, %v452
        %v454 = vpop.f32.mrf.mxu0
        %455 = vmatprep.mubr.f32.mxu0 0.0
        %456 = vmatmul.mubr.f32.gmra.mxu0 %v356
        %v457 = vpop.f32.mrf.mxu0
        %v458 = vadd.f32 %v334, %v457
        %v459 = vpop.f32.mrf.mxu0
        %460 = vmatprep.mubr.f32.mxu0 0.0
        %461 = vmatmul.mubr.f32.gmra.mxu0 %v359
        %v462 = vpop.f32.mrf.mxu0
        %v463 = vadd.f32 %v334, %v462
        %v464 = vpop.f32.mrf.mxu0
        %465 = vdwg.mxu0
        %v466 = vld [vmem:[#allocation8] sm:$0xff]
        %v467 = vld [vmem:[#allocation8 + $0x8] sm:$0xff]
        %v468 = vld [vmem:[#allocation8 + $0x10] sm:$0xff]
        %v469 = vld [vmem:[#allocation8 + $0x18] sm:$0xff]
        %v470 = vld [vmem:[#allocation8 + $0x20] sm:$0xff]
        %v471 = vld [vmem:[#allocation8 + $0x28] sm:$0xff]
        %v472 = vld [vmem:[#allocation8 + $0x30] sm:$0xff]
        %v473 = vld [vmem:[#allocation8 + $0x38] sm:$0xff]
        %476 = vrot.lane.b32.xlu0 %v428, 96
        %v477 = vpop.permute.xlu0 %476
        %478 = vrot.lane.b32.xlu0 %v433, 96
        %v479 = vpop.permute.xlu0 %478
        %vm480 = vcmask 64512
        %v481 = vsel %vm480, %v428, 0
        %v483 = vsel %vm480, %v433, 0
        %v485 = vsel %vm480, %v477, 0
        %v487 = vsel %vm480, %v479, 0
        %489 = vmatprep.subr.mxu0 0.0
        %490 = vmatpush1.xpose.msra.mxu0 0.0
        %491 = vmatprep.subr.mxu0 0.0
        %492 = vmatpush1.xpose.msra.mxu0 0.0
        %493 = vmatprep.subr.mxu0 0.0
        %494 = vmatpush1.xpose.msra.mxu0 0.0
        %495 = vmatprep.subr.mxu0 0.0
        %496 = vmatpush1.xpose.msra.mxu0 0.0
        %497 = vmatprep.subr.mxu0 0.0
        %498 = vmatpush1.xpose.msra.mxu0 0.0
        %499 = vmatprep.subr.mxu0 0.0
        %500 = vmatpush1.xpose.msra.mxu0 0.0
        %501 = vmatprep.subr.mxu0 0.0
        %502 = vmatpush1.xpose.msra.mxu0 0.0
        %503 = vmatprep.subr.mxu0 0.0
        %504 = vmatpush1.xpose.msra.mxu0 0.0
        %505 = vmatprep.subr.mxu0 0.0
        %506 = vmatpush1.xpose.msra.mxu0 0.0
        %507 = vmatprep.subr.mxu0 0.0
        %508 = vmatpush1.xpose.msra.mxu0 0.0
        %509 = vmatprep.subr.mxu0 0.0
        %510 = vmatpush1.xpose.msra.mxu0 0.0
        %511 = vmatprep.subr.mxu0 0.0
        %512 = vmatpush1.xpose.msra.mxu0 0.0
        %513 = vmatprep.subr.mxu0 0.0
        %514 = vmatpush1.xpose.msra.mxu0 0.0
        %515 = vmatprep.subr.mxu0 0.0
        %516 = vmatpush1.xpose.msra.mxu0 0.0
        %517 = vmatprep.subr.mxu0 0.0
        %518 = vmatpush1.xpose.msra.mxu0 %v487
        %519 = vmatprep.subr.mxu0 0.0
        %520 = vmatpush1.xpose.msra.mxu0 %v485
        %521 = vmatprep.subr.mxu0 0.0
        %522 = vmatpush2.xpose.msra.mxu0 0.0
        %523 = vmatprep.subr.mxu0 0.0
        %524 = vmatpush2.xpose.msra.mxu0 0.0
        %525 = vmatprep.subr.mxu0 0.0
        %526 = vmatpush2.xpose.msra.mxu0 0.0
        %527 = vmatprep.subr.mxu0 0.0
        %528 = vmatpush2.xpose.msra.mxu0 0.0
        %529 = vmatprep.subr.mxu0 0.0
        %530 = vmatpush2.xpose.msra.mxu0 0.0
        %531 = vmatprep.subr.mxu0 0.0
        %532 = vmatpush2.xpose.msra.mxu0 0.0
        %533 = vmatprep.subr.mxu0 0.0
        %534 = vmatpush2.xpose.msra.mxu0 0.0
        %535 = vmatprep.subr.mxu0 0.0
        %536 = vmatpush2.xpose.msra.mxu0 0.0
        %537 = vmatprep.subr.mxu0 0.0
        %538 = vmatpush2.xpose.msra.mxu0 0.0
        %539 = vmatprep.subr.mxu0 0.0
        %540 = vmatpush2.xpose.msra.mxu0 0.0
        %541 = vmatprep.subr.mxu0 0.0
        %542 = vmatpush2.xpose.msra.mxu0 0.0
        %543 = vmatprep.subr.mxu0 0.0
        %544 = vmatpush2.xpose.msra.mxu0 0.0
        %545 = vmatprep.subr.mxu0 0.0
        %546 = vmatpush2.xpose.msra.mxu0 0.0
        %547 = vmatprep.subr.mxu0 0.0
        %548 = vmatpush2.xpose.msra.mxu0 0.0
        %549 = vmatprep.subr.mxu0 0.0
        %550 = vmatpush2.xpose.msra.mxu0 0.0
        %551 = vmatprep.subr.mxu0 0.0
        %552 = vmatpush2.xpose.msra.mxu0 0.0
        %553 = vmatprep.mubr.f32.mxu0 0.0
        %554 = vmatmul.mubr.f32.gmra.mxu0 %v481
        %v555 = vpop.f32.mrf.mxu0
        %v556 = vadd.f32 %v466, %v555
        %v557 = vpop.f32.mrf.mxu0
        %558 = vmatprep.mubr.f32.mxu0 0.0
        %559 = vmatmul.mubr.f32.gmra.mxu0 %v483
        %v560 = vpop.f32.mrf.mxu0
        %v561 = vadd.f32 %v467, %v560
        %v562 = vpop.f32.mrf.mxu0
        %563 = vdwg.mxu0
        %566 = vrot.lane.b32.xlu0 %v438, 96
        %v567 = vpop.permute.xlu0 %566
        %568 = vrot.lane.b32.xlu0 %v443, 96
        %v569 = vpop.permute.xlu0 %568
        %v570 = vsel %vm480, %v438, 0
        %v572 = vsel %vm480, %v443, 0
        %v574 = vsel %vm480, %v567, 0
        %v576 = vsel %vm480, %v569, 0
        %578 = vmatprep.subr.mxu0 0.0
        %579 = vmatpush1.xpose.msra.mxu0 0.0
        %580 = vmatprep.subr.mxu0 0.0
        %581 = vmatpush1.xpose.msra.mxu0 0.0
        %582 = vmatprep.subr.mxu0 0.0
        %583 = vmatpush1.xpose.msra.mxu0 0.0
        %584 = vmatprep.subr.mxu0 0.0
        %585 = vmatpush1.xpose.msra.mxu0 0.0
        %586 = vmatprep.subr.mxu0 0.0
        %587 = vmatpush1.xpose.msra.mxu0 0.0
        %588 = vmatprep.subr.mxu0 0.0
        %589 = vmatpush1.xpose.msra.mxu0 0.0
        %590 = vmatprep.subr.mxu0 0.0
        %591 = vmatpush1.xpose.msra.mxu0 0.0
        %592 = vmatprep.subr.mxu0 0.0
        %593 = vmatpush1.xpose.msra.mxu0 0.0
        %594 = vmatprep.subr.mxu0 0.0
        %595 = vmatpush1.xpose.msra.mxu0 0.0
        %596 = vmatprep.subr.mxu0 0.0
        %597 = vmatpush1.xpose.msra.mxu0 0.0
        %598 = vmatprep.subr.mxu0 0.0
        %599 = vmatpush1.xpose.msra.mxu0 0.0
        %600 = vmatprep.subr.mxu0 0.0
        %601 = vmatpush1.xpose.msra.mxu0 0.0
        %602 = vmatprep.subr.mxu0 0.0
        %603 = vmatpush1.xpose.msra.mxu0 0.0
        %604 = vmatprep.subr.mxu0 0.0
        %605 = vmatpush1.xpose.msra.mxu0 0.0
        %606 = vmatprep.subr.mxu0 0.0
        %607 = vmatpush1.xpose.msra.mxu0 %v576
        %608 = vmatprep.subr.mxu0 0.0
        %609 = vmatpush1.xpose.msra.mxu0 %v574
        %610 = vmatprep.subr.mxu0 0.0
        %611 = vmatpush2.xpose.msra.mxu0 0.0
        %612 = vmatprep.subr.mxu0 0.0
        %613 = vmatpush2.xpose.msra.mxu0 0.0
        %614 = vmatprep.subr.mxu0 0.0
        %615 = vmatpush2.xpose.msra.mxu0 0.0
        %616 = vmatprep.subr.mxu0 0.0
        %617 = vmatpush2.xpose.msra.mxu0 0.0
        %618 = vmatprep.subr.mxu0 0.0
        %619 = vmatpush2.xpose.msra.mxu0 0.0
        %620 = vmatprep.subr.mxu0 0.0
        %621 = vmatpush2.xpose.msra.mxu0 0.0
        %622 = vmatprep.subr.mxu0 0.0
        %623 = vmatpush2.xpose.msra.mxu0 0.0
        %624 = vmatprep.subr.mxu0 0.0
        %625 = vmatpush2.xpose.msra.mxu0 0.0
        %626 = vmatprep.subr.mxu0 0.0
        %627 = vmatpush2.xpose.msra.mxu0 0.0
        %628 = vmatprep.subr.mxu0 0.0
        %629 = vmatpush2.xpose.msra.mxu0 0.0
        %630 = vmatprep.subr.mxu0 0.0
        %631 = vmatpush2.xpose.msra.mxu0 0.0
        %632 = vmatprep.subr.mxu0 0.0
        %633 = vmatpush2.xpose.msra.mxu0 0.0
        %634 = vmatprep.subr.mxu0 0.0
        %635 = vmatpush2.xpose.msra.mxu0 0.0
        %636 = vmatprep.subr.mxu0 0.0
        %637 = vmatpush2.xpose.msra.mxu0 0.0
        %638 = vmatprep.subr.mxu0 0.0
        %639 = vmatpush2.xpose.msra.mxu0 0.0
        %640 = vmatprep.subr.mxu0 0.0
        %641 = vmatpush2.xpose.msra.mxu0 0.0
        %642 = vmatprep.mubr.f32.mxu0 0.0
        %643 = vmatmul.mubr.f32.gmra.mxu0 %v570
        %v644 = vpop.f32.mrf.mxu0
        %v645 = vadd.f32 %v468, %v644
        %v646 = vpop.f32.mrf.mxu0
        %647 = vmatprep.mubr.f32.mxu0 0.0
        %648 = vmatmul.mubr.f32.gmra.mxu0 %v572
        %v649 = vpop.f32.mrf.mxu0
        %v650 = vadd.f32 %v469, %v649
        %v651 = vpop.f32.mrf.mxu0
        %652 = vdwg.mxu0
        %655 = vrot.lane.b32.xlu0 %v448, 96
        %v656 = vpop.permute.xlu0 %655
        %657 = vrot.lane.b32.xlu0 %v453, 96
        %v658 = vpop.permute.xlu0 %657
        %v659 = vsel %vm480, %v448, 0
        %v661 = vsel %vm480, %v453, 0
        %v663 = vsel %vm480, %v656, 0
        %v665 = vsel %vm480, %v658, 0
        %667 = vmatprep.subr.mxu0 0.0
        %668 = vmatpush1.xpose.msra.mxu0 0.0
        %669 = vmatprep.subr.mxu0 0.0
        %670 = vmatpush1.xpose.msra.mxu0 0.0
        %671 = vmatprep.subr.mxu0 0.0
        %672 = vmatpush1.xpose.msra.mxu0 0.0
        %673 = vmatprep.subr.mxu0 0.0
        %674 = vmatpush1.xpose.msra.mxu0 0.0
        %675 = vmatprep.subr.mxu0 0.0
        %676 = vmatpush1.xpose.msra.mxu0 0.0
        %677 = vmatprep.subr.mxu0 0.0
        %678 = vmatpush1.xpose.msra.mxu0 0.0
        %679 = vmatprep.subr.mxu0 0.0
        %680 = vmatpush1.xpose.msra.mxu0 0.0
        %681 = vmatprep.subr.mxu0 0.0
        %682 = vmatpush1.xpose.msra.mxu0 0.0
        %683 = vmatprep.subr.mxu0 0.0
        %684 = vmatpush1.xpose.msra.mxu0 0.0
        %685 = vmatprep.subr.mxu0 0.0
        %686 = vmatpush1.xpose.msra.mxu0 0.0
        %687 = vmatprep.subr.mxu0 0.0
        %688 = vmatpush1.xpose.msra.mxu0 0.0
        %689 = vmatprep.subr.mxu0 0.0
        %690 = vmatpush1.xpose.msra.mxu0 0.0
        %691 = vmatprep.subr.mxu0 0.0
        %692 = vmatpush1.xpose.msra.mxu0 0.0
        %693 = vmatprep.subr.mxu0 0.0
        %694 = vmatpush1.xpose.msra.mxu0 0.0
        %695 = vmatprep.subr.mxu0 0.0
        %696 = vmatpush1.xpose.msra.mxu0 %v665
        %697 = vmatprep.subr.mxu0 0.0
        %698 = vmatpush1.xpose.msra.mxu0 %v663
        %699 = vmatprep.subr.mxu0 0.0
        %700 = vmatpush2.xpose.msra.mxu0 0.0
        %701 = vmatprep.subr.mxu0 0.0
        %702 = vmatpush2.xpose.msra.mxu0 0.0
        %703 = vmatprep.subr.mxu0 0.0
        %704 = vmatpush2.xpose.msra.mxu0 0.0
        %705 = vmatprep.subr.mxu0 0.0
        %706 = vmatpush2.xpose.msra.mxu0 0.0
        %707 = vmatprep.subr.mxu0 0.0
        %708 = vmatpush2.xpose.msra.mxu0 0.0
        %709 = vmatprep.subr.mxu0 0.0
        %710 = vmatpush2.xpose.msra.mxu0 0.0
        %711 = vmatprep.subr.mxu0 0.0
        %712 = vmatpush2.xpose.msra.mxu0 0.0
        %713 = vmatprep.subr.mxu0 0.0
        %714 = vmatpush2.xpose.msra.mxu0 0.0
        %715 = vmatprep.subr.mxu0 0.0
        %716 = vmatpush2.xpose.msra.mxu0 0.0
        %717 = vmatprep.subr.mxu0 0.0
        %718 = vmatpush2.xpose.msra.mxu0 0.0
        %719 = vmatprep.subr.mxu0 0.0
        %720 = vmatpush2.xpose.msra.mxu0 0.0
        %721 = vmatprep.subr.mxu0 0.0
        %722 = vmatpush2.xpose.msra.mxu0 0.0
        %723 = vmatprep.subr.mxu0 0.0
        %724 = vmatpush2.xpose.msra.mxu0 0.0
        %725 = vmatprep.subr.mxu0 0.0
        %726 = vmatpush2.xpose.msra.mxu0 0.0
        %727 = vmatprep.subr.mxu0 0.0
        %728 = vmatpush2.xpose.msra.mxu0 0.0
        %729 = vmatprep.subr.mxu0 0.0
        %730 = vmatpush2.xpose.msra.mxu0 0.0
        %731 = vmatprep.mubr.f32.mxu0 0.0
        %732 = vmatmul.mubr.f32.gmra.mxu0 %v659
        %v733 = vpop.f32.mrf.mxu0
        %v734 = vadd.f32 %v470, %v733
        %v735 = vpop.f32.mrf.mxu0
        %736 = vmatprep.mubr.f32.mxu0 0.0
        %737 = vmatmul.mubr.f32.gmra.mxu0 %v661
        %v738 = vpop.f32.mrf.mxu0
        %v739 = vadd.f32 %v471, %v738
        %v740 = vpop.f32.mrf.mxu0
        %741 = vdwg.mxu0
        %744 = vrot.lane.b32.xlu0 %v458, 96
        %v745 = vpop.permute.xlu0 %744
        %746 = vrot.lane.b32.xlu0 %v463, 96
        %v747 = vpop.permute.xlu0 %746
        %v748 = vsel %vm480, %v458, 0
        %v750 = vsel %vm480, %v463, 0
        %v752 = vsel %vm480, %v745, 0
        %v754 = vsel %vm480, %v747, 0
        %756 = vmatprep.subr.mxu0 0.0
        %757 = vmatpush1.xpose.msra.mxu0 0.0
        %758 = vmatprep.subr.mxu0 0.0
        %759 = vmatpush1.xpose.msra.mxu0 0.0
        %760 = vmatprep.subr.mxu0 0.0
        %761 = vmatpush1.xpose.msra.mxu0 0.0
        %762 = vmatprep.subr.mxu0 0.0
        %763 = vmatpush1.xpose.msra.mxu0 0.0
        %764 = vmatprep.subr.mxu0 0.0
        %765 = vmatpush1.xpose.msra.mxu0 0.0
        %766 = vmatprep.subr.mxu0 0.0
        %767 = vmatpush1.xpose.msra.mxu0 0.0
        %768 = vmatprep.subr.mxu0 0.0
        %769 = vmatpush1.xpose.msra.mxu0 0.0
        %770 = vmatprep.subr.mxu0 0.0
        %771 = vmatpush1.xpose.msra.mxu0 0.0
        %772 = vmatprep.subr.mxu0 0.0
        %773 = vmatpush1.xpose.msra.mxu0 0.0
        %774 = vmatprep.subr.mxu0 0.0
        %775 = vmatpush1.xpose.msra.mxu0 0.0
        %776 = vmatprep.subr.mxu0 0.0
        %777 = vmatpush1.xpose.msra.mxu0 0.0
        %778 = vmatprep.subr.mxu0 0.0
        %779 = vmatpush1.xpose.msra.mxu0 0.0
        %780 = vmatprep.subr.mxu0 0.0
        %781 = vmatpush1.xpose.msra.mxu0 0.0
        %782 = vmatprep.subr.mxu0 0.0
        %783 = vmatpush1.xpose.msra.mxu0 0.0
        %784 = vmatprep.subr.mxu0 0.0
        %785 = vmatpush1.xpose.msra.mxu0 %v754
        %786 = vmatprep.subr.mxu0 0.0
        %787 = vmatpush1.xpose.msra.mxu0 %v752
        %788 = vmatprep.subr.mxu0 0.0
        %789 = vmatpush2.xpose.msra.mxu0 0.0
        %790 = vmatprep.subr.mxu0 0.0
        %791 = vmatpush2.xpose.msra.mxu0 0.0
        %792 = vmatprep.subr.mxu0 0.0
        %793 = vmatpush2.xpose.msra.mxu0 0.0
        %794 = vmatprep.subr.mxu0 0.0
        %795 = vmatpush2.xpose.msra.mxu0 0.0
        %796 = vmatprep.subr.mxu0 0.0
        %797 = vmatpush2.xpose.msra.mxu0 0.0
        %798 = vmatprep.subr.mxu0 0.0
        %799 = vmatpush2.xpose.msra.mxu0 0.0
        %800 = vmatprep.subr.mxu0 0.0
        %801 = vmatpush2.xpose.msra.mxu0 0.0
        %802 = vmatprep.subr.mxu0 0.0
        %803 = vmatpush2.xpose.msra.mxu0 0.0
        %804 = vmatprep.subr.mxu0 0.0
        %805 = vmatpush2.xpose.msra.mxu0 0.0
        %806 = vmatprep.subr.mxu0 0.0
        %807 = vmatpush2.xpose.msra.mxu0 0.0
        %808 = vmatprep.subr.mxu0 0.0
        %809 = vmatpush2.xpose.msra.mxu0 0.0
        %810 = vmatprep.subr.mxu0 0.0
        %811 = vmatpush2.xpose.msra.mxu0 0.0
        %812 = vmatprep.subr.mxu0 0.0
        %813 = vmatpush2.xpose.msra.mxu0 0.0
        %814 = vmatprep.subr.mxu0 0.0
        %815 = vmatpush2.xpose.msra.mxu0 0.0
        %816 = vmatprep.subr.mxu0 0.0
        %817 = vmatpush2.xpose.msra.mxu0 0.0
        %818 = vmatprep.subr.mxu0 0.0
        %819 = vmatpush2.xpose.msra.mxu0 0.0
        %820 = vmatprep.mubr.f32.mxu0 0.0
        %821 = vmatmul.mubr.f32.gmra.mxu0 %v748
        %v822 = vpop.f32.mrf.mxu0
        %v823 = vadd.f32 %v472, %v822
        %v824 = vpop.f32.mrf.mxu0
        %825 = vmatprep.mubr.f32.mxu0 0.0
        %826 = vmatmul.mubr.f32.gmra.mxu0 %v750
        %v827 = vpop.f32.mrf.mxu0
        %v828 = vadd.f32 %v473, %v827
        %v829 = vpop.f32.mrf.mxu0
        %830 = vdwg.mxu0
        %vm831 = vcmask 130048
        %v832 = vsel %vm831, %v556, -inf
        %833 = vmax.xlane.f32.xlu0 %v832
        %v834 = vpop.xlane.xlu0 %833
        %v835 = vsel %vm831, %v561, -inf
        %836 = vmax.xlane.f32.xlu0 %v835
        %v837 = vpop.xlane.xlu0 %836
        %v838 = vsel %vm831, %v645, -inf
        %839 = vmax.xlane.f32.xlu0 %v838
        %v840 = vpop.xlane.xlu0 %839
        %v841 = vsel %vm831, %v650, -inf
        %842 = vmax.xlane.f32.xlu0 %v841
        %v843 = vpop.xlane.xlu0 %842
        %v844 = vsel %vm831, %v734, -inf
        %845 = vmax.xlane.f32.xlu0 %v844
        %v846 = vpop.xlane.xlu0 %845
        %v847 = vsel %vm831, %v739, -inf
        %848 = vmax.xlane.f32.xlu0 %v847
        %v849 = vpop.xlane.xlu0 %848
        %v850 = vsel %vm831, %v823, -inf
        %851 = vmax.xlane.f32.xlu0 %v850
        %v852 = vpop.xlane.xlu0 %851
        %v853 = vsel %vm831, %v828, -inf
        %854 = vmax.xlane.f32.xlu0 %v853
        %v855 = vpop.xlane.xlu0 %854
        %v856 = vsub.f32 %v556, %v834
        %v857 = vsub.f32 %v561, %v837
        %v858 = vsub.f32 %v645, %v840
        %v859 = vsub.f32 %v650, %v843
        %v860 = vsub.f32 %v734, %v846
        %v861 = vsub.f32 %v739, %v849
        %v862 = vsub.f32 %v823, %v852
        %v863 = vsub.f32 %v828, %v855
        %v864 = vmul.f32 %v856, 1.442695
        %v865 = vpow.pop %v864
        %v866 = vmul.f32 %v857, 1.442695
        %v867 = vpow.pop %v866
        %v868 = vmul.f32 %v858, 1.442695
        %v869 = vpow.pop %v868
        %v870 = vmul.f32 %v859, 1.442695
        %v871 = vpow.pop %v870
        %v872 = vmul.f32 %v860, 1.442695
        %v873 = vpow.pop %v872
        %v874 = vmul.f32 %v861, 1.442695
        %v875 = vpow.pop %v874
        %v876 = vmul.f32 %v862, 1.442695
        %v877 = vpow.pop %v876
        %v878 = vmul.f32 %v863, 1.442695
        %v879 = vpow.pop %v878
        %v880 = vsel %vm831, %v865, 0.0
        %881 = vadd.xlane.f32.xlu0 %v880
        %v882 = vpop.xlane.xlu0 %881
        %v883 = vsel %vm831, %v867, 0.0
        %884 = vadd.xlane.f32.xlu0 %v883
        %v885 = vpop.xlane.xlu0 %884
        %v886 = vsel %vm831, %v869, 0.0
        %887 = vadd.xlane.f32.xlu0 %v886
        %v888 = vpop.xlane.xlu0 %887
        %v889 = vsel %vm831, %v871, 0.0
        %890 = vadd.xlane.f32.xlu0 %v889
        %v891 = vpop.xlane.xlu0 %890
        %v892 = vsel %vm831, %v873, 0.0
        %893 = vadd.xlane.f32.xlu0 %v892
        %v894 = vpop.xlane.xlu0 %893
        %v895 = vsel %vm831, %v875, 0.0
        %896 = vadd.xlane.f32.xlu0 %v895
        %v897 = vpop.xlane.xlu0 %896
        %v898 = vsel %vm831, %v877, 0.0
        %899 = vadd.xlane.f32.xlu0 %v898
        %v900 = vpop.xlane.xlu0 %899
        %v901 = vsel %vm831, %v879, 0.0
        %902 = vadd.xlane.f32.xlu0 %v901
        %v903 = vpop.xlane.xlu0 %902
        %v904 = vrcp.pop %v882
        %v905 = vrcp.pop %v885
        %v906 = vrcp.pop %v888
        %v907 = vrcp.pop %v891
        %v908 = vrcp.pop %v894
        %v909 = vrcp.pop %v897
        %v910 = vrcp.pop %v900
        %v911 = vrcp.pop %v903
        %v912 = vmul.f32 %v865, %v904
        %v913 = vmul.f32 %v867, %v905
        %v914 = vmul.f32 %v869, %v906
        %v915 = vmul.f32 %v871, %v907
        %v916 = vmul.f32 %v873, %v908
        %v917 = vmul.f32 %v875, %v909
        %v918 = vmul.f32 %v877, %v910
        %v919 = vmul.f32 %v879, %v911
        %920 = vrot.lane.b32.xlu0 %v428, 64
        %v921 = vpop.permute.xlu0 %920
        %922 = vrot.lane.b32.xlu0 %v433, 64
        %v923 = vpop.permute.xlu0 %922
        %v927 = vsel %vm831, %v912, 0
        %v930 = vsel %vm831, %v913, 0
        %932 = vmatprep.subr.mxu0 0.0
        %933 = vmatpush1.msra.mxu0 0.0
        %934 = vmatprep.subr.mxu0 0.0
        %935 = vmatpush1.msra.mxu0 0.0
        %936 = vmatprep.subr.mxu0 0.0
        %937 = vmatpush1.msra.mxu0 0.0
        %938 = vmatprep.subr.mxu0 0.0
        %939 = vmatpush1.msra.mxu0 0.0
        %940 = vmatprep.subr.mxu0 0.0
        %941 = vmatpush1.msra.mxu0 0.0
        %942 = vmatprep.subr.mxu0 0.0
        %943 = vmatpush1.msra.mxu0 0.0
        %944 = vmatprep.subr.mxu0 0.0
        %945 = vmatpush1.msra.mxu0 0.0
        %946 = vmatprep.subr.mxu0 0.0
        %947 = vmatpush1.msra.mxu0 0.0
        %948 = vmatprep.subr.mxu0 0.0
        %949 = vmatpush1.msra.mxu0 0.0
        %950 = vmatprep.subr.mxu0 0.0
        %951 = vmatpush1.msra.mxu0 0.0
        %952 = vmatprep.subr.mxu0 0.0
        %953 = vmatpush1.msra.mxu0 0.0
        %954 = vmatprep.subr.mxu0 0.0
        %955 = vmatpush1.msra.mxu0 0.0
        %956 = vmatprep.subr.mxu0 0.0
        %957 = vmatpush1.msra.mxu0 0.0
        %958 = vmatprep.subr.mxu0 0.0
        %959 = vmatpush1.msra.mxu0 0.0
        %960 = vmatprep.subr.mxu0 0.0
        %961 = vmatpush1.msra.mxu0 %v923
        %962 = vmatprep.subr.mxu0 0.0
        %963 = vmatpush1.msra.mxu0 %v921
        %964 = vmatprep.subr.mxu0 0.0
        %965 = vmatpush2.msra.mxu0 0.0
        %966 = vmatprep.subr.mxu0 0.0
        %967 = vmatpush2.msra.mxu0 0.0
        %968 = vmatprep.subr.mxu0 0.0
        %969 = vmatpush2.msra.mxu0 0.0
        %970 = vmatprep.subr.mxu0 0.0
        %971 = vmatpush2.msra.mxu0 0.0
        %972 = vmatprep.subr.mxu0 0.0
        %973 = vmatpush2.msra.mxu0 0.0
        %974 = vmatprep.subr.mxu0 0.0
        %975 = vmatpush2.msra.mxu0 0.0
        %976 = vmatprep.subr.mxu0 0.0
        %977 = vmatpush2.msra.mxu0 0.0
        %978 = vmatprep.subr.mxu0 0.0
        %979 = vmatpush2.msra.mxu0 0.0
        %980 = vmatprep.subr.mxu0 0.0
        %981 = vmatpush2.msra.mxu0 0.0
        %982 = vmatprep.subr.mxu0 0.0
        %983 = vmatpush2.msra.mxu0 0.0
        %984 = vmatprep.subr.mxu0 0.0
        %985 = vmatpush2.msra.mxu0 0.0
        %986 = vmatprep.subr.mxu0 0.0
        %987 = vmatpush2.msra.mxu0 0.0
        %988 = vmatprep.subr.mxu0 0.0
        %989 = vmatpush2.msra.mxu0 0.0
        %990 = vmatprep.subr.mxu0 0.0
        %991 = vmatpush2.msra.mxu0 0.0
        %992 = vmatprep.subr.mxu0 0.0
        %993 = vmatpush2.msra.mxu0 0.0
        %994 = vmatprep.subr.mxu0 0.0
        %995 = vmatpush2.msra.mxu0 0.0
        %996 = vmatprep.mubr.f32.mxu0 0.0
        %997 = vmatmul.mubr.f32.gmra.mxu0 %v927
        %v998 = vpop.f32.mrf.mxu0
        %v999 = vadd.f32 0.0, %v998
        %v1000 = vpop.f32.mrf.mxu0
        %1001 = vmatprep.mubr.f32.mxu0 0.0
        %1002 = vmatmul.mubr.f32.gmra.mxu0 %v930
        %v1003 = vpop.f32.mrf.mxu0
        %v1004 = vadd.f32 0.0, %v1003
        %v1005 = vpop.f32.mrf.mxu0
        %1006 = vdwg.mxu0
        %1007 = vrot.lane.b32.xlu0 %v438, 64
        %v1008 = vpop.permute.xlu0 %1007
        %1009 = vrot.lane.b32.xlu0 %v443, 64
        %v1010 = vpop.permute.xlu0 %1009
        %v1014 = vsel %vm831, %v914, 0
        %v1017 = vsel %vm831, %v915, 0
        %1019 = vmatprep.subr.mxu0 0.0
        %1020 = vmatpush1.msra.mxu0 0.0
        %1021 = vmatprep.subr.mxu0 0.0
        %1022 = vmatpush1.msra.mxu0 0.0
        %1023 = vmatprep.subr.mxu0 0.0
        %1024 = vmatpush1.msra.mxu0 0.0
        %1025 = vmatprep.subr.mxu0 0.0
        %1026 = vmatpush1.msra.mxu0 0.0
        %1027 = vmatprep.subr.mxu0 0.0
        %1028 = vmatpush1.msra.mxu0 0.0
        %1029 = vmatprep.subr.mxu0 0.0
        %1030 = vmatpush1.msra.mxu0 0.0
        %1031 = vmatprep.subr.mxu0 0.0
        %1032 = vmatpush1.msra.mxu0 0.0
        %1033 = vmatprep.subr.mxu0 0.0
        %1034 = vmatpush1.msra.mxu0 0.0
        %1035 = vmatprep.subr.mxu0 0.0
        %1036 = vmatpush1.msra.mxu0 0.0
        %1037 = vmatprep.subr.mxu0 0.0
        %1038 = vmatpush1.msra.mxu0 0.0
        %1039 = vmatprep.subr.mxu0 0.0
        %1040 = vmatpush1.msra.mxu0 0.0
        %1041 = vmatprep.subr.mxu0 0.0
        %1042 = vmatpush1.msra.mxu0 0.0
        %1043 = vmatprep.subr.mxu0 0.0
        %1044 = vmatpush1.msra.mxu0 0.0
        %1045 = vmatprep.subr.mxu0 0.0
        %1046 = vmatpush1.msra.mxu0 0.0
        %1047 = vmatprep.subr.mxu0 0.0
        %1048 = vmatpush1.msra.mxu0 %v1010
        %1049 = vmatprep.subr.mxu0 0.0
        %1050 = vmatpush1.msra.mxu0 %v1008
        %1051 = vmatprep.subr.mxu0 0.0
        %1052 = vmatpush2.msra.mxu0 0.0
        %1053 = vmatprep.subr.mxu0 0.0
        %1054 = vmatpush2.msra.mxu0 0.0
        %1055 = vmatprep.subr.mxu0 0.0
        %1056 = vmatpush2.msra.mxu0 0.0
        %1057 = vmatprep.subr.mxu0 0.0
        %1058 = vmatpush2.msra.mxu0 0.0
        %1059 = vmatprep.subr.mxu0 0.0
        %1060 = vmatpush2.msra.mxu0 0.0
        %1061 = vmatprep.subr.mxu0 0.0
        %1062 = vmatpush2.msra.mxu0 0.0
        %1063 = vmatprep.subr.mxu0 0.0
        %1064 = vmatpush2.msra.mxu0 0.0
        %1065 = vmatprep.subr.mxu0 0.0
        %1066 = vmatpush2.msra.mxu0 0.0
        %1067 = vmatprep.subr.mxu0 0.0
        %1068 = vmatpush2.msra.mxu0 0.0
        %1069 = vmatprep.subr.mxu0 0.0
        %1070 = vmatpush2.msra.mxu0 0.0
        %1071 = vmatprep.subr.mxu0 0.0
        %1072 = vmatpush2.msra.mxu0 0.0
        %1073 = vmatprep.subr.mxu0 0.0
        %1074 = vmatpush2.msra.mxu0 0.0
        %1075 = vmatprep.subr.mxu0 0.0
        %1076 = vmatpush2.msra.mxu0 0.0
        %1077 = vmatprep.subr.mxu0 0.0
        %1078 = vmatpush2.msra.mxu0 0.0
        %1079 = vmatprep.subr.mxu0 0.0
        %1080 = vmatpush2.msra.mxu0 0.0
        %1081 = vmatprep.subr.mxu0 0.0
        %1082 = vmatpush2.msra.mxu0 0.0
        %1083 = vmatprep.mubr.f32.mxu0 0.0
        %1084 = vmatmul.mubr.f32.gmra.mxu0 %v1014
        %v1085 = vpop.f32.mrf.mxu0
        %v1086 = vadd.f32 0.0, %v1085
        %v1087 = vpop.f32.mrf.mxu0
        %1088 = vmatprep.mubr.f32.mxu0 0.0
        %1089 = vmatmul.mubr.f32.gmra.mxu0 %v1017
        %v1090 = vpop.f32.mrf.mxu0
        %v1091 = vadd.f32 0.0, %v1090
        %v1092 = vpop.f32.mrf.mxu0
        %1093 = vdwg.mxu0
        %1094 = vrot.lane.b32.xlu0 %v448, 64
        %v1095 = vpop.permute.xlu0 %1094
        %1096 = vrot.lane.b32.xlu0 %v453, 64
        %v1097 = vpop.permute.xlu0 %1096
        %v1101 = vsel %vm831, %v916, 0
        %v1104 = vsel %vm831, %v917, 0
        %1106 = vmatprep.subr.mxu0 0.0
        %1107 = vmatpush1.msra.mxu0 0.0
        %1108 = vmatprep.subr.mxu0 0.0
        %1109 = vmatpush1.msra.mxu0 0.0
        %1110 = vmatprep.subr.mxu0 0.0
        %1111 = vmatpush1.msra.mxu0 0.0
        %1112 = vmatprep.subr.mxu0 0.0
        %1113 = vmatpush1.msra.mxu0 0.0
        %1114 = vmatprep.subr.mxu0 0.0
        %1115 = vmatpush1.msra.mxu0 0.0
        %1116 = vmatprep.subr.mxu0 0.0
        %1117 = vmatpush1.msra.mxu0 0.0
        %1118 = vmatprep.subr.mxu0 0.0
        %1119 = vmatpush1.msra.mxu0 0.0
        %1120 = vmatprep.subr.mxu0 0.0
        %1121 = vmatpush1.msra.mxu0 0.0
        %1122 = vmatprep.subr.mxu0 0.0
        %1123 = vmatpush1.msra.mxu0 0.0
        %1124 = vmatprep.subr.mxu0 0.0
        %1125 = vmatpush1.msra.mxu0 0.0
        %1126 = vmatprep.subr.mxu0 0.0
        %1127 = vmatpush1.msra.mxu0 0.0
        %1128 = vmatprep.subr.mxu0 0.0
        %1129 = vmatpush1.msra.mxu0 0.0
        %1130 = vmatprep.subr.mxu0 0.0
        %1131 = vmatpush1.msra.mxu0 0.0
        %1132 = vmatprep.subr.mxu0 0.0
        %1133 = vmatpush1.msra.mxu0 0.0
        %1134 = vmatprep.subr.mxu0 0.0
        %1135 = vmatpush1.msra.mxu0 %v1097
        %1136 = vmatprep.subr.mxu0 0.0
        %1137 = vmatpush1.msra.mxu0 %v1095
        %1138 = vmatprep.subr.mxu0 0.0
        %1139 = vmatpush2.msra.mxu0 0.0
        %1140 = vmatprep.subr.mxu0 0.0
        %1141 = vmatpush2.msra.mxu0 0.0
        %1142 = vmatprep.subr.mxu0 0.0
        %1143 = vmatpush2.msra.mxu0 0.0
        %1144 = vmatprep.subr.mxu0 0.0
        %1145 = vmatpush2.msra.mxu0 0.0
        %1146 = vmatprep.subr.mxu0 0.0
        %1147 = vmatpush2.msra.mxu0 0.0
        %1148 = vmatprep.subr.mxu0 0.0
        %1149 = vmatpush2.msra.mxu0 0.0
        %1150 = vmatprep.subr.mxu0 0.0
        %1151 = vmatpush2.msra.mxu0 0.0
        %1152 = vmatprep.subr.mxu0 0.0
        %1153 = vmatpush2.msra.mxu0 0.0
        %1154 = vmatprep.subr.mxu0 0.0
        %1155 = vmatpush2.msra.mxu0 0.0
        %1156 = vmatprep.subr.mxu0 0.0
        %1157 = vmatpush2.msra.mxu0 0.0
        %1158 = vmatprep.subr.mxu0 0.0
        %1159 = vmatpush2.msra.mxu0 0.0
        %1160 = vmatprep.subr.mxu0 0.0
        %1161 = vmatpush2.msra.mxu0 0.0
        %1162 = vmatprep.subr.mxu0 0.0
        %1163 = vmatpush2.msra.mxu0 0.0
        %1164 = vmatprep.subr.mxu0 0.0
        %1165 = vmatpush2.msra.mxu0 0.0
        %1166 = vmatprep.subr.mxu0 0.0
        %1167 = vmatpush2.msra.mxu0 0.0
        %1168 = vmatprep.subr.mxu0 0.0
        %1169 = vmatpush2.msra.mxu0 0.0
        %1170 = vmatprep.mubr.f32.mxu0 0.0
        %1171 = vmatmul.mubr.f32.gmra.mxu0 %v1101
        %v1172 = vpop.f32.mrf.mxu0
        %v1173 = vadd.f32 0.0, %v1172
        %v1174 = vpop.f32.mrf.mxu0
        %1175 = vmatprep.mubr.f32.mxu0 0.0
        %1176 = vmatmul.mubr.f32.gmra.mxu0 %v1104
        %v1177 = vpop.f32.mrf.mxu0
        %v1178 = vadd.f32 0.0, %v1177
        %v1179 = vpop.f32.mrf.mxu0
        %1180 = vdwg.mxu0
        %1181 = vrot.lane.b32.xlu0 %v458, 64
        %v1182 = vpop.permute.xlu0 %1181
        %1183 = vrot.lane.b32.xlu0 %v463, 64
        %v1184 = vpop.permute.xlu0 %1183
        %v1188 = vsel %vm831, %v918, 0
        %v1191 = vsel %vm831, %v919, 0
        %1193 = vmatprep.subr.mxu0 0.0
        %1194 = vmatpush1.msra.mxu0 0.0
        %1195 = vmatprep.subr.mxu0 0.0
        %1196 = vmatpush1.msra.mxu0 0.0
        %1197 = vmatprep.subr.mxu0 0.0
        %1198 = vmatpush1.msra.mxu0 0.0
        %1199 = vmatprep.subr.mxu0 0.0
        %1200 = vmatpush1.msra.mxu0 0.0
        %1201 = vmatprep.subr.mxu0 0.0
        %1202 = vmatpush1.msra.mxu0 0.0
        %1203 = vmatprep.subr.mxu0 0.0
        %1204 = vmatpush1.msra.mxu0 0.0
        %1205 = vmatprep.subr.mxu0 0.0
        %1206 = vmatpush1.msra.mxu0 0.0
        %1207 = vmatprep.subr.mxu0 0.0
        %1208 = vmatpush1.msra.mxu0 0.0
        %1209 = vmatprep.subr.mxu0 0.0
        %1210 = vmatpush1.msra.mxu0 0.0
        %1211 = vmatprep.subr.mxu0 0.0
        %1212 = vmatpush1.msra.mxu0 0.0
        %1213 = vmatprep.subr.mxu0 0.0
        %1214 = vmatpush1.msra.mxu0 0.0
        %1215 = vmatprep.subr.mxu0 0.0
        %1216 = vmatpush1.msra.mxu0 0.0
        %1217 = vmatprep.subr.mxu0 0.0
        %1218 = vmatpush1.msra.mxu0 0.0
        %1219 = vmatprep.subr.mxu0 0.0
        %1220 = vmatpush1.msra.mxu0 0.0
        %1221 = vmatprep.subr.mxu0 0.0
        %1222 = vmatpush1.msra.mxu0 %v1184
        %1223 = vmatprep.subr.mxu0 0.0
        %1224 = vmatpush1.msra.mxu0 %v1182
        %1225 = vmatprep.subr.mxu0 0.0
        %1226 = vmatpush2.msra.mxu0 0.0
        %1227 = vmatprep.subr.mxu0 0.0
        %1228 = vmatpush2.msra.mxu0 0.0
        %1229 = vmatprep.subr.mxu0 0.0
        %1230 = vmatpush2.msra.mxu0 0.0
        %1231 = vmatprep.subr.mxu0 0.0
        %1232 = vmatpush2.msra.mxu0 0.0
        %1233 = vmatprep.subr.mxu0 0.0
        %1234 = vmatpush2.msra.mxu0 0.0
        %1235 = vmatprep.subr.mxu0 0.0
        %1236 = vmatpush2.msra.mxu0 0.0
        %1237 = vmatprep.subr.mxu0 0.0
        %1238 = vmatpush2.msra.mxu0 0.0
        %1239 = vmatprep.subr.mxu0 0.0
        %1240 = vmatpush2.msra.mxu0 0.0
        %1241 = vmatprep.subr.mxu0 0.0
        %1242 = vmatpush2.msra.mxu0 0.0
        %1243 = vmatprep.subr.mxu0 0.0
        %1244 = vmatpush2.msra.mxu0 0.0
        %1245 = vmatprep.subr.mxu0 0.0
        %1246 = vmatpush2.msra.mxu0 0.0
        %1247 = vmatprep.subr.mxu0 0.0
        %1248 = vmatpush2.msra.mxu0 0.0
        %1249 = vmatprep.subr.mxu0 0.0
        %1250 = vmatpush2.msra.mxu0 0.0
        %1251 = vmatprep.subr.mxu0 0.0
        %1252 = vmatpush2.msra.mxu0 0.0
        %1253 = vmatprep.subr.mxu0 0.0
        %1254 = vmatpush2.msra.mxu0 0.0
        %1255 = vmatprep.subr.mxu0 0.0
        %1256 = vmatpush2.msra.mxu0 0.0
        %1257 = vmatprep.mubr.f32.mxu0 0.0
        %1258 = vmatmul.mubr.f32.gmra.mxu0 %v1188
        %v1259 = vpop.f32.mrf.mxu0
        %v1260 = vadd.f32 0.0, %v1259
        %v1261 = vpop.f32.mrf.mxu0
        %1262 = vmatprep.mubr.f32.mxu0 0.0
        %1263 = vmatmul.mubr.f32.gmra.mxu0 %v1191
        %v1264 = vpop.f32.mrf.mxu0
        %v1265 = vadd.f32 0.0, %v1264
        %v1266 = vpop.f32.mrf.mxu0
        %1267 = vdwg.mxu0
        %s1268 = scalar_lea.vmem [#allocation8], 64
        %v1269 = vld [vmem:[%s1268] sm:$0xff]
        %v1270 = vld [vmem:[%s1268 + $0x8] sm:$0xff]
        %v1271 = vld [vmem:[%s1268 + $0x10] sm:$0xff]
        %v1272 = vld [vmem:[%s1268 + $0x18] sm:$0xff]
        %v1273 = vld [vmem:[%s1268 + $0x20] sm:$0xff]
        %v1274 = vld [vmem:[%s1268 + $0x28] sm:$0xff]
        %v1275 = vld [vmem:[%s1268 + $0x30] sm:$0xff]
        %v1276 = vld [vmem:[%s1268 + $0x38] sm:$0xff]
        %1277 = vrot.lane.b32.xlu0 %v428, 120
        %v1278 = vpop.permute.xlu0 %1277
        %1279 = vrot.lane.b32.xlu0 %v433, 120
        %v1280 = vpop.permute.xlu0 %1279
        %1281 = vrot.lane.b32.xlu0 %v428, 88
        %v1282 = vpop.permute.xlu0 %1281
        %1283 = vrot.lane.b32.xlu0 %v433, 88
        %v1284 = vpop.permute.xlu0 %1283
        %v1285 = vsel %vm480, %v1278, 0
        %v1287 = vsel %vm480, %v1280, 0
        %v1289 = vsel %vm480, %v1282, 0
        %v1291 = vsel %vm480, %v1284, 0
        %1293 = vmatprep.subr.mxu0 0.0
        %1294 = vmatpush1.xpose.msra.mxu0 0.0
        %1295 = vmatprep.subr.mxu0 0.0
        %1296 = vmatpush1.xpose.msra.mxu0 0.0
        %1297 = vmatprep.subr.mxu0 0.0
        %1298 = vmatpush1.xpose.msra.mxu0 0.0
        %1299 = vmatprep.subr.mxu0 0.0
        %1300 = vmatpush1.xpose.msra.mxu0 0.0
        %1301 = vmatprep.subr.mxu0 0.0
        %1302 = vmatpush1.xpose.msra.mxu0 0.0
        %1303 = vmatprep.subr.mxu0 0.0
        %1304 = vmatpush1.xpose.msra.mxu0 0.0
        %1305 = vmatprep.subr.mxu0 0.0
        %1306 = vmatpush1.xpose.msra.mxu0 0.0
        %1307 = vmatprep.subr.mxu0 0.0
        %1308 = vmatpush1.xpose.msra.mxu0 0.0
        %1309 = vmatprep.subr.mxu0 0.0
        %1310 = vmatpush1.xpose.msra.mxu0 0.0
        %1311 = vmatprep.subr.mxu0 0.0
        %1312 = vmatpush1.xpose.msra.mxu0 0.0
        %1313 = vmatprep.subr.mxu0 0.0
        %1314 = vmatpush1.xpose.msra.mxu0 0.0
        %1315 = vmatprep.subr.mxu0 0.0
        %1316 = vmatpush1.xpose.msra.mxu0 0.0
        %1317 = vmatprep.subr.mxu0 0.0
        %1318 = vmatpush1.xpose.msra.mxu0 0.0
        %1319 = vmatprep.subr.mxu0 0.0
        %1320 = vmatpush1.xpose.msra.mxu0 0.0
        %1321 = vmatprep.subr.mxu0 0.0
        %1322 = vmatpush1.xpose.msra.mxu0 %v1291
        %1323 = vmatprep.subr.mxu0 0.0
        %1324 = vmatpush1.xpose.msra.mxu0 %v1289
        %1325 = vmatprep.subr.mxu0 0.0
        %1326 = vmatpush2.xpose.msra.mxu0 0.0
        %1327 = vmatprep.subr.mxu0 0.0
        %1328 = vmatpush2.xpose.msra.mxu0 0.0
        %1329 = vmatprep.subr.mxu0 0.0
        %1330 = vmatpush2.xpose.msra.mxu0 0.0
        %1331 = vmatprep.subr.mxu0 0.0
        %1332 = vmatpush2.xpose.msra.mxu0 0.0
        %1333 = vmatprep.subr.mxu0 0.0
        %1334 = vmatpush2.xpose.msra.mxu0 0.0
        %1335 = vmatprep.subr.mxu0 0.0
        %1336 = vmatpush2.xpose.msra.mxu0 0.0
        %1337 = vmatprep.subr.mxu0 0.0
        %1338 = vmatpush2.xpose.msra.mxu0 0.0
        %1339 = vmatprep.subr.mxu0 0.0
        %1340 = vmatpush2.xpose.msra.mxu0 0.0
        %1341 = vmatprep.subr.mxu0 0.0
        %1342 = vmatpush2.xpose.msra.mxu0 0.0
        %1343 = vmatprep.subr.mxu0 0.0
        %1344 = vmatpush2.xpose.msra.mxu0 0.0
        %1345 = vmatprep.subr.mxu0 0.0
        %1346 = vmatpush2.xpose.msra.mxu0 0.0
        %1347 = vmatprep.subr.mxu0 0.0
        %1348 = vmatpush2.xpose.msra.mxu0 0.0
        %1349 = vmatprep.subr.mxu0 0.0
        %1350 = vmatpush2.xpose.msra.mxu0 0.0
        %1351 = vmatprep.subr.mxu0 0.0
        %1352 = vmatpush2.xpose.msra.mxu0 0.0
        %1353 = vmatprep.subr.mxu0 0.0
        %1354 = vmatpush2.xpose.msra.mxu0 0.0
        %1355 = vmatprep.subr.mxu0 0.0
        %1356 = vmatpush2.xpose.msra.mxu0 0.0
        %1357 = vmatprep.mubr.f32.mxu0 0.0
        %1358 = vmatmul.mubr.f32.gmra.mxu0 %v1285
        %v1359 = vpop.f32.mrf.mxu0
        %v1360 = vadd.f32 %v1269, %v1359
        %v1361 = vpop.f32.mrf.mxu0
        %1362 = vmatprep.mubr.f32.mxu0 0.0
        %1363 = vmatmul.mubr.f32.gmra.mxu0 %v1287
        %v1364 = vpop.f32.mrf.mxu0
        %v1365 = vadd.f32 %v1270, %v1364
        %v1366 = vpop.f32.mrf.mxu0
        %1367 = vdwg.mxu0
        %1368 = vrot.lane.b32.xlu0 %v438, 120
        %v1369 = vpop.permute.xlu0 %1368
        %1370 = vrot.lane.b32.xlu0 %v443, 120
        %v1371 = vpop.permute.xlu0 %1370
        %1372 = vrot.lane.b32.xlu0 %v438, 88
        %v1373 = vpop.permute.xlu0 %1372
        %1374 = vrot.lane.b32.xlu0 %v443, 88
        %v1375 = vpop.permute.xlu0 %1374
        %v1376 = vsel %vm480, %v1369, 0
        %v1378 = vsel %vm480, %v1371, 0
        %v1380 = vsel %vm480, %v1373, 0
        %v1382 = vsel %vm480, %v1375, 0
        %1384 = vmatprep.subr.mxu0 0.0
        %1385 = vmatpush1.xpose.msra.mxu0 0.0
        %1386 = vmatprep.subr.mxu0 0.0
        %1387 = vmatpush1.xpose.msra.mxu0 0.0
        %1388 = vmatprep.subr.mxu0 0.0
        %1389 = vmatpush1.xpose.msra.mxu0 0.0
        %1390 = vmatprep.subr.mxu0 0.0
        %1391 = vmatpush1.xpose.msra.mxu0 0.0
        %1392 = vmatprep.subr.mxu0 0.0
        %1393 = vmatpush1.xpose.msra.mxu0 0.0
        %1394 = vmatprep.subr.mxu0 0.0
        %1395 = vmatpush1.xpose.msra.mxu0 0.0
        %1396 = vmatprep.subr.mxu0 0.0
        %1397 = vmatpush1.xpose.msra.mxu0 0.0
        %1398 = vmatprep.subr.mxu0 0.0
        %1399 = vmatpush1.xpose.msra.mxu0 0.0
        %1400 = vmatprep.subr.mxu0 0.0
        %1401 = vmatpush1.xpose.msra.mxu0 0.0
        %1402 = vmatprep.subr.mxu0 0.0
        %1403 = vmatpush1.xpose.msra.mxu0 0.0
        %1404 = vmatprep.subr.mxu0 0.0
        %1405 = vmatpush1.xpose.msra.mxu0 0.0
        %1406 = vmatprep.subr.mxu0 0.0
        %1407 = vmatpush1.xpose.msra.mxu0 0.0
        %1408 = vmatprep.subr.mxu0 0.0
        %1409 = vmatpush1.xpose.msra.mxu0 0.0
        %1410 = vmatprep.subr.mxu0 0.0
        %1411 = vmatpush1.xpose.msra.mxu0 0.0
        %1412 = vmatprep.subr.mxu0 0.0
        %1413 = vmatpush1.xpose.msra.mxu0 %v1382
        %1414 = vmatprep.subr.mxu0 0.0
        %1415 = vmatpush1.xpose.msra.mxu0 %v1380
        %1416 = vmatprep.subr.mxu0 0.0
        %1417 = vmatpush2.xpose.msra.mxu0 0.0
        %1418 = vmatprep.subr.mxu0 0.0
        %1419 = vmatpush2.xpose.msra.mxu0 0.0
        %1420 = vmatprep.subr.mxu0 0.0
        %1421 = vmatpush2.xpose.msra.mxu0 0.0
        %1422 = vmatprep.subr.mxu0 0.0
        %1423 = vmatpush2.xpose.msra.mxu0 0.0
        %1424 = vmatprep.subr.mxu0 0.0
        %1425 = vmatpush2.xpose.msra.mxu0 0.0
        %1426 = vmatprep.subr.mxu0 0.0
        %1427 = vmatpush2.xpose.msra.mxu0 0.0
        %1428 = vmatprep.subr.mxu0 0.0
        %1429 = vmatpush2.xpose.msra.mxu0 0.0
        %1430 = vmatprep.subr.mxu0 0.0
        %1431 = vmatpush2.xpose.msra.mxu0 0.0
        %1432 = vmatprep.subr.mxu0 0.0
        %1433 = vmatpush2.xpose.msra.mxu0 0.0
        %1434 = vmatprep.subr.mxu0 0.0
        %1435 = vmatpush2.xpose.msra.mxu0 0.0
        %1436 = vmatprep.subr.mxu0 0.0
        %1437 = vmatpush2.xpose.msra.mxu0 0.0
        %1438 = vmatprep.subr.mxu0 0.0
        %1439 = vmatpush2.xpose.msra.mxu0 0.0
        %1440 = vmatprep.subr.mxu0 0.0
        %1441 = vmatpush2.xpose.msra.mxu0 0.0
        %1442 = vmatprep.subr.mxu0 0.0
        %1443 = vmatpush2.xpose.msra.mxu0 0.0
        %1444 = vmatprep.subr.mxu0 0.0
        %1445 = vmatpush2.xpose.msra.mxu0 0.0
        %1446 = vmatprep.subr.mxu0 0.0
        %1447 = vmatpush2.xpose.msra.mxu0 0.0
        %1448 = vmatprep.mubr.f32.mxu0 0.0
        %1449 = vmatmul.mubr.f32.gmra.mxu0 %v1376
        %v1450 = vpop.f32.mrf.mxu0
        %v1451 = vadd.f32 %v1271, %v1450
        %v1452 = vpop.f32.mrf.mxu0
        %1453 = vmatprep.mubr.f32.mxu0 0.0
        %1454 = vmatmul.mubr.f32.gmra.mxu0 %v1378
        %v1455 = vpop.f32.mrf.mxu0
        %v1456 = vadd.f32 %v1272, %v1455
        %v1457 = vpop.f32.mrf.mxu0
        %1458 = vdwg.mxu0
        %1459 = vrot.lane.b32.xlu0 %v448, 120
        %v1460 = vpop.permute.xlu0 %1459
        %1461 = vrot.lane.b32.xlu0 %v453, 120
        %v1462 = vpop.permute.xlu0 %1461
        %1463 = vrot.lane.b32.xlu0 %v448, 88
        %v1464 = vpop.permute.xlu0 %1463
        %1465 = vrot.lane.b32.xlu0 %v453, 88
        %v1466 = vpop.permute.xlu0 %1465
        %v1467 = vsel %vm480, %v1460, 0
        %v1469 = vsel %vm480, %v1462, 0
        %v1471 = vsel %vm480, %v1464, 0
        %v1473 = vsel %vm480, %v1466, 0
        %1475 = vmatprep.subr.mxu0 0.0
        %1476 = vmatpush1.xpose.msra.mxu0 0.0
        %1477 = vmatprep.subr.mxu0 0.0
        %1478 = vmatpush1.xpose.msra.mxu0 0.0
        %1479 = vmatprep.subr.mxu0 0.0
        %1480 = vmatpush1.xpose.msra.mxu0 0.0
        %1481 = vmatprep.subr.mxu0 0.0
        %1482 = vmatpush1.xpose.msra.mxu0 0.0
        %1483 = vmatprep.subr.mxu0 0.0
        %1484 = vmatpush1.xpose.msra.mxu0 0.0
        %1485 = vmatprep.subr.mxu0 0.0
        %1486 = vmatpush1.xpose.msra.mxu0 0.0
        %1487 = vmatprep.subr.mxu0 0.0
        %1488 = vmatpush1.xpose.msra.mxu0 0.0
        %1489 = vmatprep.subr.mxu0 0.0
        %1490 = vmatpush1.xpose.msra.mxu0 0.0
        %1491 = vmatprep.subr.mxu0 0.0
        %1492 = vmatpush1.xpose.msra.mxu0 0.0
        %1493 = vmatprep.subr.mxu0 0.0
        %1494 = vmatpush1.xpose.msra.mxu0 0.0
        %1495 = vmatprep.subr.mxu0 0.0
        %1496 = vmatpush1.xpose.msra.mxu0 0.0
        %1497 = vmatprep.subr.mxu0 0.0
        %1498 = vmatpush1.xpose.msra.mxu0 0.0
        %1499 = vmatprep.subr.mxu0 0.0
        %1500 = vmatpush1.xpose.msra.mxu0 0.0
        %1501 = vmatprep.subr.mxu0 0.0
        %1502 = vmatpush1.xpose.msra.mxu0 0.0
        %1503 = vmatprep.subr.mxu0 0.0
        %1504 = vmatpush1.xpose.msra.mxu0 %v1473
        %1505 = vmatprep.subr.mxu0 0.0
        %1506 = vmatpush1.xpose.msra.mxu0 %v1471
        %1507 = vmatprep.subr.mxu0 0.0
        %1508 = vmatpush2.xpose.msra.mxu0 0.0
        %1509 = vmatprep.subr.mxu0 0.0
        %1510 = vmatpush2.xpose.msra.mxu0 0.0
        %1511 = vmatprep.subr.mxu0 0.0
        %1512 = vmatpush2.xpose.msra.mxu0 0.0
        %1513 = vmatprep.subr.mxu0 0.0
        %1514 = vmatpush2.xpose.msra.mxu0 0.0
        %1515 = vmatprep.subr.mxu0 0.0
        %1516 = vmatpush2.xpose.msra.mxu0 0.0
        %1517 = vmatprep.subr.mxu0 0.0
        %1518 = vmatpush2.xpose.msra.mxu0 0.0
        %1519 = vmatprep.subr.mxu0 0.0
        %1520 = vmatpush2.xpose.msra.mxu0 0.0
        %1521 = vmatprep.subr.mxu0 0.0
        %1522 = vmatpush2.xpose.msra.mxu0 0.0
        %1523 = vmatprep.subr.mxu0 0.0
        %1524 = vmatpush2.xpose.msra.mxu0 0.0
        %1525 = vmatprep.subr.mxu0 0.0
        %1526 = vmatpush2.xpose.msra.mxu0 0.0
        %1527 = vmatprep.subr.mxu0 0.0
        %1528 = vmatpush2.xpose.msra.mxu0 0.0
        %1529 = vmatprep.subr.mxu0 0.0
        %1530 = vmatpush2.xpose.msra.mxu0 0.0
        %1531 = vmatprep.subr.mxu0 0.0
        %1532 = vmatpush2.xpose.msra.mxu0 0.0
        %1533 = vmatprep.subr.mxu0 0.0
        %1534 = vmatpush2.xpose.msra.mxu0 0.0
        %1535 = vmatprep.subr.mxu0 0.0
        %1536 = vmatpush2.xpose.msra.mxu0 0.0
        %1537 = vmatprep.subr.mxu0 0.0
        %1538 = vmatpush2.xpose.msra.mxu0 0.0
        %1539 = vmatprep.mubr.f32.mxu0 0.0
        %1540 = vmatmul.mubr.f32.gmra.mxu0 %v1467
        %v1541 = vpop.f32.mrf.mxu0
        %v1542 = vadd.f32 %v1273, %v1541
        %v1543 = vpop.f32.mrf.mxu0
        %1544 = vmatprep.mubr.f32.mxu0 0.0
        %1545 = vmatmul.mubr.f32.gmra.mxu0 %v1469
        %v1546 = vpop.f32.mrf.mxu0
        %v1547 = vadd.f32 %v1274, %v1546
        %v1548 = vpop.f32.mrf.mxu0
        %1549 = vdwg.mxu0
        %1550 = vrot.lane.b32.xlu0 %v458, 120
        %v1551 = vpop.permute.xlu0 %1550
        %1552 = vrot.lane.b32.xlu0 %v463, 120
        %v1553 = vpop.permute.xlu0 %1552
        %1554 = vrot.lane.b32.xlu0 %v458, 88
        %v1555 = vpop.permute.xlu0 %1554
        %1556 = vrot.lane.b32.xlu0 %v463, 88
        %v1557 = vpop.permute.xlu0 %1556
        %v1558 = vsel %vm480, %v1551, 0
        %v1560 = vsel %vm480, %v1553, 0
        %v1562 = vsel %vm480, %v1555, 0
        %v1564 = vsel %vm480, %v1557, 0
        %1566 = vmatprep.subr.mxu0 0.0
        %1567 = vmatpush1.xpose.msra.mxu0 0.0
        %1568 = vmatprep.subr.mxu0 0.0
        %1569 = vmatpush1.xpose.msra.mxu0 0.0
        %1570 = vmatprep.subr.mxu0 0.0
        %1571 = vmatpush1.xpose.msra.mxu0 0.0
        %1572 = vmatprep.subr.mxu0 0.0
        %1573 = vmatpush1.xpose.msra.mxu0 0.0
        %1574 = vmatprep.subr.mxu0 0.0
        %1575 = vmatpush1.xpose.msra.mxu0 0.0
        %1576 = vmatprep.subr.mxu0 0.0
        %1577 = vmatpush1.xpose.msra.mxu0 0.0
        %1578 = vmatprep.subr.mxu0 0.0
        %1579 = vmatpush1.xpose.msra.mxu0 0.0
        %1580 = vmatprep.subr.mxu0 0.0
        %1581 = vmatpush1.xpose.msra.mxu0 0.0
        %1582 = vmatprep.subr.mxu0 0.0
        %1583 = vmatpush1.xpose.msra.mxu0 0.0
        %1584 = vmatprep.subr.mxu0 0.0
        %1585 = vmatpush1.xpose.msra.mxu0 0.0
        %1586 = vmatprep.subr.mxu0 0.0
        %1587 = vmatpush1.xpose.msra.mxu0 0.0
        %1588 = vmatprep.subr.mxu0 0.0
        %1589 = vmatpush1.xpose.msra.mxu0 0.0
        %1590 = vmatprep.subr.mxu0 0.0
        %1591 = vmatpush1.xpose.msra.mxu0 0.0
        %1592 = vmatprep.subr.mxu0 0.0
        %1593 = vmatpush1.xpose.msra.mxu0 0.0
        %1594 = vmatprep.subr.mxu0 0.0
        %1595 = vmatpush1.xpose.msra.mxu0 %v1564
        %1596 = vmatprep.subr.mxu0 0.0
        %1597 = vmatpush1.xpose.msra.mxu0 %v1562
        %1598 = vmatprep.subr.mxu0 0.0
        %1599 = vmatpush2.xpose.msra.mxu0 0.0
        %1600 = vmatprep.subr.mxu0 0.0
        %1601 = vmatpush2.xpose.msra.mxu0 0.0
        %1602 = vmatprep.subr.mxu0 0.0
        %1603 = vmatpush2.xpose.msra.mxu0 0.0
        %1604 = vmatprep.subr.mxu0 0.0
        %1605 = vmatpush2.xpose.msra.mxu0 0.0
        %1606 = vmatprep.subr.mxu0 0.0
        %1607 = vmatpush2.xpose.msra.mxu0 0.0
        %1608 = vmatprep.subr.mxu0 0.0
        %1609 = vmatpush2.xpose.msra.mxu0 0.0
        %1610 = vmatprep.subr.mxu0 0.0
        %1611 = vmatpush2.xpose.msra.mxu0 0.0
        %1612 = vmatprep.subr.mxu0 0.0
        %1613 = vmatpush2.xpose.msra.mxu0 0.0
        %1614 = vmatprep.subr.mxu0 0.0
        %1615 = vmatpush2.xpose.msra.mxu0 0.0
        %1616 = vmatprep.subr.mxu0 0.0
        %1617 = vmatpush2.xpose.msra.mxu0 0.0
        %1618 = vmatprep.subr.mxu0 0.0
        %1619 = vmatpush2.xpose.msra.mxu0 0.0
        %1620 = vmatprep.subr.mxu0 0.0
        %1621 = vmatpush2.xpose.msra.mxu0 0.0
        %1622 = vmatprep.subr.mxu0 0.0
        %1623 = vmatpush2.xpose.msra.mxu0 0.0
        %1624 = vmatprep.subr.mxu0 0.0
        %1625 = vmatpush2.xpose.msra.mxu0 0.0
        %1626 = vmatprep.subr.mxu0 0.0
        %1627 = vmatpush2.xpose.msra.mxu0 0.0
        %1628 = vmatprep.subr.mxu0 0.0
        %1629 = vmatpush2.xpose.msra.mxu0 0.0
        %1630 = vmatprep.mubr.f32.mxu0 0.0
        %1631 = vmatmul.mubr.f32.gmra.mxu0 %v1558
        %v1632 = vpop.f32.mrf.mxu0
        %v1633 = vadd.f32 %v1275, %v1632
        %v1634 = vpop.f32.mrf.mxu0
        %1635 = vmatprep.mubr.f32.mxu0 0.0
        %1636 = vmatmul.mubr.f32.gmra.mxu0 %v1560
        %v1637 = vpop.f32.mrf.mxu0
        %v1638 = vadd.f32 %v1276, %v1637
        %v1639 = vpop.f32.mrf.mxu0
        %1640 = vdwg.mxu0
        %v1641 = vsel %vm831, %v1360, -inf
        %1642 = vmax.xlane.f32.xlu0 %v1641
        %v1643 = vpop.xlane.xlu0 %1642
        %v1644 = vsel %vm831, %v1365, -inf
        %1645 = vmax.xlane.f32.xlu0 %v1644
        %v1646 = vpop.xlane.xlu0 %1645
        %v1647 = vsel %vm831, %v1451, -inf
        %1648 = vmax.xlane.f32.xlu0 %v1647
        %v1649 = vpop.xlane.xlu0 %1648
        %v1650 = vsel %vm831, %v1456, -inf
        %1651 = vmax.xlane.f32.xlu0 %v1650
        %v1652 = vpop.xlane.xlu0 %1651
        %v1653 = vsel %vm831, %v1542, -inf
        %1654 = vmax.xlane.f32.xlu0 %v1653
        %v1655 = vpop.xlane.xlu0 %1654
        %v1656 = vsel %vm831, %v1547, -inf
        %1657 = vmax.xlane.f32.xlu0 %v1656
        %v1658 = vpop.xlane.xlu0 %1657
        %v1659 = vsel %vm831, %v1633, -inf
        %1660 = vmax.xlane.f32.xlu0 %v1659
        %v1661 = vpop.xlane.xlu0 %1660
        %v1662 = vsel %vm831, %v1638, -inf
        %1663 = vmax.xlane.f32.xlu0 %v1662
        %v1664 = vpop.xlane.xlu0 %1663
        %v1665 = vsub.f32 %v1360, %v1643
        %v1666 = vsub.f32 %v1365, %v1646
        %v1667 = vsub.f32 %v1451, %v1649
        %v1668 = vsub.f32 %v1456, %v1652
        %v1669 = vsub.f32 %v1542, %v1655
        %v1670 = vsub.f32 %v1547, %v1658
        %v1671 = vsub.f32 %v1633, %v1661
        %v1672 = vsub.f32 %v1638, %v1664
        %v1673 = vmul.f32 %v1665, 1.442695
        %v1674 = vpow.pop %v1673
        %v1675 = vmul.f32 %v1666, 1.442695
        %v1676 = vpow.pop %v1675
        %v1677 = vmul.f32 %v1667, 1.442695
        %v1678 = vpow.pop %v1677
        %v1679 = vmul.f32 %v1668, 1.442695
        %v1680 = vpow.pop %v1679
        %v1681 = vmul.f32 %v1669, 1.442695
        %v1682 = vpow.pop %v1681
        %v1683 = vmul.f32 %v1670, 1.442695
        %v1684 = vpow.pop %v1683
        %v1685 = vmul.f32 %v1671, 1.442695
        %v1686 = vpow.pop %v1685
        %v1687 = vmul.f32 %v1672, 1.442695
        %v1688 = vpow.pop %v1687
        %v1689 = vsel %vm831, %v1674, 0.0
        %1690 = vadd.xlane.f32.xlu0 %v1689
        %v1691 = vpop.xlane.xlu0 %1690
        %v1692 = vsel %vm831, %v1676, 0.0
        %1693 = vadd.xlane.f32.xlu0 %v1692
        %v1694 = vpop.xlane.xlu0 %1693
        %v1695 = vsel %vm831, %v1678, 0.0
        %1696 = vadd.xlane.f32.xlu0 %v1695
        %v1697 = vpop.xlane.xlu0 %1696
        %v1698 = vsel %vm831, %v1680, 0.0
        %1699 = vadd.xlane.f32.xlu0 %v1698
        %v1700 = vpop.xlane.xlu0 %1699
        %v1701 = vsel %vm831, %v1682, 0.0
        %1702 = vadd.xlane.f32.xlu0 %v1701
        %v1703 = vpop.xlane.xlu0 %1702
        %v1704 = vsel %vm831, %v1684, 0.0
        %1705 = vadd.xlane.f32.xlu0 %v1704
        %v1706 = vpop.xlane.xlu0 %1705
        %v1707 = vsel %vm831, %v1686, 0.0
        %1708 = vadd.xlane.f32.xlu0 %v1707
        %v1709 = vpop.xlane.xlu0 %1708
        %v1710 = vsel %vm831, %v1688, 0.0
        %1711 = vadd.xlane.f32.xlu0 %v1710
        %v1712 = vpop.xlane.xlu0 %1711
        %v1713 = vrcp.pop %v1691
        %v1714 = vrcp.pop %v1694
        %v1715 = vrcp.pop %v1697
        %v1716 = vrcp.pop %v1700
        %v1717 = vrcp.pop %v1703
        %v1718 = vrcp.pop %v1706
        %v1719 = vrcp.pop %v1709
        %v1720 = vrcp.pop %v1712
        %v1721 = vmul.f32 %v1674, %v1713
        %v1722 = vmul.f32 %v1676, %v1714
        %v1723 = vmul.f32 %v1678, %v1715
        %v1724 = vmul.f32 %v1680, %v1716
        %v1725 = vmul.f32 %v1682, %v1717
        %v1726 = vmul.f32 %v1684, %v1718
        %v1727 = vmul.f32 %v1686, %v1719
        %v1728 = vmul.f32 %v1688, %v1720
        %1729 = vrot.lane.b32.xlu0 %v428, 56
        %v1730 = vpop.permute.xlu0 %1729
        %1731 = vrot.lane.b32.xlu0 %v433, 56
        %v1732 = vpop.permute.xlu0 %1731
        %v1736 = vsel %vm831, %v1721, 0
        %v1739 = vsel %vm831, %v1722, 0
        %1741 = vmatprep.subr.mxu0 0.0
        %1742 = vmatpush1.msra.mxu0 0.0
        %1743 = vmatprep.subr.mxu0 0.0
        %1744 = vmatpush1.msra.mxu0 0.0
        %1745 = vmatprep.subr.mxu0 0.0
        %1746 = vmatpush1.msra.mxu0 0.0
        %1747 = vmatprep.subr.mxu0 0.0
        %1748 = vmatpush1.msra.mxu0 0.0
        %1749 = vmatprep.subr.mxu0 0.0
        %1750 = vmatpush1.msra.mxu0 0.0
        %1751 = vmatprep.subr.mxu0 0.0
        %1752 = vmatpush1.msra.mxu0 0.0
        %1753 = vmatprep.subr.mxu0 0.0
        %1754 = vmatpush1.msra.mxu0 0.0
        %1755 = vmatprep.subr.mxu0 0.0
        %1756 = vmatpush1.msra.mxu0 0.0
        %1757 = vmatprep.subr.mxu0 0.0
        %1758 = vmatpush1.msra.mxu0 0.0
        %1759 = vmatprep.subr.mxu0 0.0
        %1760 = vmatpush1.msra.mxu0 0.0
        %1761 = vmatprep.subr.mxu0 0.0
        %1762 = vmatpush1.msra.mxu0 0.0
        %1763 = vmatprep.subr.mxu0 0.0
        %1764 = vmatpush1.msra.mxu0 0.0
        %1765 = vmatprep.subr.mxu0 0.0
        %1766 = vmatpush1.msra.mxu0 0.0
        %1767 = vmatprep.subr.mxu0 0.0
        %1768 = vmatpush1.msra.mxu0 0.0
        %1769 = vmatprep.subr.mxu0 0.0
        %1770 = vmatpush1.msra.mxu0 %v1732
        %1771 = vmatprep.subr.mxu0 0.0
        %1772 = vmatpush1.msra.mxu0 %v1730
        %1773 = vmatprep.subr.mxu0 0.0
        %1774 = vmatpush2.msra.mxu0 0.0
        %1775 = vmatprep.subr.mxu0 0.0
        %1776 = vmatpush2.msra.mxu0 0.0
        %1777 = vmatprep.subr.mxu0 0.0
        %1778 = vmatpush2.msra.mxu0 0.0
        %1779 = vmatprep.subr.mxu0 0.0
        %1780 = vmatpush2.msra.mxu0 0.0
        %1781 = vmatprep.subr.mxu0 0.0
        %1782 = vmatpush2.msra.mxu0 0.0
        %1783 = vmatprep.subr.mxu0 0.0
        %1784 = vmatpush2.msra.mxu0 0.0
        %1785 = vmatprep.subr.mxu0 0.0
        %1786 = vmatpush2.msra.mxu0 0.0
        %1787 = vmatprep.subr.mxu0 0.0
        %1788 = vmatpush2.msra.mxu0 0.0
        %1789 = vmatprep.subr.mxu0 0.0
        %1790 = vmatpush2.msra.mxu0 0.0
        %1791 = vmatprep.subr.mxu0 0.0
        %1792 = vmatpush2.msra.mxu0 0.0
        %1793 = vmatprep.subr.mxu0 0.0
        %1794 = vmatpush2.msra.mxu0 0.0
        %1795 = vmatprep.subr.mxu0 0.0
        %1796 = vmatpush2.msra.mxu0 0.0
        %1797 = vmatprep.subr.mxu0 0.0
        %1798 = vmatpush2.msra.mxu0 0.0
        %1799 = vmatprep.subr.mxu0 0.0
        %1800 = vmatpush2.msra.mxu0 0.0
        %1801 = vmatprep.subr.mxu0 0.0
        %1802 = vmatpush2.msra.mxu0 0.0
        %1803 = vmatprep.subr.mxu0 0.0
        %1804 = vmatpush2.msra.mxu0 0.0
        %1805 = vmatprep.mubr.f32.mxu0 0.0
        %1806 = vmatmul.mubr.f32.gmra.mxu0 %v1736
        %v1807 = vpop.f32.mrf.mxu0
        %v1808 = vadd.f32 0.0, %v1807
        %v1809 = vpop.f32.mrf.mxu0
        %1810 = vmatprep.mubr.f32.mxu0 0.0
        %1811 = vmatmul.mubr.f32.gmra.mxu0 %v1739
        %v1812 = vpop.f32.mrf.mxu0
        %v1813 = vadd.f32 0.0, %v1812
        %v1814 = vpop.f32.mrf.mxu0
        %1815 = vdwg.mxu0
        %1816 = vrot.lane.b32.xlu0 %v438, 56
        %v1817 = vpop.permute.xlu0 %1816
        %1818 = vrot.lane.b32.xlu0 %v443, 56
        %v1819 = vpop.permute.xlu0 %1818
        %v1823 = vsel %vm831, %v1723, 0
        %v1826 = vsel %vm831, %v1724, 0
        %1828 = vmatprep.subr.mxu0 0.0
        %1829 = vmatpush1.msra.mxu0 0.0
        %1830 = vmatprep.subr.mxu0 0.0
        %1831 = vmatpush1.msra.mxu0 0.0
        %1832 = vmatprep.subr.mxu0 0.0
        %1833 = vmatpush1.msra.mxu0 0.0
        %1834 = vmatprep.subr.mxu0 0.0
        %1835 = vmatpush1.msra.mxu0 0.0
        %1836 = vmatprep.subr.mxu0 0.0
        %1837 = vmatpush1.msra.mxu0 0.0
        %1838 = vmatprep.subr.mxu0 0.0
        %1839 = vmatpush1.msra.mxu0 0.0
        %1840 = vmatprep.subr.mxu0 0.0
        %1841 = vmatpush1.msra.mxu0 0.0
        %1842 = vmatprep.subr.mxu0 0.0
        %1843 = vmatpush1.msra.mxu0 0.0
        %1844 = vmatprep.subr.mxu0 0.0
        %1845 = vmatpush1.msra.mxu0 0.0
        %1846 = vmatprep.subr.mxu0 0.0
        %1847 = vmatpush1.msra.mxu0 0.0
        %1848 = vmatprep.subr.mxu0 0.0
        %1849 = vmatpush1.msra.mxu0 0.0
        %1850 = vmatprep.subr.mxu0 0.0
        %1851 = vmatpush1.msra.mxu0 0.0
        %1852 = vmatprep.subr.mxu0 0.0
        %1853 = vmatpush1.msra.mxu0 0.0
        %1854 = vmatprep.subr.mxu0 0.0
        %1855 = vmatpush1.msra.mxu0 0.0
        %1856 = vmatprep.subr.mxu0 0.0
        %1857 = vmatpush1.msra.mxu0 %v1819
        %1858 = vmatprep.subr.mxu0 0.0
        %1859 = vmatpush1.msra.mxu0 %v1817
        %1860 = vmatprep.subr.mxu0 0.0
        %1861 = vmatpush2.msra.mxu0 0.0
        %1862 = vmatprep.subr.mxu0 0.0
        %1863 = vmatpush2.msra.mxu0 0.0
        %1864 = vmatprep.subr.mxu0 0.0
        %1865 = vmatpush2.msra.mxu0 0.0
        %1866 = vmatprep.subr.mxu0 0.0
        %1867 = vmatpush2.msra.mxu0 0.0
        %1868 = vmatprep.subr.mxu0 0.0
        %1869 = vmatpush2.msra.mxu0 0.0
        %1870 = vmatprep.subr.mxu0 0.0
        %1871 = vmatpush2.msra.mxu0 0.0
        %1872 = vmatprep.subr.mxu0 0.0
        %1873 = vmatpush2.msra.mxu0 0.0
        %1874 = vmatprep.subr.mxu0 0.0
        %1875 = vmatpush2.msra.mxu0 0.0
        %1876 = vmatprep.subr.mxu0 0.0
        %1877 = vmatpush2.msra.mxu0 0.0
        %1878 = vmatprep.subr.mxu0 0.0
        %1879 = vmatpush2.msra.mxu0 0.0
        %1880 = vmatprep.subr.mxu0 0.0
        %1881 = vmatpush2.msra.mxu0 0.0
        %1882 = vmatprep.subr.mxu0 0.0
        %1883 = vmatpush2.msra.mxu0 0.0
        %1884 = vmatprep.subr.mxu0 0.0
        %1885 = vmatpush2.msra.mxu0 0.0
        %1886 = vmatprep.subr.mxu0 0.0
        %1887 = vmatpush2.msra.mxu0 0.0
        %1888 = vmatprep.subr.mxu0 0.0
        %1889 = vmatpush2.msra.mxu0 0.0
        %1890 = vmatprep.subr.mxu0 0.0
        %1891 = vmatpush2.msra.mxu0 0.0
        %1892 = vmatprep.mubr.f32.mxu0 0.0
        %1893 = vmatmul.mubr.f32.gmra.mxu0 %v1823
        %v1894 = vpop.f32.mrf.mxu0
        %v1895 = vadd.f32 0.0, %v1894
        %v1896 = vpop.f32.mrf.mxu0
        %1897 = vmatprep.mubr.f32.mxu0 0.0
        %1898 = vmatmul.mubr.f32.gmra.mxu0 %v1826
        %v1899 = vpop.f32.mrf.mxu0
        %v1900 = vadd.f32 0.0, %v1899
        %v1901 = vpop.f32.mrf.mxu0
        %1902 = vdwg.mxu0
        %1903 = vrot.lane.b32.xlu0 %v448, 56
        %v1904 = vpop.permute.xlu0 %1903
        %1905 = vrot.lane.b32.xlu0 %v453, 56
        %v1906 = vpop.permute.xlu0 %1905
        %v1910 = vsel %vm831, %v1725, 0
        %v1913 = vsel %vm831, %v1726, 0
        %1915 = vmatprep.subr.mxu0 0.0
        %1916 = vmatpush1.msra.mxu0 0.0
        %1917 = vmatprep.subr.mxu0 0.0
        %1918 = vmatpush1.msra.mxu0 0.0
        %1919 = vmatprep.subr.mxu0 0.0
        %1920 = vmatpush1.msra.mxu0 0.0
        %1921 = vmatprep.subr.mxu0 0.0
        %1922 = vmatpush1.msra.mxu0 0.0
        %1923 = vmatprep.subr.mxu0 0.0
        %1924 = vmatpush1.msra.mxu0 0.0
        %1925 = vmatprep.subr.mxu0 0.0
        %1926 = vmatpush1.msra.mxu0 0.0
        %1927 = vmatprep.subr.mxu0 0.0
        %1928 = vmatpush1.msra.mxu0 0.0
        %1929 = vmatprep.subr.mxu0 0.0
        %1930 = vmatpush1.msra.mxu0 0.0
        %1931 = vmatprep.subr.mxu0 0.0
        %1932 = vmatpush1.msra.mxu0 0.0
        %1933 = vmatprep.subr.mxu0 0.0
        %1934 = vmatpush1.msra.mxu0 0.0
        %1935 = vmatprep.subr.mxu0 0.0
        %1936 = vmatpush1.msra.mxu0 0.0
        %1937 = vmatprep.subr.mxu0 0.0
        %1938 = vmatpush1.msra.mxu0 0.0
        %1939 = vmatprep.subr.mxu0 0.0
        %1940 = vmatpush1.msra.mxu0 0.0
        %1941 = vmatprep.subr.mxu0 0.0
        %1942 = vmatpush1.msra.mxu0 0.0
        %1943 = vmatprep.subr.mxu0 0.0
        %1944 = vmatpush1.msra.mxu0 %v1906
        %1945 = vmatprep.subr.mxu0 0.0
        %1946 = vmatpush1.msra.mxu0 %v1904
        %1947 = vmatprep.subr.mxu0 0.0
        %1948 = vmatpush2.msra.mxu0 0.0
        %1949 = vmatprep.subr.mxu0 0.0
        %1950 = vmatpush2.msra.mxu0 0.0
        %1951 = vmatprep.subr.mxu0 0.0
        %1952 = vmatpush2.msra.mxu0 0.0
        %1953 = vmatprep.subr.mxu0 0.0
        %1954 = vmatpush2.msra.mxu0 0.0
        %1955 = vmatprep.subr.mxu0 0.0
        %1956 = vmatpush2.msra.mxu0 0.0
        %1957 = vmatprep.subr.mxu0 0.0
        %1958 = vmatpush2.msra.mxu0 0.0
        %1959 = vmatprep.subr.mxu0 0.0
        %1960 = vmatpush2.msra.mxu0 0.0
        %1961 = vmatprep.subr.mxu0 0.0
        %1962 = vmatpush2.msra.mxu0 0.0
        %1963 = vmatprep.subr.mxu0 0.0
        %1964 = vmatpush2.msra.mxu0 0.0
        %1965 = vmatprep.subr.mxu0 0.0
        %1966 = vmatpush2.msra.mxu0 0.0
        %1967 = vmatprep.subr.mxu0 0.0
        %1968 = vmatpush2.msra.mxu0 0.0
        %1969 = vmatprep.subr.mxu0 0.0
        %1970 = vmatpush2.msra.mxu0 0.0
        %1971 = vmatprep.subr.mxu0 0.0
        %1972 = vmatpush2.msra.mxu0 0.0
        %1973 = vmatprep.subr.mxu0 0.0
        %1974 = vmatpush2.msra.mxu0 0.0
        %1975 = vmatprep.subr.mxu0 0.0
        %1976 = vmatpush2.msra.mxu0 0.0
        %1977 = vmatprep.subr.mxu0 0.0
        %1978 = vmatpush2.msra.mxu0 0.0
        %1979 = vmatprep.mubr.f32.mxu0 0.0
        %1980 = vmatmul.mubr.f32.gmra.mxu0 %v1910
        %v1981 = vpop.f32.mrf.mxu0
        %v1982 = vadd.f32 0.0, %v1981
        %v1983 = vpop.f32.mrf.mxu0
        %1984 = vmatprep.mubr.f32.mxu0 0.0
        %1985 = vmatmul.mubr.f32.gmra.mxu0 %v1913
        %v1986 = vpop.f32.mrf.mxu0
        %v1987 = vadd.f32 0.0, %v1986
        %v1988 = vpop.f32.mrf.mxu0
        %1989 = vdwg.mxu0
        %1990 = vrot.lane.b32.xlu0 %v458, 56
        %v1991 = vpop.permute.xlu0 %1990
        %1992 = vrot.lane.b32.xlu0 %v463, 56
        %v1993 = vpop.permute.xlu0 %1992
        %v1997 = vsel %vm831, %v1727, 0
        %v2000 = vsel %vm831, %v1728, 0
        %2002 = vmatprep.subr.mxu0 0.0
        %2003 = vmatpush1.msra.mxu0 0.0
        %2004 = vmatprep.subr.mxu0 0.0
        %2005 = vmatpush1.msra.mxu0 0.0
        %2006 = vmatprep.subr.mxu0 0.0
        %2007 = vmatpush1.msra.mxu0 0.0
        %2008 = vmatprep.subr.mxu0 0.0
        %2009 = vmatpush1.msra.mxu0 0.0
        %2010 = vmatprep.subr.mxu0 0.0
        %2011 = vmatpush1.msra.mxu0 0.0
        %2012 = vmatprep.subr.mxu0 0.0
        %2013 = vmatpush1.msra.mxu0 0.0
        %2014 = vmatprep.subr.mxu0 0.0
        %2015 = vmatpush1.msra.mxu0 0.0
        %2016 = vmatprep.subr.mxu0 0.0
        %2017 = vmatpush1.msra.mxu0 0.0
        %2018 = vmatprep.subr.mxu0 0.0
        %2019 = vmatpush1.msra.mxu0 0.0
        %2020 = vmatprep.subr.mxu0 0.0
        %2021 = vmatpush1.msra.mxu0 0.0
        %2022 = vmatprep.subr.mxu0 0.0
        %2023 = vmatpush1.msra.mxu0 0.0
        %2024 = vmatprep.subr.mxu0 0.0
        %2025 = vmatpush1.msra.mxu0 0.0
        %2026 = vmatprep.subr.mxu0 0.0
        %2027 = vmatpush1.msra.mxu0 0.0
        %2028 = vmatprep.subr.mxu0 0.0
        %2029 = vmatpush1.msra.mxu0 0.0
        %2030 = vmatprep.subr.mxu0 0.0
        %2031 = vmatpush1.msra.mxu0 %v1993
        %2032 = vmatprep.subr.mxu0 0.0
        %2033 = vmatpush1.msra.mxu0 %v1991
        %2034 = vmatprep.subr.mxu0 0.0
        %2035 = vmatpush2.msra.mxu0 0.0
        %2036 = vmatprep.subr.mxu0 0.0
        %2037 = vmatpush2.msra.mxu0 0.0
        %2038 = vmatprep.subr.mxu0 0.0
        %2039 = vmatpush2.msra.mxu0 0.0
        %2040 = vmatprep.subr.mxu0 0.0
        %2041 = vmatpush2.msra.mxu0 0.0
        %2042 = vmatprep.subr.mxu0 0.0
        %2043 = vmatpush2.msra.mxu0 0.0
        %2044 = vmatprep.subr.mxu0 0.0
        %2045 = vmatpush2.msra.mxu0 0.0
        %2046 = vmatprep.subr.mxu0 0.0
        %2047 = vmatpush2.msra.mxu0 0.0
        %2048 = vmatprep.subr.mxu0 0.0
        %2049 = vmatpush2.msra.mxu0 0.0
        %2050 = vmatprep.subr.mxu0 0.0
        %2051 = vmatpush2.msra.mxu0 0.0
        %2052 = vmatprep.subr.mxu0 0.0
        %2053 = vmatpush2.msra.mxu0 0.0
        %2054 = vmatprep.subr.mxu0 0.0
        %2055 = vmatpush2.msra.mxu0 0.0
        %2056 = vmatprep.subr.mxu0 0.0
        %2057 = vmatpush2.msra.mxu0 0.0
        %2058 = vmatprep.subr.mxu0 0.0
        %2059 = vmatpush2.msra.mxu0 0.0
        %2060 = vmatprep.subr.mxu0 0.0
        %2061 = vmatpush2.msra.mxu0 0.0
        %2062 = vmatprep.subr.mxu0 0.0
        %2063 = vmatpush2.msra.mxu0 0.0
        %2064 = vmatprep.subr.mxu0 0.0
        %2065 = vmatpush2.msra.mxu0 0.0
        %2066 = vmatprep.mubr.f32.mxu0 0.0
        %2067 = vmatmul.mubr.f32.gmra.mxu0 %v1997
        %v2068 = vpop.f32.mrf.mxu0
        %v2069 = vadd.f32 0.0, %v2068
        %v2070 = vpop.f32.mrf.mxu0
        %2071 = vmatprep.mubr.f32.mxu0 0.0
        %2072 = vmatmul.mubr.f32.gmra.mxu0 %v2000
        %v2073 = vpop.f32.mrf.mxu0
        %v2074 = vadd.f32 0.0, %v2073
        %v2075 = vpop.f32.mrf.mxu0
        %2076 = vdwg.mxu0
        %s2077 = scalar_lea.vmem [#allocation8], 128
        %v2078 = vld [vmem:[%s2077] sm:$0xff]
        %v2079 = vld [vmem:[%s2077 + $0x8] sm:$0xff]
        %v2080 = vld [vmem:[%s2077 + $0x10] sm:$0xff]
        %v2081 = vld [vmem:[%s2077 + $0x18] sm:$0xff]
        %v2082 = vld [vmem:[%s2077 + $0x20] sm:$0xff]
        %v2083 = vld [vmem:[%s2077 + $0x28] sm:$0xff]
        %v2084 = vld [vmem:[%s2077 + $0x30] sm:$0xff]
        %v2085 = vld [vmem:[%s2077 + $0x38] sm:$0xff]
        %2086 = vrot.lane.b32.xlu0 %v428, 112
        %v2087 = vpop.permute.xlu0 %2086
        %2088 = vrot.lane.b32.xlu0 %v433, 112
        %v2089 = vpop.permute.xlu0 %2088
        %2090 = vrot.lane.b32.xlu0 %v428, 80
        %v2091 = vpop.permute.xlu0 %2090
        %2092 = vrot.lane.b32.xlu0 %v433, 80
        %v2093 = vpop.permute.xlu0 %2092
        %v2094 = vsel %vm480, %v2087, 0
        %v2096 = vsel %vm480, %v2089, 0
        %v2098 = vsel %vm480, %v2091, 0
        %v2100 = vsel %vm480, %v2093, 0
        %2102 = vmatprep.subr.mxu0 0.0
        %2103 = vmatpush1.xpose.msra.mxu0 0.0
        %2104 = vmatprep.subr.mxu0 0.0
        %2105 = vmatpush1.xpose.msra.mxu0 0.0
        %2106 = vmatprep.subr.mxu0 0.0
        %2107 = vmatpush1.xpose.msra.mxu0 0.0
        %2108 = vmatprep.subr.mxu0 0.0
        %2109 = vmatpush1.xpose.msra.mxu0 0.0
        %2110 = vmatprep.subr.mxu0 0.0
        %2111 = vmatpush1.xpose.msra.mxu0 0.0
        %2112 = vmatprep.subr.mxu0 0.0
        %2113 = vmatpush1.xpose.msra.mxu0 0.0
        %2114 = vmatprep.subr.mxu0 0.0
        %2115 = vmatpush1.xpose.msra.mxu0 0.0
        %2116 = vmatprep.subr.mxu0 0.0
        %2117 = vmatpush1.xpose.msra.mxu0 0.0
        %2118 = vmatprep.subr.mxu0 0.0
        %2119 = vmatpush1.xpose.msra.mxu0 0.0
        %2120 = vmatprep.subr.mxu0 0.0
        %2121 = vmatpush1.xpose.msra.mxu0 0.0
        %2122 = vmatprep.subr.mxu0 0.0
        %2123 = vmatpush1.xpose.msra.mxu0 0.0
        %2124 = vmatprep.subr.mxu0 0.0
        %2125 = vmatpush1.xpose.msra.mxu0 0.0
        %2126 = vmatprep.subr.mxu0 0.0
        %2127 = vmatpush1.xpose.msra.mxu0 0.0
        %2128 = vmatprep.subr.mxu0 0.0
        %2129 = vmatpush1.xpose.msra.mxu0 0.0
        %2130 = vmatprep.subr.mxu0 0.0
        %2131 = vmatpush1.xpose.msra.mxu0 %v2100
        %2132 = vmatprep.subr.mxu0 0.0
        %2133 = vmatpush1.xpose.msra.mxu0 %v2098
        %2134 = vmatprep.subr.mxu0 0.0
        %2135 = vmatpush2.xpose.msra.mxu0 0.0
        %2136 = vmatprep.subr.mxu0 0.0
        %2137 = vmatpush2.xpose.msra.mxu0 0.0
        %2138 = vmatprep.subr.mxu0 0.0
        %2139 = vmatpush2.xpose.msra.mxu0 0.0
        %2140 = vmatprep.subr.mxu0 0.0
        %2141 = vmatpush2.xpose.msra.mxu0 0.0
        %2142 = vmatprep.subr.mxu0 0.0
        %2143 = vmatpush2.xpose.msra.mxu0 0.0
        %2144 = vmatprep.subr.mxu0 0.0
        %2145 = vmatpush2.xpose.msra.mxu0 0.0
        %2146 = vmatprep.subr.mxu0 0.0
        %2147 = vmatpush2.xpose.msra.mxu0 0.0
        %2148 = vmatprep.subr.mxu0 0.0
        %2149 = vmatpush2.xpose.msra.mxu0 0.0
        %2150 = vmatprep.subr.mxu0 0.0
        %2151 = vmatpush2.xpose.msra.mxu0 0.0
        %2152 = vmatprep.subr.mxu0 0.0
        %2153 = vmatpush2.xpose.msra.mxu0 0.0
        %2154 = vmatprep.subr.mxu0 0.0
        %2155 = vmatpush2.xpose.msra.mxu0 0.0
        %2156 = vmatprep.subr.mxu0 0.0
        %2157 = vmatpush2.xpose.msra.mxu0 0.0
        %2158 = vmatprep.subr.mxu0 0.0
        %2159 = vmatpush2.xpose.msra.mxu0 0.0
        %2160 = vmatprep.subr.mxu0 0.0
        %2161 = vmatpush2.xpose.msra.mxu0 0.0
        %2162 = vmatprep.subr.mxu0 0.0
        %2163 = vmatpush2.xpose.msra.mxu0 0.0
        %2164 = vmatprep.subr.mxu0 0.0
        %2165 = vmatpush2.xpose.msra.mxu0 0.0
        %2166 = vmatprep.mubr.f32.mxu0 0.0
        %2167 = vmatmul.mubr.f32.gmra.mxu0 %v2094
        %v2168 = vpop.f32.mrf.mxu0
        %v2169 = vadd.f32 %v2078, %v2168
        %v2170 = vpop.f32.mrf.mxu0
        %2171 = vmatprep.mubr.f32.mxu0 0.0
        %2172 = vmatmul.mubr.f32.gmra.mxu0 %v2096
        %v2173 = vpop.f32.mrf.mxu0
        %v2174 = vadd.f32 %v2079, %v2173
        %v2175 = vpop.f32.mrf.mxu0
        %2176 = vdwg.mxu0
        %2177 = vrot.lane.b32.xlu0 %v438, 112
        %v2178 = vpop.permute.xlu0 %2177
        %2179 = vrot.lane.b32.xlu0 %v443, 112
        %v2180 = vpop.permute.xlu0 %2179
        %2181 = vrot.lane.b32.xlu0 %v438, 80
        %v2182 = vpop.permute.xlu0 %2181
        %2183 = vrot.lane.b32.xlu0 %v443, 80
        %v2184 = vpop.permute.xlu0 %2183
        %v2185 = vsel %vm480, %v2178, 0
        %v2187 = vsel %vm480, %v2180, 0
        %v2189 = vsel %vm480, %v2182, 0
        %v2191 = vsel %vm480, %v2184, 0
        %2193 = vmatprep.subr.mxu0 0.0
        %2194 = vmatpush1.xpose.msra.mxu0 0.0
        %2195 = vmatprep.subr.mxu0 0.0
        %2196 = vmatpush1.xpose.msra.mxu0 0.0
        %2197 = vmatprep.subr.mxu0 0.0
        %2198 = vmatpush1.xpose.msra.mxu0 0.0
        %2199 = vmatprep.subr.mxu0 0.0
        %2200 = vmatpush1.xpose.msra.mxu0 0.0
        %2201 = vmatprep.subr.mxu0 0.0
        %2202 = vmatpush1.xpose.msra.mxu0 0.0
        %2203 = vmatprep.subr.mxu0 0.0
        %2204 = vmatpush1.xpose.msra.mxu0 0.0
        %2205 = vmatprep.subr.mxu0 0.0
        %2206 = vmatpush1.xpose.msra.mxu0 0.0
        %2207 = vmatprep.subr.mxu0 0.0
        %2208 = vmatpush1.xpose.msra.mxu0 0.0
        %2209 = vmatprep.subr.mxu0 0.0
        %2210 = vmatpush1.xpose.msra.mxu0 0.0
        %2211 = vmatprep.subr.mxu0 0.0
        %2212 = vmatpush1.xpose.msra.mxu0 0.0
        %2213 = vmatprep.subr.mxu0 0.0
        %2214 = vmatpush1.xpose.msra.mxu0 0.0
        %2215 = vmatprep.subr.mxu0 0.0
        %2216 = vmatpush1.xpose.msra.mxu0 0.0
        %2217 = vmatprep.subr.mxu0 0.0
        %2218 = vmatpush1.xpose.msra.mxu0 0.0
        %2219 = vmatprep.subr.mxu0 0.0
        %2220 = vmatpush1.xpose.msra.mxu0 0.0
        %2221 = vmatprep.subr.mxu0 0.0
        %2222 = vmatpush1.xpose.msra.mxu0 %v2191
        %2223 = vmatprep.subr.mxu0 0.0
        %2224 = vmatpush1.xpose.msra.mxu0 %v2189
        %2225 = vmatprep.subr.mxu0 0.0
        %2226 = vmatpush2.xpose.msra.mxu0 0.0
        %2227 = vmatprep.subr.mxu0 0.0
        %2228 = vmatpush2.xpose.msra.mxu0 0.0
        %2229 = vmatprep.subr.mxu0 0.0
        %2230 = vmatpush2.xpose.msra.mxu0 0.0
        %2231 = vmatprep.subr.mxu0 0.0
        %2232 = vmatpush2.xpose.msra.mxu0 0.0
        %2233 = vmatprep.subr.mxu0 0.0
        %2234 = vmatpush2.xpose.msra.mxu0 0.0
        %2235 = vmatprep.subr.mxu0 0.0
        %2236 = vmatpush2.xpose.msra.mxu0 0.0
        %2237 = vmatprep.subr.mxu0 0.0
        %2238 = vmatpush2.xpose.msra.mxu0 0.0
        %2239 = vmatprep.subr.mxu0 0.0
        %2240 = vmatpush2.xpose.msra.mxu0 0.0
        %2241 = vmatprep.subr.mxu0 0.0
        %2242 = vmatpush2.xpose.msra.mxu0 0.0
        %2243 = vmatprep.subr.mxu0 0.0
        %2244 = vmatpush2.xpose.msra.mxu0 0.0
        %2245 = vmatprep.subr.mxu0 0.0
        %2246 = vmatpush2.xpose.msra.mxu0 0.0
        %2247 = vmatprep.subr.mxu0 0.0
        %2248 = vmatpush2.xpose.msra.mxu0 0.0
        %2249 = vmatprep.subr.mxu0 0.0
        %2250 = vmatpush2.xpose.msra.mxu0 0.0
        %2251 = vmatprep.subr.mxu0 0.0
        %2252 = vmatpush2.xpose.msra.mxu0 0.0
        %2253 = vmatprep.subr.mxu0 0.0
        %2254 = vmatpush2.xpose.msra.mxu0 0.0
        %2255 = vmatprep.subr.mxu0 0.0
        %2256 = vmatpush2.xpose.msra.mxu0 0.0
        %2257 = vmatprep.mubr.f32.mxu0 0.0
        %2258 = vmatmul.mubr.f32.gmra.mxu0 %v2185
        %v2259 = vpop.f32.mrf.mxu0
        %v2260 = vadd.f32 %v2080, %v2259
        %v2261 = vpop.f32.mrf.mxu0
        %2262 = vmatprep.mubr.f32.mxu0 0.0
        %2263 = vmatmul.mubr.f32.gmra.mxu0 %v2187
        %v2264 = vpop.f32.mrf.mxu0
        %v2265 = vadd.f32 %v2081, %v2264
        %v2266 = vpop.f32.mrf.mxu0
        %2267 = vdwg.mxu0
        %2268 = vrot.lane.b32.xlu0 %v448, 112
        %v2269 = vpop.permute.xlu0 %2268
        %2270 = vrot.lane.b32.xlu0 %v453, 112
        %v2271 = vpop.permute.xlu0 %2270
        %2272 = vrot.lane.b32.xlu0 %v448, 80
        %v2273 = vpop.permute.xlu0 %2272
        %2274 = vrot.lane.b32.xlu0 %v453, 80
        %v2275 = vpop.permute.xlu0 %2274
        %v2276 = vsel %vm480, %v2269, 0
        %v2278 = vsel %vm480, %v2271, 0
        %v2280 = vsel %vm480, %v2273, 0
        %v2282 = vsel %vm480, %v2275, 0
        %2284 = vmatprep.subr.mxu0 0.0
        %2285 = vmatpush1.xpose.msra.mxu0 0.0
        %2286 = vmatprep.subr.mxu0 0.0
        %2287 = vmatpush1.xpose.msra.mxu0 0.0
        %2288 = vmatprep.subr.mxu0 0.0
        %2289 = vmatpush1.xpose.msra.mxu0 0.0
        %2290 = vmatprep.subr.mxu0 0.0
        %2291 = vmatpush1.xpose.msra.mxu0 0.0
        %2292 = vmatprep.subr.mxu0 0.0
        %2293 = vmatpush1.xpose.msra.mxu0 0.0
        %2294 = vmatprep.subr.mxu0 0.0
        %2295 = vmatpush1.xpose.msra.mxu0 0.0
        %2296 = vmatprep.subr.mxu0 0.0
        %2297 = vmatpush1.xpose.msra.mxu0 0.0
        %2298 = vmatprep.subr.mxu0 0.0
        %2299 = vmatpush1.xpose.msra.mxu0 0.0
        %2300 = vmatprep.subr.mxu0 0.0
        %2301 = vmatpush1.xpose.msra.mxu0 0.0
        %2302 = vmatprep.subr.mxu0 0.0
        %2303 = vmatpush1.xpose.msra.mxu0 0.0
        %2304 = vmatprep.subr.mxu0 0.0
        %2305 = vmatpush1.xpose.msra.mxu0 0.0
        %2306 = vmatprep.subr.mxu0 0.0
        %2307 = vmatpush1.xpose.msra.mxu0 0.0
        %2308 = vmatprep.subr.mxu0 0.0
        %2309 = vmatpush1.xpose.msra.mxu0 0.0
        %2310 = vmatprep.subr.mxu0 0.0
        %2311 = vmatpush1.xpose.msra.mxu0 0.0
        %2312 = vmatprep.subr.mxu0 0.0
        %2313 = vmatpush1.xpose.msra.mxu0 %v2282
        %2314 = vmatprep.subr.mxu0 0.0
        %2315 = vmatpush1.xpose.msra.mxu0 %v2280
        %2316 = vmatprep.subr.mxu0 0.0
        %2317 = vmatpush2.xpose.msra.mxu0 0.0
        %2318 = vmatprep.subr.mxu0 0.0
        %2319 = vmatpush2.xpose.msra.mxu0 0.0
        %2320 = vmatprep.subr.mxu0 0.0
        %2321 = vmatpush2.xpose.msra.mxu0 0.0
        %2322 = vmatprep.subr.mxu0 0.0
        %2323 = vmatpush2.xpose.msra.mxu0 0.0
        %2324 = vmatprep.subr.mxu0 0.0
        %2325 = vmatpush2.xpose.msra.mxu0 0.0
        %2326 = vmatprep.subr.mxu0 0.0
        %2327 = vmatpush2.xpose.msra.mxu0 0.0
        %2328 = vmatprep.subr.mxu0 0.0
        %2329 = vmatpush2.xpose.msra.mxu0 0.0
        %2330 = vmatprep.subr.mxu0 0.0
        %2331 = vmatpush2.xpose.msra.mxu0 0.0
        %2332 = vmatprep.subr.mxu0 0.0
        %2333 = vmatpush2.xpose.msra.mxu0 0.0
        %2334 = vmatprep.subr.mxu0 0.0
        %2335 = vmatpush2.xpose.msra.mxu0 0.0
        %2336 = vmatprep.subr.mxu0 0.0
        %2337 = vmatpush2.xpose.msra.mxu0 0.0
        %2338 = vmatprep.subr.mxu0 0.0
        %2339 = vmatpush2.xpose.msra.mxu0 0.0
        %2340 = vmatprep.subr.mxu0 0.0
        %2341 = vmatpush2.xpose.msra.mxu0 0.0
        %2342 = vmatprep.subr.mxu0 0.0
        %2343 = vmatpush2.xpose.msra.mxu0 0.0
        %2344 = vmatprep.subr.mxu0 0.0
        %2345 = vmatpush2.xpose.msra.mxu0 0.0
        %2346 = vmatprep.subr.mxu0 0.0
        %2347 = vmatpush2.xpose.msra.mxu0 0.0
        %2348 = vmatprep.mubr.f32.mxu0 0.0
        %2349 = vmatmul.mubr.f32.gmra.mxu0 %v2276
        %v2350 = vpop.f32.mrf.mxu0
        %v2351 = vadd.f32 %v2082, %v2350
        %v2352 = vpop.f32.mrf.mxu0
        %2353 = vmatprep.mubr.f32.mxu0 0.0
        %2354 = vmatmul.mubr.f32.gmra.mxu0 %v2278
        %v2355 = vpop.f32.mrf.mxu0
        %v2356 = vadd.f32 %v2083, %v2355
        %v2357 = vpop.f32.mrf.mxu0
        %2358 = vdwg.mxu0
        %2359 = vrot.lane.b32.xlu0 %v458, 112
        %v2360 = vpop.permute.xlu0 %2359
        %2361 = vrot.lane.b32.xlu0 %v463, 112
        %v2362 = vpop.permute.xlu0 %2361
        %2363 = vrot.lane.b32.xlu0 %v458, 80
        %v2364 = vpop.permute.xlu0 %2363
        %2365 = vrot.lane.b32.xlu0 %v463, 80
        %v2366 = vpop.permute.xlu0 %2365
        %v2367 = vsel %vm480, %v2360, 0
        %v2369 = vsel %vm480, %v2362, 0
        %v2371 = vsel %vm480, %v2364, 0
        %v2373 = vsel %vm480, %v2366, 0
        %2375 = vmatprep.subr.mxu0 0.0
        %2376 = vmatpush1.xpose.msra.mxu0 0.0
        %2377 = vmatprep.subr.mxu0 0.0
        %2378 = vmatpush1.xpose.msra.mxu0 0.0
        %2379 = vmatprep.subr.mxu0 0.0
        %2380 = vmatpush1.xpose.msra.mxu0 0.0
        %2381 = vmatprep.subr.mxu0 0.0
        %2382 = vmatpush1.xpose.msra.mxu0 0.0
        %2383 = vmatprep.subr.mxu0 0.0
        %2384 = vmatpush1.xpose.msra.mxu0 0.0
        %2385 = vmatprep.subr.mxu0 0.0
        %2386 = vmatpush1.xpose.msra.mxu0 0.0
        %2387 = vmatprep.subr.mxu0 0.0
        %2388 = vmatpush1.xpose.msra.mxu0 0.0
        %2389 = vmatprep.subr.mxu0 0.0
        %2390 = vmatpush1.xpose.msra.mxu0 0.0
        %2391 = vmatprep.subr.mxu0 0.0
        %2392 = vmatpush1.xpose.msra.mxu0 0.0
        %2393 = vmatprep.subr.mxu0 0.0
        %2394 = vmatpush1.xpose.msra.mxu0 0.0
        %2395 = vmatprep.subr.mxu0 0.0
        %2396 = vmatpush1.xpose.msra.mxu0 0.0
        %2397 = vmatprep.subr.mxu0 0.0
        %2398 = vmatpush1.xpose.msra.mxu0 0.0
        %2399 = vmatprep.subr.mxu0 0.0
        %2400 = vmatpush1.xpose.msra.mxu0 0.0
        %2401 = vmatprep.subr.mxu0 0.0
        %2402 = vmatpush1.xpose.msra.mxu0 0.0
        %2403 = vmatprep.subr.mxu0 0.0
        %2404 = vmatpush1.xpose.msra.mxu0 %v2373
        %2405 = vmatprep.subr.mxu0 0.0
        %2406 = vmatpush1.xpose.msra.mxu0 %v2371
        %2407 = vmatprep.subr.mxu0 0.0
        %2408 = vmatpush2.xpose.msra.mxu0 0.0
        %2409 = vmatprep.subr.mxu0 0.0
        %2410 = vmatpush2.xpose.msra.mxu0 0.0
        %2411 = vmatprep.subr.mxu0 0.0
        %2412 = vmatpush2.xpose.msra.mxu0 0.0
        %2413 = vmatprep.subr.mxu0 0.0
        %2414 = vmatpush2.xpose.msra.mxu0 0.0
        %2415 = vmatprep.subr.mxu0 0.0
        %2416 = vmatpush2.xpose.msra.mxu0 0.0
        %2417 = vmatprep.subr.mxu0 0.0
        %2418 = vmatpush2.xpose.msra.mxu0 0.0
        %2419 = vmatprep.subr.mxu0 0.0
        %2420 = vmatpush2.xpose.msra.mxu0 0.0
        %2421 = vmatprep.subr.mxu0 0.0
        %2422 = vmatpush2.xpose.msra.mxu0 0.0
        %2423 = vmatprep.subr.mxu0 0.0
        %2424 = vmatpush2.xpose.msra.mxu0 0.0
        %2425 = vmatprep.subr.mxu0 0.0
        %2426 = vmatpush2.xpose.msra.mxu0 0.0
        %2427 = vmatprep.subr.mxu0 0.0
        %2428 = vmatpush2.xpose.msra.mxu0 0.0
        %2429 = vmatprep.subr.mxu0 0.0
        %2430 = vmatpush2.xpose.msra.mxu0 0.0
        %2431 = vmatprep.subr.mxu0 0.0
        %2432 = vmatpush2.xpose.msra.mxu0 0.0
        %2433 = vmatprep.subr.mxu0 0.0
        %2434 = vmatpush2.xpose.msra.mxu0 0.0
        %2435 = vmatprep.subr.mxu0 0.0
        %2436 = vmatpush2.xpose.msra.mxu0 0.0
        %2437 = vmatprep.subr.mxu0 0.0
        %2438 = vmatpush2.xpose.msra.mxu0 0.0
        %2439 = vmatprep.mubr.f32.mxu0 0.0
        %2440 = vmatmul.mubr.f32.gmra.mxu0 %v2367
        %v2441 = vpop.f32.mrf.mxu0
        %v2442 = vadd.f32 %v2084, %v2441
        %v2443 = vpop.f32.mrf.mxu0
        %2444 = vmatprep.mubr.f32.mxu0 0.0
        %2445 = vmatmul.mubr.f32.gmra.mxu0 %v2369
        %v2446 = vpop.f32.mrf.mxu0
        %v2447 = vadd.f32 %v2085, %v2446
        %v2448 = vpop.f32.mrf.mxu0
        %2449 = vdwg.mxu0
        %v2450 = vsel %vm831, %v2169, -inf
        %2451 = vmax.xlane.f32.xlu0 %v2450
        %v2452 = vpop.xlane.xlu0 %2451
        %v2453 = vsel %vm831, %v2174, -inf
        %2454 = vmax.xlane.f32.xlu0 %v2453
        %v2455 = vpop.xlane.xlu0 %2454
        %v2456 = vsel %vm831, %v2260, -inf
        %2457 = vmax.xlane.f32.xlu0 %v2456
        %v2458 = vpop.xlane.xlu0 %2457
        %v2459 = vsel %vm831, %v2265, -inf
        %2460 = vmax.xlane.f32.xlu0 %v2459
        %v2461 = vpop.xlane.xlu0 %2460
        %v2462 = vsel %vm831, %v2351, -inf
        %2463 = vmax.xlane.f32.xlu0 %v2462
        %v2464 = vpop.xlane.xlu0 %2463
        %v2465 = vsel %vm831, %v2356, -inf
        %2466 = vmax.xlane.f32.xlu0 %v2465
        %v2467 = vpop.xlane.xlu0 %2466
        %v2468 = vsel %vm831, %v2442, -inf
        %2469 = vmax.xlane.f32.xlu0 %v2468
        %v2470 = vpop.xlane.xlu0 %2469
        %v2471 = vsel %vm831, %v2447, -inf
        %2472 = vmax.xlane.f32.xlu0 %v2471
        %v2473 = vpop.xlane.xlu0 %2472
        %v2474 = vsub.f32 %v2169, %v2452
        %v2475 = vsub.f32 %v2174, %v2455
        %v2476 = vsub.f32 %v2260, %v2458
        %v2477 = vsub.f32 %v2265, %v2461
        %v2478 = vsub.f32 %v2351, %v2464
        %v2479 = vsub.f32 %v2356, %v2467
        %v2480 = vsub.f32 %v2442, %v2470
        %v2481 = vsub.f32 %v2447, %v2473
        %v2482 = vmul.f32 %v2474, 1.442695
        %v2483 = vpow.pop %v2482
        %v2484 = vmul.f32 %v2475, 1.442695
        %v2485 = vpow.pop %v2484
        %v2486 = vmul.f32 %v2476, 1.442695
        %v2487 = vpow.pop %v2486
        %v2488 = vmul.f32 %v2477, 1.442695
        %v2489 = vpow.pop %v2488
        %v2490 = vmul.f32 %v2478, 1.442695
        %v2491 = vpow.pop %v2490
        %v2492 = vmul.f32 %v2479, 1.442695
        %v2493 = vpow.pop %v2492
        %v2494 = vmul.f32 %v2480, 1.442695
        %v2495 = vpow.pop %v2494
        %v2496 = vmul.f32 %v2481, 1.442695
        %v2497 = vpow.pop %v2496
        %v2498 = vsel %vm831, %v2483, 0.0
        %2499 = vadd.xlane.f32.xlu0 %v2498
        %v2500 = vpop.xlane.xlu0 %2499
        %v2501 = vsel %vm831, %v2485, 0.0
        %2502 = vadd.xlane.f32.xlu0 %v2501
        %v2503 = vpop.xlane.xlu0 %2502
        %v2504 = vsel %vm831, %v2487, 0.0
        %2505 = vadd.xlane.f32.xlu0 %v2504
        %v2506 = vpop.xlane.xlu0 %2505
        %v2507 = vsel %vm831, %v2489, 0.0
        %2508 = vadd.xlane.f32.xlu0 %v2507
        %v2509 = vpop.xlane.xlu0 %2508
        %v2510 = vsel %vm831, %v2491, 0.0
        %2511 = vadd.xlane.f32.xlu0 %v2510
        %v2512 = vpop.xlane.xlu0 %2511
        %v2513 = vsel %vm831, %v2493, 0.0
        %2514 = vadd.xlane.f32.xlu0 %v2513
        %v2515 = vpop.xlane.xlu0 %2514
        %v2516 = vsel %vm831, %v2495, 0.0
        %2517 = vadd.xlane.f32.xlu0 %v2516
        %v2518 = vpop.xlane.xlu0 %2517
        %v2519 = vsel %vm831, %v2497, 0.0
        %2520 = vadd.xlane.f32.xlu0 %v2519
        %v2521 = vpop.xlane.xlu0 %2520
        %v2522 = vrcp.pop %v2500
        %v2523 = vrcp.pop %v2503
        %v2524 = vrcp.pop %v2506
        %v2525 = vrcp.pop %v2509
        %v2526 = vrcp.pop %v2512
        %v2527 = vrcp.pop %v2515
        %v2528 = vrcp.pop %v2518
        %v2529 = vrcp.pop %v2521
        %v2530 = vmul.f32 %v2483, %v2522
        %v2531 = vmul.f32 %v2485, %v2523
        %v2532 = vmul.f32 %v2487, %v2524
        %v2533 = vmul.f32 %v2489, %v2525
        %v2534 = vmul.f32 %v2491, %v2526
        %v2535 = vmul.f32 %v2493, %v2527
        %v2536 = vmul.f32 %v2495, %v2528
        %v2537 = vmul.f32 %v2497, %v2529
        %2538 = vrot.lane.b32.xlu0 %v428, 48
        %v2539 = vpop.permute.xlu0 %2538
        %2540 = vrot.lane.b32.xlu0 %v433, 48
        %v2541 = vpop.permute.xlu0 %2540
        %v2545 = vsel %vm831, %v2530, 0
        %v2548 = vsel %vm831, %v2531, 0
        %2550 = vmatprep.subr.mxu0 0.0
        %2551 = vmatpush1.msra.mxu0 0.0
        %2552 = vmatprep.subr.mxu0 0.0
        %2553 = vmatpush1.msra.mxu0 0.0
        %2554 = vmatprep.subr.mxu0 0.0
        %2555 = vmatpush1.msra.mxu0 0.0
        %2556 = vmatprep.subr.mxu0 0.0
        %2557 = vmatpush1.msra.mxu0 0.0
        %2558 = vmatprep.subr.mxu0 0.0
        %2559 = vmatpush1.msra.mxu0 0.0
        %2560 = vmatprep.subr.mxu0 0.0
        %2561 = vmatpush1.msra.mxu0 0.0
        %2562 = vmatprep.subr.mxu0 0.0
        %2563 = vmatpush1.msra.mxu0 0.0
        %2564 = vmatprep.subr.mxu0 0.0
        %2565 = vmatpush1.msra.mxu0 0.0
        %2566 = vmatprep.subr.mxu0 0.0
        %2567 = vmatpush1.msra.mxu0 0.0
        %2568 = vmatprep.subr.mxu0 0.0
        %2569 = vmatpush1.msra.mxu0 0.0
        %2570 = vmatprep.subr.mxu0 0.0
        %2571 = vmatpush1.msra.mxu0 0.0
        %2572 = vmatprep.subr.mxu0 0.0
        %2573 = vmatpush1.msra.mxu0 0.0
        %2574 = vmatprep.subr.mxu0 0.0
        %2575 = vmatpush1.msra.mxu0 0.0
        %2576 = vmatprep.subr.mxu0 0.0
        %2577 = vmatpush1.msra.mxu0 0.0
        %2578 = vmatprep.subr.mxu0 0.0
        %2579 = vmatpush1.msra.mxu0 %v2541
        %2580 = vmatprep.subr.mxu0 0.0
        %2581 = vmatpush1.msra.mxu0 %v2539
        %2582 = vmatprep.subr.mxu0 0.0
        %2583 = vmatpush2.msra.mxu0 0.0
        %2584 = vmatprep.subr.mxu0 0.0
        %2585 = vmatpush2.msra.mxu0 0.0
        %2586 = vmatprep.subr.mxu0 0.0
        %2587 = vmatpush2.msra.mxu0 0.0
        %2588 = vmatprep.subr.mxu0 0.0
        %2589 = vmatpush2.msra.mxu0 0.0
        %2590 = vmatprep.subr.mxu0 0.0
        %2591 = vmatpush2.msra.mxu0 0.0
        %2592 = vmatprep.subr.mxu0 0.0
        %2593 = vmatpush2.msra.mxu0 0.0
        %2594 = vmatprep.subr.mxu0 0.0
        %2595 = vmatpush2.msra.mxu0 0.0
        %2596 = vmatprep.subr.mxu0 0.0
        %2597 = vmatpush2.msra.mxu0 0.0
        %2598 = vmatprep.subr.mxu0 0.0
        %2599 = vmatpush2.msra.mxu0 0.0
        %2600 = vmatprep.subr.mxu0 0.0
        %2601 = vmatpush2.msra.mxu0 0.0
        %2602 = vmatprep.subr.mxu0 0.0
        %2603 = vmatpush2.msra.mxu0 0.0
        %2604 = vmatprep.subr.mxu0 0.0
        %2605 = vmatpush2.msra.mxu0 0.0
        %2606 = vmatprep.subr.mxu0 0.0
        %2607 = vmatpush2.msra.mxu0 0.0
        %2608 = vmatprep.subr.mxu0 0.0
        %2609 = vmatpush2.msra.mxu0 0.0
        %2610 = vmatprep.subr.mxu0 0.0
        %2611 = vmatpush2.msra.mxu0 0.0
        %2612 = vmatprep.subr.mxu0 0.0
        %2613 = vmatpush2.msra.mxu0 0.0
        %2614 = vmatprep.mubr.f32.mxu0 0.0
        %2615 = vmatmul.mubr.f32.gmra.mxu0 %v2545
        %v2616 = vpop.f32.mrf.mxu0
        %v2617 = vadd.f32 0.0, %v2616
        %v2618 = vpop.f32.mrf.mxu0
        %2619 = vmatprep.mubr.f32.mxu0 0.0
        %2620 = vmatmul.mubr.f32.gmra.mxu0 %v2548
        %v2621 = vpop.f32.mrf.mxu0
        %v2622 = vadd.f32 0.0, %v2621
        %v2623 = vpop.f32.mrf.mxu0
        %2624 = vdwg.mxu0
        %2625 = vrot.lane.b32.xlu0 %v438, 48
        %v2626 = vpop.permute.xlu0 %2625
        %2627 = vrot.lane.b32.xlu0 %v443, 48
        %v2628 = vpop.permute.xlu0 %2627
        %v2632 = vsel %vm831, %v2532, 0
        %v2635 = vsel %vm831, %v2533, 0
        %2637 = vmatprep.subr.mxu0 0.0
        %2638 = vmatpush1.msra.mxu0 0.0
        %2639 = vmatprep.subr.mxu0 0.0
        %2640 = vmatpush1.msra.mxu0 0.0
        %2641 = vmatprep.subr.mxu0 0.0
        %2642 = vmatpush1.msra.mxu0 0.0
        %2643 = vmatprep.subr.mxu0 0.0
        %2644 = vmatpush1.msra.mxu0 0.0
        %2645 = vmatprep.subr.mxu0 0.0
        %2646 = vmatpush1.msra.mxu0 0.0
        %2647 = vmatprep.subr.mxu0 0.0
        %2648 = vmatpush1.msra.mxu0 0.0
        %2649 = vmatprep.subr.mxu0 0.0
        %2650 = vmatpush1.msra.mxu0 0.0
        %2651 = vmatprep.subr.mxu0 0.0
        %2652 = vmatpush1.msra.mxu0 0.0
        %2653 = vmatprep.subr.mxu0 0.0
        %2654 = vmatpush1.msra.mxu0 0.0
        %2655 = vmatprep.subr.mxu0 0.0
        %2656 = vmatpush1.msra.mxu0 0.0
        %2657 = vmatprep.subr.mxu0 0.0
        %2658 = vmatpush1.msra.mxu0 0.0
        %2659 = vmatprep.subr.mxu0 0.0
        %2660 = vmatpush1.msra.mxu0 0.0
        %2661 = vmatprep.subr.mxu0 0.0
        %2662 = vmatpush1.msra.mxu0 0.0
        %2663 = vmatprep.subr.mxu0 0.0
        %2664 = vmatpush1.msra.mxu0 0.0
        %2665 = vmatprep.subr.mxu0 0.0
        %2666 = vmatpush1.msra.mxu0 %v2628
        %2667 = vmatprep.subr.mxu0 0.0
        %2668 = vmatpush1.msra.mxu0 %v2626
        %2669 = vmatprep.subr.mxu0 0.0
        %2670 = vmatpush2.msra.mxu0 0.0
        %2671 = vmatprep.subr.mxu0 0.0
        %2672 = vmatpush2.msra.mxu0 0.0
        %2673 = vmatprep.subr.mxu0 0.0
        %2674 = vmatpush2.msra.mxu0 0.0
        %2675 = vmatprep.subr.mxu0 0.0
        %2676 = vmatpush2.msra.mxu0 0.0
        %2677 = vmatprep.subr.mxu0 0.0
        %2678 = vmatpush2.msra.mxu0 0.0
        %2679 = vmatprep.subr.mxu0 0.0
        %2680 = vmatpush2.msra.mxu0 0.0
        %2681 = vmatprep.subr.mxu0 0.0
        %2682 = vmatpush2.msra.mxu0 0.0
        %2683 = vmatprep.subr.mxu0 0.0
        %2684 = vmatpush2.msra.mxu0 0.0
        %2685 = vmatprep.subr.mxu0 0.0
        %2686 = vmatpush2.msra.mxu0 0.0
        %2687 = vmatprep.subr.mxu0 0.0
        %2688 = vmatpush2.msra.mxu0 0.0
        %2689 = vmatprep.subr.mxu0 0.0
        %2690 = vmatpush2.msra.mxu0 0.0
        %2691 = vmatprep.subr.mxu0 0.0
        %2692 = vmatpush2.msra.mxu0 0.0
        %2693 = vmatprep.subr.mxu0 0.0
        %2694 = vmatpush2.msra.mxu0 0.0
        %2695 = vmatprep.subr.mxu0 0.0
        %2696 = vmatpush2.msra.mxu0 0.0
        %2697 = vmatprep.subr.mxu0 0.0
        %2698 = vmatpush2.msra.mxu0 0.0
        %2699 = vmatprep.subr.mxu0 0.0
        %2700 = vmatpush2.msra.mxu0 0.0
        %2701 = vmatprep.mubr.f32.mxu0 0.0
        %2702 = vmatmul.mubr.f32.gmra.mxu0 %v2632
        %v2703 = vpop.f32.mrf.mxu0
        %v2704 = vadd.f32 0.0, %v2703
        %v2705 = vpop.f32.mrf.mxu0
        %2706 = vmatprep.mubr.f32.mxu0 0.0
        %2707 = vmatmul.mubr.f32.gmra.mxu0 %v2635
        %v2708 = vpop.f32.mrf.mxu0
        %v2709 = vadd.f32 0.0, %v2708
        %v2710 = vpop.f32.mrf.mxu0
        %2711 = vdwg.mxu0
        %2712 = vrot.lane.b32.xlu0 %v448, 48
        %v2713 = vpop.permute.xlu0 %2712
        %2714 = vrot.lane.b32.xlu0 %v453, 48
        %v2715 = vpop.permute.xlu0 %2714
        %v2719 = vsel %vm831, %v2534, 0
        %v2722 = vsel %vm831, %v2535, 0
        %2724 = vmatprep.subr.mxu0 0.0
        %2725 = vmatpush1.msra.mxu0 0.0
        %2726 = vmatprep.subr.mxu0 0.0
        %2727 = vmatpush1.msra.mxu0 0.0
        %2728 = vmatprep.subr.mxu0 0.0
        %2729 = vmatpush1.msra.mxu0 0.0
        %2730 = vmatprep.subr.mxu0 0.0
        %2731 = vmatpush1.msra.mxu0 0.0
        %2732 = vmatprep.subr.mxu0 0.0
        %2733 = vmatpush1.msra.mxu0 0.0
        %2734 = vmatprep.subr.mxu0 0.0
        %2735 = vmatpush1.msra.mxu0 0.0
        %2736 = vmatprep.subr.mxu0 0.0
        %2737 = vmatpush1.msra.mxu0 0.0
        %2738 = vmatprep.subr.mxu0 0.0
        %2739 = vmatpush1.msra.mxu0 0.0
        %2740 = vmatprep.subr.mxu0 0.0
        %2741 = vmatpush1.msra.mxu0 0.0
        %2742 = vmatprep.subr.mxu0 0.0
        %2743 = vmatpush1.msra.mxu0 0.0
        %2744 = vmatprep.subr.mxu0 0.0
        %2745 = vmatpush1.msra.mxu0 0.0
        %2746 = vmatprep.subr.mxu0 0.0
        %2747 = vmatpush1.msra.mxu0 0.0
        %2748 = vmatprep.subr.mxu0 0.0
        %2749 = vmatpush1.msra.mxu0 0.0
        %2750 = vmatprep.subr.mxu0 0.0
        %2751 = vmatpush1.msra.mxu0 0.0
        %2752 = vmatprep.subr.mxu0 0.0
        %2753 = vmatpush1.msra.mxu0 %v2715
        %2754 = vmatprep.subr.mxu0 0.0
        %2755 = vmatpush1.msra.mxu0 %v2713
        %2756 = vmatprep.subr.mxu0 0.0
        %2757 = vmatpush2.msra.mxu0 0.0
        %2758 = vmatprep.subr.mxu0 0.0
        %2759 = vmatpush2.msra.mxu0 0.0
        %2760 = vmatprep.subr.mxu0 0.0
        %2761 = vmatpush2.msra.mxu0 0.0
        %2762 = vmatprep.subr.mxu0 0.0
        %2763 = vmatpush2.msra.mxu0 0.0
        %2764 = vmatprep.subr.mxu0 0.0
        %2765 = vmatpush2.msra.mxu0 0.0
        %2766 = vmatprep.subr.mxu0 0.0
        %2767 = vmatpush2.msra.mxu0 0.0
        %2768 = vmatprep.subr.mxu0 0.0
        %2769 = vmatpush2.msra.mxu0 0.0
        %2770 = vmatprep.subr.mxu0 0.0
        %2771 = vmatpush2.msra.mxu0 0.0
        %2772 = vmatprep.subr.mxu0 0.0
        %2773 = vmatpush2.msra.mxu0 0.0
        %2774 = vmatprep.subr.mxu0 0.0
        %2775 = vmatpush2.msra.mxu0 0.0
        %2776 = vmatprep.subr.mxu0 0.0
        %2777 = vmatpush2.msra.mxu0 0.0
        %2778 = vmatprep.subr.mxu0 0.0
        %2779 = vmatpush2.msra.mxu0 0.0
        %2780 = vmatprep.subr.mxu0 0.0
        %2781 = vmatpush2.msra.mxu0 0.0
        %2782 = vmatprep.subr.mxu0 0.0
        %2783 = vmatpush2.msra.mxu0 0.0
        %2784 = vmatprep.subr.mxu0 0.0
        %2785 = vmatpush2.msra.mxu0 0.0
        %2786 = vmatprep.subr.mxu0 0.0
        %2787 = vmatpush2.msra.mxu0 0.0
        %2788 = vmatprep.mubr.f32.mxu0 0.0
        %2789 = vmatmul.mubr.f32.gmra.mxu0 %v2719
        %v2790 = vpop.f32.mrf.mxu0
        %v2791 = vadd.f32 0.0, %v2790
        %v2792 = vpop.f32.mrf.mxu0
        %2793 = vmatprep.mubr.f32.mxu0 0.0
        %2794 = vmatmul.mubr.f32.gmra.mxu0 %v2722
        %v2795 = vpop.f32.mrf.mxu0
        %v2796 = vadd.f32 0.0, %v2795
        %v2797 = vpop.f32.mrf.mxu0
        %2798 = vdwg.mxu0
        %2799 = vrot.lane.b32.xlu0 %v458, 48
        %v2800 = vpop.permute.xlu0 %2799
        %2801 = vrot.lane.b32.xlu0 %v463, 48
        %v2802 = vpop.permute.xlu0 %2801
        %v2806 = vsel %vm831, %v2536, 0
        %v2809 = vsel %vm831, %v2537, 0
        %2811 = vmatprep.subr.mxu0 0.0
        %2812 = vmatpush1.msra.mxu0 0.0
        %2813 = vmatprep.subr.mxu0 0.0
        %2814 = vmatpush1.msra.mxu0 0.0
        %2815 = vmatprep.subr.mxu0 0.0
        %2816 = vmatpush1.msra.mxu0 0.0
        %2817 = vmatprep.subr.mxu0 0.0
        %2818 = vmatpush1.msra.mxu0 0.0
        %2819 = vmatprep.subr.mxu0 0.0
        %2820 = vmatpush1.msra.mxu0 0.0
        %2821 = vmatprep.subr.mxu0 0.0
        %2822 = vmatpush1.msra.mxu0 0.0
        %2823 = vmatprep.subr.mxu0 0.0
        %2824 = vmatpush1.msra.mxu0 0.0
        %2825 = vmatprep.subr.mxu0 0.0
        %2826 = vmatpush1.msra.mxu0 0.0
        %2827 = vmatprep.subr.mxu0 0.0
        %2828 = vmatpush1.msra.mxu0 0.0
        %2829 = vmatprep.subr.mxu0 0.0
        %2830 = vmatpush1.msra.mxu0 0.0
        %2831 = vmatprep.subr.mxu0 0.0
        %2832 = vmatpush1.msra.mxu0 0.0
        %2833 = vmatprep.subr.mxu0 0.0
        %2834 = vmatpush1.msra.mxu0 0.0
        %2835 = vmatprep.subr.mxu0 0.0
        %2836 = vmatpush1.msra.mxu0 0.0
        %2837 = vmatprep.subr.mxu0 0.0
        %2838 = vmatpush1.msra.mxu0 0.0
        %2839 = vmatprep.subr.mxu0 0.0
        %2840 = vmatpush1.msra.mxu0 %v2802
        %2841 = vmatprep.subr.mxu0 0.0
        %2842 = vmatpush1.msra.mxu0 %v2800
        %2843 = vmatprep.subr.mxu0 0.0
        %2844 = vmatpush2.msra.mxu0 0.0
        %2845 = vmatprep.subr.mxu0 0.0
        %2846 = vmatpush2.msra.mxu0 0.0
        %2847 = vmatprep.subr.mxu0 0.0
        %2848 = vmatpush2.msra.mxu0 0.0
        %2849 = vmatprep.subr.mxu0 0.0
        %2850 = vmatpush2.msra.mxu0 0.0
        %2851 = vmatprep.subr.mxu0 0.0
        %2852 = vmatpush2.msra.mxu0 0.0
        %2853 = vmatprep.subr.mxu0 0.0
        %2854 = vmatpush2.msra.mxu0 0.0
        %2855 = vmatprep.subr.mxu0 0.0
        %2856 = vmatpush2.msra.mxu0 0.0
        %2857 = vmatprep.subr.mxu0 0.0
        %2858 = vmatpush2.msra.mxu0 0.0
        %2859 = vmatprep.subr.mxu0 0.0
        %2860 = vmatpush2.msra.mxu0 0.0
        %2861 = vmatprep.subr.mxu0 0.0
        %2862 = vmatpush2.msra.mxu0 0.0
        %2863 = vmatprep.subr.mxu0 0.0
        %2864 = vmatpush2.msra.mxu0 0.0
        %2865 = vmatprep.subr.mxu0 0.0
        %2866 = vmatpush2.msra.mxu0 0.0
        %2867 = vmatprep.subr.mxu0 0.0
        %2868 = vmatpush2.msra.mxu0 0.0
        %2869 = vmatprep.subr.mxu0 0.0
        %2870 = vmatpush2.msra.mxu0 0.0
        %2871 = vmatprep.subr.mxu0 0.0
        %2872 = vmatpush2.msra.mxu0 0.0
        %2873 = vmatprep.subr.mxu0 0.0
        %2874 = vmatpush2.msra.mxu0 0.0
        %2875 = vmatprep.mubr.f32.mxu0 0.0
        %2876 = vmatmul.mubr.f32.gmra.mxu0 %v2806
        %v2877 = vpop.f32.mrf.mxu0
        %v2878 = vadd.f32 0.0, %v2877
        %v2879 = vpop.f32.mrf.mxu0
        %2880 = vmatprep.mubr.f32.mxu0 0.0
        %2881 = vmatmul.mubr.f32.gmra.mxu0 %v2809
        %v2882 = vpop.f32.mrf.mxu0
        %v2883 = vadd.f32 0.0, %v2882
        %v2884 = vpop.f32.mrf.mxu0
        %2885 = vdwg.mxu0
        %s2886 = scalar_lea.vmem [#allocation8], 192
        %v2887 = vld [vmem:[%s2886] sm:$0xff]
        %v2888 = vld [vmem:[%s2886 + $0x8] sm:$0xff]
        %v2889 = vld [vmem:[%s2886 + $0x10] sm:$0xff]
        %v2890 = vld [vmem:[%s2886 + $0x18] sm:$0xff]
        %v2891 = vld [vmem:[%s2886 + $0x20] sm:$0xff]
        %v2892 = vld [vmem:[%s2886 + $0x28] sm:$0xff]
        %v2893 = vld [vmem:[%s2886 + $0x30] sm:$0xff]
        %v2894 = vld [vmem:[%s2886 + $0x38] sm:$0xff]
        %2895 = vrot.lane.b32.xlu0 %v428, 104
        %v2896 = vpop.permute.xlu0 %2895
        %2897 = vrot.lane.b32.xlu0 %v433, 104
        %v2898 = vpop.permute.xlu0 %2897
        %2899 = vrot.lane.b32.xlu0 %v428, 72
        %v2900 = vpop.permute.xlu0 %2899
        %2901 = vrot.lane.b32.xlu0 %v433, 72
        %v2902 = vpop.permute.xlu0 %2901
        %v2903 = vsel %vm480, %v2896, 0
        %v2905 = vsel %vm480, %v2898, 0
        %v2907 = vsel %vm480, %v2900, 0
        %v2909 = vsel %vm480, %v2902, 0
        %2911 = vmatprep.subr.mxu0 0.0
        %2912 = vmatpush1.xpose.msra.mxu0 0.0
        %2913 = vmatprep.subr.mxu0 0.0
        %2914 = vmatpush1.xpose.msra.mxu0 0.0
        %2915 = vmatprep.subr.mxu0 0.0
        %2916 = vmatpush1.xpose.msra.mxu0 0.0
        %2917 = vmatprep.subr.mxu0 0.0
        %2918 = vmatpush1.xpose.msra.mxu0 0.0
        %2919 = vmatprep.subr.mxu0 0.0
        %2920 = vmatpush1.xpose.msra.mxu0 0.0
        %2921 = vmatprep.subr.mxu0 0.0
        %2922 = vmatpush1.xpose.msra.mxu0 0.0
        %2923 = vmatprep.subr.mxu0 0.0
        %2924 = vmatpush1.xpose.msra.mxu0 0.0
        %2925 = vmatprep.subr.mxu0 0.0
        %2926 = vmatpush1.xpose.msra.mxu0 0.0
        %2927 = vmatprep.subr.mxu0 0.0
        %2928 = vmatpush1.xpose.msra.mxu0 0.0
        %2929 = vmatprep.subr.mxu0 0.0
        %2930 = vmatpush1.xpose.msra.mxu0 0.0
        %2931 = vmatprep.subr.mxu0 0.0
        %2932 = vmatpush1.xpose.msra.mxu0 0.0
        %2933 = vmatprep.subr.mxu0 0.0
        %2934 = vmatpush1.xpose.msra.mxu0 0.0
        %2935 = vmatprep.subr.mxu0 0.0
        %2936 = vmatpush1.xpose.msra.mxu0 0.0
        %2937 = vmatprep.subr.mxu0 0.0
        %2938 = vmatpush1.xpose.msra.mxu0 0.0
        %2939 = vmatprep.subr.mxu0 0.0
        %2940 = vmatpush1.xpose.msra.mxu0 %v2909
        %2941 = vmatprep.subr.mxu0 0.0
        %2942 = vmatpush1.xpose.msra.mxu0 %v2907
        %2943 = vmatprep.subr.mxu0 0.0
        %2944 = vmatpush2.xpose.msra.mxu0 0.0
        %2945 = vmatprep.subr.mxu0 0.0
        %2946 = vmatpush2.xpose.msra.mxu0 0.0
        %2947 = vmatprep.subr.mxu0 0.0
        %2948 = vmatpush2.xpose.msra.mxu0 0.0
        %2949 = vmatprep.subr.mxu0 0.0
        %2950 = vmatpush2.xpose.msra.mxu0 0.0
        %2951 = vmatprep.subr.mxu0 0.0
        %2952 = vmatpush2.xpose.msra.mxu0 0.0
        %2953 = vmatprep.subr.mxu0 0.0
        %2954 = vmatpush2.xpose.msra.mxu0 0.0
        %2955 = vmatprep.subr.mxu0 0.0
        %2956 = vmatpush2.xpose.msra.mxu0 0.0
        %2957 = vmatprep.subr.mxu0 0.0
        %2958 = vmatpush2.xpose.msra.mxu0 0.0
        %2959 = vmatprep.subr.mxu0 0.0
        %2960 = vmatpush2.xpose.msra.mxu0 0.0
        %2961 = vmatprep.subr.mxu0 0.0
        %2962 = vmatpush2.xpose.msra.mxu0 0.0
        %2963 = vmatprep.subr.mxu0 0.0
        %2964 = vmatpush2.xpose.msra.mxu0 0.0
        %2965 = vmatprep.subr.mxu0 0.0
        %2966 = vmatpush2.xpose.msra.mxu0 0.0
        %2967 = vmatprep.subr.mxu0 0.0
        %2968 = vmatpush2.xpose.msra.mxu0 0.0
        %2969 = vmatprep.subr.mxu0 0.0
        %2970 = vmatpush2.xpose.msra.mxu0 0.0
        %2971 = vmatprep.subr.mxu0 0.0
        %2972 = vmatpush2.xpose.msra.mxu0 0.0
        %2973 = vmatprep.subr.mxu0 0.0
        %2974 = vmatpush2.xpose.msra.mxu0 0.0
        %2975 = vmatprep.mubr.f32.mxu0 0.0
        %2976 = vmatmul.mubr.f32.gmra.mxu0 %v2903
        %v2977 = vpop.f32.mrf.mxu0
        %v2978 = vadd.f32 %v2887, %v2977
        %v2979 = vpop.f32.mrf.mxu0
        %2980 = vmatprep.mubr.f32.mxu0 0.0
        %2981 = vmatmul.mubr.f32.gmra.mxu0 %v2905
        %v2982 = vpop.f32.mrf.mxu0
        %v2983 = vadd.f32 %v2888, %v2982
        %v2984 = vpop.f32.mrf.mxu0
        %2985 = vdwg.mxu0
        %2986 = vrot.lane.b32.xlu0 %v438, 104
        %v2987 = vpop.permute.xlu0 %2986
        %2988 = vrot.lane.b32.xlu0 %v443, 104
        %v2989 = vpop.permute.xlu0 %2988
        %2990 = vrot.lane.b32.xlu0 %v438, 72
        %v2991 = vpop.permute.xlu0 %2990
        %2992 = vrot.lane.b32.xlu0 %v443, 72
        %v2993 = vpop.permute.xlu0 %2992
        %v2994 = vsel %vm480, %v2987, 0
        %v2996 = vsel %vm480, %v2989, 0
        %v2998 = vsel %vm480, %v2991, 0
        %v3000 = vsel %vm480, %v2993, 0
        %3002 = vmatprep.subr.mxu0 0.0
        %3003 = vmatpush1.xpose.msra.mxu0 0.0
        %3004 = vmatprep.subr.mxu0 0.0
        %3005 = vmatpush1.xpose.msra.mxu0 0.0
        %3006 = vmatprep.subr.mxu0 0.0
        %3007 = vmatpush1.xpose.msra.mxu0 0.0
        %3008 = vmatprep.subr.mxu0 0.0
        %3009 = vmatpush1.xpose.msra.mxu0 0.0
        %3010 = vmatprep.subr.mxu0 0.0
        %3011 = vmatpush1.xpose.msra.mxu0 0.0
        %3012 = vmatprep.subr.mxu0 0.0
        %3013 = vmatpush1.xpose.msra.mxu0 0.0
        %3014 = vmatprep.subr.mxu0 0.0
        %3015 = vmatpush1.xpose.msra.mxu0 0.0
        %3016 = vmatprep.subr.mxu0 0.0
        %3017 = vmatpush1.xpose.msra.mxu0 0.0
        %3018 = vmatprep.subr.mxu0 0.0
        %3019 = vmatpush1.xpose.msra.mxu0 0.0
        %3020 = vmatprep.subr.mxu0 0.0
        %3021 = vmatpush1.xpose.msra.mxu0 0.0
        %3022 = vmatprep.subr.mxu0 0.0
        %3023 = vmatpush1.xpose.msra.mxu0 0.0
        %3024 = vmatprep.subr.mxu0 0.0
        %3025 = vmatpush1.xpose.msra.mxu0 0.0
        %3026 = vmatprep.subr.mxu0 0.0
        %3027 = vmatpush1.xpose.msra.mxu0 0.0
        %3028 = vmatprep.subr.mxu0 0.0
        %3029 = vmatpush1.xpose.msra.mxu0 0.0
        %3030 = vmatprep.subr.mxu0 0.0
        %3031 = vmatpush1.xpose.msra.mxu0 %v3000
        %3032 = vmatprep.subr.mxu0 0.0
        %3033 = vmatpush1.xpose.msra.mxu0 %v2998
        %3034 = vmatprep.subr.mxu0 0.0
        %3035 = vmatpush2.xpose.msra.mxu0 0.0
        %3036 = vmatprep.subr.mxu0 0.0
        %3037 = vmatpush2.xpose.msra.mxu0 0.0
        %3038 = vmatprep.subr.mxu0 0.0
        %3039 = vmatpush2.xpose.msra.mxu0 0.0
        %3040 = vmatprep.subr.mxu0 0.0
        %3041 = vmatpush2.xpose.msra.mxu0 0.0
        %3042 = vmatprep.subr.mxu0 0.0
        %3043 = vmatpush2.xpose.msra.mxu0 0.0
        %3044 = vmatprep.subr.mxu0 0.0
        %3045 = vmatpush2.xpose.msra.mxu0 0.0
        %3046 = vmatprep.subr.mxu0 0.0
        %3047 = vmatpush2.xpose.msra.mxu0 0.0
        %3048 = vmatprep.subr.mxu0 0.0
        %3049 = vmatpush2.xpose.msra.mxu0 0.0
        %3050 = vmatprep.subr.mxu0 0.0
        %3051 = vmatpush2.xpose.msra.mxu0 0.0
        %3052 = vmatprep.subr.mxu0 0.0
        %3053 = vmatpush2.xpose.msra.mxu0 0.0
        %3054 = vmatprep.subr.mxu0 0.0
        %3055 = vmatpush2.xpose.msra.mxu0 0.0
        %3056 = vmatprep.subr.mxu0 0.0
        %3057 = vmatpush2.xpose.msra.mxu0 0.0
        %3058 = vmatprep.subr.mxu0 0.0
        %3059 = vmatpush2.xpose.msra.mxu0 0.0
        %3060 = vmatprep.subr.mxu0 0.0
        %3061 = vmatpush2.xpose.msra.mxu0 0.0
        %3062 = vmatprep.subr.mxu0 0.0
        %3063 = vmatpush2.xpose.msra.mxu0 0.0
        %3064 = vmatprep.subr.mxu0 0.0
        %3065 = vmatpush2.xpose.msra.mxu0 0.0
        %3066 = vmatprep.mubr.f32.mxu0 0.0
        %3067 = vmatmul.mubr.f32.gmra.mxu0 %v2994
        %v3068 = vpop.f32.mrf.mxu0
        %v3069 = vadd.f32 %v2889, %v3068
        %v3070 = vpop.f32.mrf.mxu0
        %3071 = vmatprep.mubr.f32.mxu0 0.0
        %3072 = vmatmul.mubr.f32.gmra.mxu0 %v2996
        %v3073 = vpop.f32.mrf.mxu0
        %v3074 = vadd.f32 %v2890, %v3073
        %v3075 = vpop.f32.mrf.mxu0
        %3076 = vdwg.mxu0
        %3077 = vrot.lane.b32.xlu0 %v448, 104
        %v3078 = vpop.permute.xlu0 %3077
        %3079 = vrot.lane.b32.xlu0 %v453, 104
        %v3080 = vpop.permute.xlu0 %3079
        %3081 = vrot.lane.b32.xlu0 %v448, 72
        %v3082 = vpop.permute.xlu0 %3081
        %3083 = vrot.lane.b32.xlu0 %v453, 72
        %v3084 = vpop.permute.xlu0 %3083
        %v3085 = vsel %vm480, %v3078, 0
        %v3087 = vsel %vm480, %v3080, 0
        %v3089 = vsel %vm480, %v3082, 0
        %v3091 = vsel %vm480, %v3084, 0
        %3093 = vmatprep.subr.mxu0 0.0
        %3094 = vmatpush1.xpose.msra.mxu0 0.0
        %3095 = vmatprep.subr.mxu0 0.0
        %3096 = vmatpush1.xpose.msra.mxu0 0.0
        %3097 = vmatprep.subr.mxu0 0.0
        %3098 = vmatpush1.xpose.msra.mxu0 0.0
        %3099 = vmatprep.subr.mxu0 0.0
        %3100 = vmatpush1.xpose.msra.mxu0 0.0
        %3101 = vmatprep.subr.mxu0 0.0
        %3102 = vmatpush1.xpose.msra.mxu0 0.0
        %3103 = vmatprep.subr.mxu0 0.0
        %3104 = vmatpush1.xpose.msra.mxu0 0.0
        %3105 = vmatprep.subr.mxu0 0.0
        %3106 = vmatpush1.xpose.msra.mxu0 0.0
        %3107 = vmatprep.subr.mxu0 0.0
        %3108 = vmatpush1.xpose.msra.mxu0 0.0
        %3109 = vmatprep.subr.mxu0 0.0
        %3110 = vmatpush1.xpose.msra.mxu0 0.0
        %3111 = vmatprep.subr.mxu0 0.0
        %3112 = vmatpush1.xpose.msra.mxu0 0.0
        %3113 = vmatprep.subr.mxu0 0.0
        %3114 = vmatpush1.xpose.msra.mxu0 0.0
        %3115 = vmatprep.subr.mxu0 0.0
        %3116 = vmatpush1.xpose.msra.mxu0 0.0
        %3117 = vmatprep.subr.mxu0 0.0
        %3118 = vmatpush1.xpose.msra.mxu0 0.0
        %3119 = vmatprep.subr.mxu0 0.0
        %3120 = vmatpush1.xpose.msra.mxu0 0.0
        %3121 = vmatprep.subr.mxu0 0.0
        %3122 = vmatpush1.xpose.msra.mxu0 %v3091
        %3123 = vmatprep.subr.mxu0 0.0
        %3124 = vmatpush1.xpose.msra.mxu0 %v3089
        %3125 = vmatprep.subr.mxu0 0.0
        %3126 = vmatpush2.xpose.msra.mxu0 0.0
        %3127 = vmatprep.subr.mxu0 0.0
        %3128 = vmatpush2.xpose.msra.mxu0 0.0
        %3129 = vmatprep.subr.mxu0 0.0
        %3130 = vmatpush2.xpose.msra.mxu0 0.0
        %3131 = vmatprep.subr.mxu0 0.0
        %3132 = vmatpush2.xpose.msra.mxu0 0.0
        %3133 = vmatprep.subr.mxu0 0.0
        %3134 = vmatpush2.xpose.msra.mxu0 0.0
        %3135 = vmatprep.subr.mxu0 0.0
        %3136 = vmatpush2.xpose.msra.mxu0 0.0
        %3137 = vmatprep.subr.mxu0 0.0
        %3138 = vmatpush2.xpose.msra.mxu0 0.0
        %3139 = vmatprep.subr.mxu0 0.0
        %3140 = vmatpush2.xpose.msra.mxu0 0.0
        %3141 = vmatprep.subr.mxu0 0.0
        %3142 = vmatpush2.xpose.msra.mxu0 0.0
        %3143 = vmatprep.subr.mxu0 0.0
        %3144 = vmatpush2.xpose.msra.mxu0 0.0
        %3145 = vmatprep.subr.mxu0 0.0
        %3146 = vmatpush2.xpose.msra.mxu0 0.0
        %3147 = vmatprep.subr.mxu0 0.0
        %3148 = vmatpush2.xpose.msra.mxu0 0.0
        %3149 = vmatprep.subr.mxu0 0.0
        %3150 = vmatpush2.xpose.msra.mxu0 0.0
        %3151 = vmatprep.subr.mxu0 0.0
        %3152 = vmatpush2.xpose.msra.mxu0 0.0
        %3153 = vmatprep.subr.mxu0 0.0
        %3154 = vmatpush2.xpose.msra.mxu0 0.0
        %3155 = vmatprep.subr.mxu0 0.0
        %3156 = vmatpush2.xpose.msra.mxu0 0.0
        %3157 = vmatprep.mubr.f32.mxu0 0.0
        %3158 = vmatmul.mubr.f32.gmra.mxu0 %v3085
        %v3159 = vpop.f32.mrf.mxu0
        %v3160 = vadd.f32 %v2891, %v3159
        %v3161 = vpop.f32.mrf.mxu0
        %3162 = vmatprep.mubr.f32.mxu0 0.0
        %3163 = vmatmul.mubr.f32.gmra.mxu0 %v3087
        %v3164 = vpop.f32.mrf.mxu0
        %v3165 = vadd.f32 %v2892, %v3164
        %v3166 = vpop.f32.mrf.mxu0
        %3167 = vdwg.mxu0
        %3168 = vrot.lane.b32.xlu0 %v458, 104
        %v3169 = vpop.permute.xlu0 %3168
        %3170 = vrot.lane.b32.xlu0 %v463, 104
        %v3171 = vpop.permute.xlu0 %3170
        %3172 = vrot.lane.b32.xlu0 %v458, 72
        %v3173 = vpop.permute.xlu0 %3172
        %3174 = vrot.lane.b32.xlu0 %v463, 72
        %v3175 = vpop.permute.xlu0 %3174
        %v3176 = vsel %vm480, %v3169, 0
        %v3178 = vsel %vm480, %v3171, 0
        %v3180 = vsel %vm480, %v3173, 0
        %v3182 = vsel %vm480, %v3175, 0
        %3184 = vmatprep.subr.mxu0 0.0
        %3185 = vmatpush1.xpose.msra.mxu0 0.0
        %3186 = vmatprep.subr.mxu0 0.0
        %3187 = vmatpush1.xpose.msra.mxu0 0.0
        %3188 = vmatprep.subr.mxu0 0.0
        %3189 = vmatpush1.xpose.msra.mxu0 0.0
        %3190 = vmatprep.subr.mxu0 0.0
        %3191 = vmatpush1.xpose.msra.mxu0 0.0
        %3192 = vmatprep.subr.mxu0 0.0
        %3193 = vmatpush1.xpose.msra.mxu0 0.0
        %3194 = vmatprep.subr.mxu0 0.0
        %3195 = vmatpush1.xpose.msra.mxu0 0.0
        %3196 = vmatprep.subr.mxu0 0.0
        %3197 = vmatpush1.xpose.msra.mxu0 0.0
        %3198 = vmatprep.subr.mxu0 0.0
        %3199 = vmatpush1.xpose.msra.mxu0 0.0
        %3200 = vmatprep.subr.mxu0 0.0
        %3201 = vmatpush1.xpose.msra.mxu0 0.0
        %3202 = vmatprep.subr.mxu0 0.0
        %3203 = vmatpush1.xpose.msra.mxu0 0.0
        %3204 = vmatprep.subr.mxu0 0.0
        %3205 = vmatpush1.xpose.msra.mxu0 0.0
        %3206 = vmatprep.subr.mxu0 0.0
        %3207 = vmatpush1.xpose.msra.mxu0 0.0
        %3208 = vmatprep.subr.mxu0 0.0
        %3209 = vmatpush1.xpose.msra.mxu0 0.0
        %3210 = vmatprep.subr.mxu0 0.0
        %3211 = vmatpush1.xpose.msra.mxu0 0.0
        %3212 = vmatprep.subr.mxu0 0.0
        %3213 = vmatpush1.xpose.msra.mxu0 %v3182
        %3214 = vmatprep.subr.mxu0 0.0
        %3215 = vmatpush1.xpose.msra.mxu0 %v3180
        %3216 = vmatprep.subr.mxu0 0.0
        %3217 = vmatpush2.xpose.msra.mxu0 0.0
        %3218 = vmatprep.subr.mxu0 0.0
        %3219 = vmatpush2.xpose.msra.mxu0 0.0
        %3220 = vmatprep.subr.mxu0 0.0
        %3221 = vmatpush2.xpose.msra.mxu0 0.0
        %3222 = vmatprep.subr.mxu0 0.0
        %3223 = vmatpush2.xpose.msra.mxu0 0.0
        %3224 = vmatprep.subr.mxu0 0.0
        %3225 = vmatpush2.xpose.msra.mxu0 0.0
        %3226 = vmatprep.subr.mxu0 0.0
        %3227 = vmatpush2.xpose.msra.mxu0 0.0
        %3228 = vmatprep.subr.mxu0 0.0
        %3229 = vmatpush2.xpose.msra.mxu0 0.0
        %3230 = vmatprep.subr.mxu0 0.0
        %3231 = vmatpush2.xpose.msra.mxu0 0.0
        %3232 = vmatprep.subr.mxu0 0.0
        %3233 = vmatpush2.xpose.msra.mxu0 0.0
        %3234 = vmatprep.subr.mxu0 0.0
        %3235 = vmatpush2.xpose.msra.mxu0 0.0
        %3236 = vmatprep.subr.mxu0 0.0
        %3237 = vmatpush2.xpose.msra.mxu0 0.0
        %3238 = vmatprep.subr.mxu0 0.0
        %3239 = vmatpush2.xpose.msra.mxu0 0.0
        %3240 = vmatprep.subr.mxu0 0.0
        %3241 = vmatpush2.xpose.msra.mxu0 0.0
        %3242 = vmatprep.subr.mxu0 0.0
        %3243 = vmatpush2.xpose.msra.mxu0 0.0
        %3244 = vmatprep.subr.mxu0 0.0
        %3245 = vmatpush2.xpose.msra.mxu0 0.0
        %3246 = vmatprep.subr.mxu0 0.0
        %3247 = vmatpush2.xpose.msra.mxu0 0.0
        %3248 = vmatprep.mubr.f32.mxu0 0.0
        %3249 = vmatmul.mubr.f32.gmra.mxu0 %v3176
        %v3250 = vpop.f32.mrf.mxu0
        %v3251 = vadd.f32 %v2893, %v3250
        %v3252 = vpop.f32.mrf.mxu0
        %3253 = vmatprep.mubr.f32.mxu0 0.0
        %3254 = vmatmul.mubr.f32.gmra.mxu0 %v3178
        %v3255 = vpop.f32.mrf.mxu0
        %v3256 = vadd.f32 %v2894, %v3255
        %v3257 = vpop.f32.mrf.mxu0
        %3258 = vdwg.mxu0
        %v3259 = vsel %vm831, %v2978, -inf
        %3260 = vmax.xlane.f32.xlu0 %v3259
        %v3261 = vpop.xlane.xlu0 %3260
        %v3262 = vsel %vm831, %v2983, -inf
        %3263 = vmax.xlane.f32.xlu0 %v3262
        %v3264 = vpop.xlane.xlu0 %3263
        %v3265 = vsel %vm831, %v3069, -inf
        %3266 = vmax.xlane.f32.xlu0 %v3265
        %v3267 = vpop.xlane.xlu0 %3266
        %v3268 = vsel %vm831, %v3074, -inf
        %3269 = vmax.xlane.f32.xlu0 %v3268
        %v3270 = vpop.xlane.xlu0 %3269
        %v3271 = vsel %vm831, %v3160, -inf
        %3272 = vmax.xlane.f32.xlu0 %v3271
        %v3273 = vpop.xlane.xlu0 %3272
        %v3274 = vsel %vm831, %v3165, -inf
        %3275 = vmax.xlane.f32.xlu0 %v3274
        %v3276 = vpop.xlane.xlu0 %3275
        %v3277 = vsel %vm831, %v3251, -inf
        %3278 = vmax.xlane.f32.xlu0 %v3277
        %v3279 = vpop.xlane.xlu0 %3278
        %v3280 = vsel %vm831, %v3256, -inf
        %3281 = vmax.xlane.f32.xlu0 %v3280
        %v3282 = vpop.xlane.xlu0 %3281
        %v3283 = vsub.f32 %v2978, %v3261
        %v3284 = vsub.f32 %v2983, %v3264
        %v3285 = vsub.f32 %v3069, %v3267
        %v3286 = vsub.f32 %v3074, %v3270
        %v3287 = vsub.f32 %v3160, %v3273
        %v3288 = vsub.f32 %v3165, %v3276
        %v3289 = vsub.f32 %v3251, %v3279
        %v3290 = vsub.f32 %v3256, %v3282
        %v3291 = vmul.f32 %v3283, 1.442695
        %v3292 = vpow.pop %v3291
        %v3293 = vmul.f32 %v3284, 1.442695
        %v3294 = vpow.pop %v3293
        %v3295 = vmul.f32 %v3285, 1.442695
        %v3296 = vpow.pop %v3295
        %v3297 = vmul.f32 %v3286, 1.442695
        %v3298 = vpow.pop %v3297
        %v3299 = vmul.f32 %v3287, 1.442695
        %v3300 = vpow.pop %v3299
        %v3301 = vmul.f32 %v3288, 1.442695
        %v3302 = vpow.pop %v3301
        %v3303 = vmul.f32 %v3289, 1.442695
        %v3304 = vpow.pop %v3303
        %v3305 = vmul.f32 %v3290, 1.442695
        %v3306 = vpow.pop %v3305
        %v3307 = vsel %vm831, %v3292, 0.0
        %3308 = vadd.xlane.f32.xlu0 %v3307
        %v3309 = vpop.xlane.xlu0 %3308
        %v3310 = vsel %vm831, %v3294, 0.0
        %3311 = vadd.xlane.f32.xlu0 %v3310
        %v3312 = vpop.xlane.xlu0 %3311
        %v3313 = vsel %vm831, %v3296, 0.0
        %3314 = vadd.xlane.f32.xlu0 %v3313
        %v3315 = vpop.xlane.xlu0 %3314
        %v3316 = vsel %vm831, %v3298, 0.0
        %3317 = vadd.xlane.f32.xlu0 %v3316
        %v3318 = vpop.xlane.xlu0 %3317
        %v3319 = vsel %vm831, %v3300, 0.0
        %3320 = vadd.xlane.f32.xlu0 %v3319
        %v3321 = vpop.xlane.xlu0 %3320
        %v3322 = vsel %vm831, %v3302, 0.0
        %3323 = vadd.xlane.f32.xlu0 %v3322
        %v3324 = vpop.xlane.xlu0 %3323
        %v3325 = vsel %vm831, %v3304, 0.0
        %3326 = vadd.xlane.f32.xlu0 %v3325
        %v3327 = vpop.xlane.xlu0 %3326
        %v3328 = vsel %vm831, %v3306, 0.0
        %3329 = vadd.xlane.f32.xlu0 %v3328
        %v3330 = vpop.xlane.xlu0 %3329
        %v3331 = vrcp.pop %v3309
        %v3332 = vrcp.pop %v3312
        %v3333 = vrcp.pop %v3315
        %v3334 = vrcp.pop %v3318
        %v3335 = vrcp.pop %v3321
        %v3336 = vrcp.pop %v3324
        %v3337 = vrcp.pop %v3327
        %v3338 = vrcp.pop %v3330
        %v3339 = vmul.f32 %v3292, %v3331
        %v3340 = vmul.f32 %v3294, %v3332
        %v3341 = vmul.f32 %v3296, %v3333
        %v3342 = vmul.f32 %v3298, %v3334
        %v3343 = vmul.f32 %v3300, %v3335
        %v3344 = vmul.f32 %v3302, %v3336
        %v3345 = vmul.f32 %v3304, %v3337
        %v3346 = vmul.f32 %v3306, %v3338
        %3347 = vrot.lane.b32.xlu0 %v428, 40
        %v3348 = vpop.permute.xlu0 %3347
        %3349 = vrot.lane.b32.xlu0 %v433, 40
        %v3350 = vpop.permute.xlu0 %3349
        %v3354 = vsel %vm831, %v3339, 0
        %v3357 = vsel %vm831, %v3340, 0
        %3359 = vmatprep.subr.mxu0 0.0
        %3360 = vmatpush1.msra.mxu0 0.0
        %3361 = vmatprep.subr.mxu0 0.0
        %3362 = vmatpush1.msra.mxu0 0.0
        %3363 = vmatprep.subr.mxu0 0.0
        %3364 = vmatpush1.msra.mxu0 0.0
        %3365 = vmatprep.subr.mxu0 0.0
        %3366 = vmatpush1.msra.mxu0 0.0
        %3367 = vmatprep.subr.mxu0 0.0
        %3368 = vmatpush1.msra.mxu0 0.0
        %3369 = vmatprep.subr.mxu0 0.0
        %3370 = vmatpush1.msra.mxu0 0.0
        %3371 = vmatprep.subr.mxu0 0.0
        %3372 = vmatpush1.msra.mxu0 0.0
        %3373 = vmatprep.subr.mxu0 0.0
        %3374 = vmatpush1.msra.mxu0 0.0
        %3375 = vmatprep.subr.mxu0 0.0
        %3376 = vmatpush1.msra.mxu0 0.0
        %3377 = vmatprep.subr.mxu0 0.0
        %3378 = vmatpush1.msra.mxu0 0.0
        %3379 = vmatprep.subr.mxu0 0.0
        %3380 = vmatpush1.msra.mxu0 0.0
        %3381 = vmatprep.subr.mxu0 0.0
        %3382 = vmatpush1.msra.mxu0 0.0
        %3383 = vmatprep.subr.mxu0 0.0
        %3384 = vmatpush1.msra.mxu0 0.0
        %3385 = vmatprep.subr.mxu0 0.0
        %3386 = vmatpush1.msra.mxu0 0.0
        %3387 = vmatprep.subr.mxu0 0.0
        %3388 = vmatpush1.msra.mxu0 %v3350
        %3389 = vmatprep.subr.mxu0 0.0
        %3390 = vmatpush1.msra.mxu0 %v3348
        %3391 = vmatprep.subr.mxu0 0.0
        %3392 = vmatpush2.msra.mxu0 0.0
        %3393 = vmatprep.subr.mxu0 0.0
        %3394 = vmatpush2.msra.mxu0 0.0
        %3395 = vmatprep.subr.mxu0 0.0
        %3396 = vmatpush2.msra.mxu0 0.0
        %3397 = vmatprep.subr.mxu0 0.0
        %3398 = vmatpush2.msra.mxu0 0.0
        %3399 = vmatprep.subr.mxu0 0.0
        %3400 = vmatpush2.msra.mxu0 0.0
        %3401 = vmatprep.subr.mxu0 0.0
        %3402 = vmatpush2.msra.mxu0 0.0
        %3403 = vmatprep.subr.mxu0 0.0
        %3404 = vmatpush2.msra.mxu0 0.0
        %3405 = vmatprep.subr.mxu0 0.0
        %3406 = vmatpush2.msra.mxu0 0.0
        %3407 = vmatprep.subr.mxu0 0.0
        %3408 = vmatpush2.msra.mxu0 0.0
        %3409 = vmatprep.subr.mxu0 0.0
        %3410 = vmatpush2.msra.mxu0 0.0
        %3411 = vmatprep.subr.mxu0 0.0
        %3412 = vmatpush2.msra.mxu0 0.0
        %3413 = vmatprep.subr.mxu0 0.0
        %3414 = vmatpush2.msra.mxu0 0.0
        %3415 = vmatprep.subr.mxu0 0.0
        %3416 = vmatpush2.msra.mxu0 0.0
        %3417 = vmatprep.subr.mxu0 0.0
        %3418 = vmatpush2.msra.mxu0 0.0
        %3419 = vmatprep.subr.mxu0 0.0
        %3420 = vmatpush2.msra.mxu0 0.0
        %3421 = vmatprep.subr.mxu0 0.0
        %3422 = vmatpush2.msra.mxu0 0.0
        %3423 = vmatprep.mubr.f32.mxu0 0.0
        %3424 = vmatmul.mubr.f32.gmra.mxu0 %v3354
        %v3425 = vpop.f32.mrf.mxu0
        %v3426 = vadd.f32 0.0, %v3425
        %v3427 = vpop.f32.mrf.mxu0
        %3428 = vmatprep.mubr.f32.mxu0 0.0
        %3429 = vmatmul.mubr.f32.gmra.mxu0 %v3357
        %v3430 = vpop.f32.mrf.mxu0
        %v3431 = vadd.f32 0.0, %v3430
        %v3432 = vpop.f32.mrf.mxu0
        %3433 = vdwg.mxu0
        %3434 = vrot.lane.b32.xlu0 %v438, 40
        %v3435 = vpop.permute.xlu0 %3434
        %3436 = vrot.lane.b32.xlu0 %v443, 40
        %v3437 = vpop.permute.xlu0 %3436
        %v3441 = vsel %vm831, %v3341, 0
        %v3444 = vsel %vm831, %v3342, 0
        %3446 = vmatprep.subr.mxu0 0.0
        %3447 = vmatpush1.msra.mxu0 0.0
        %3448 = vmatprep.subr.mxu0 0.0
        %3449 = vmatpush1.msra.mxu0 0.0
        %3450 = vmatprep.subr.mxu0 0.0
        %3451 = vmatpush1.msra.mxu0 0.0
        %3452 = vmatprep.subr.mxu0 0.0
        %3453 = vmatpush1.msra.mxu0 0.0
        %3454 = vmatprep.subr.mxu0 0.0
        %3455 = vmatpush1.msra.mxu0 0.0
        %3456 = vmatprep.subr.mxu0 0.0
        %3457 = vmatpush1.msra.mxu0 0.0
        %3458 = vmatprep.subr.mxu0 0.0
        %3459 = vmatpush1.msra.mxu0 0.0
        %3460 = vmatprep.subr.mxu0 0.0
        %3461 = vmatpush1.msra.mxu0 0.0
        %3462 = vmatprep.subr.mxu0 0.0
        %3463 = vmatpush1.msra.mxu0 0.0
        %3464 = vmatprep.subr.mxu0 0.0
        %3465 = vmatpush1.msra.mxu0 0.0
        %3466 = vmatprep.subr.mxu0 0.0
        %3467 = vmatpush1.msra.mxu0 0.0
        %3468 = vmatprep.subr.mxu0 0.0
        %3469 = vmatpush1.msra.mxu0 0.0
        %3470 = vmatprep.subr.mxu0 0.0
        %3471 = vmatpush1.msra.mxu0 0.0
        %3472 = vmatprep.subr.mxu0 0.0
        %3473 = vmatpush1.msra.mxu0 0.0
        %3474 = vmatprep.subr.mxu0 0.0
        %3475 = vmatpush1.msra.mxu0 %v3437
        %3476 = vmatprep.subr.mxu0 0.0
        %3477 = vmatpush1.msra.mxu0 %v3435
        %3478 = vmatprep.subr.mxu0 0.0
        %3479 = vmatpush2.msra.mxu0 0.0
        %3480 = vmatprep.subr.mxu0 0.0
        %3481 = vmatpush2.msra.mxu0 0.0
        %3482 = vmatprep.subr.mxu0 0.0
        %3483 = vmatpush2.msra.mxu0 0.0
        %3484 = vmatprep.subr.mxu0 0.0
        %3485 = vmatpush2.msra.mxu0 0.0
        %3486 = vmatprep.subr.mxu0 0.0
        %3487 = vmatpush2.msra.mxu0 0.0
        %3488 = vmatprep.subr.mxu0 0.0
        %3489 = vmatpush2.msra.mxu0 0.0
        %3490 = vmatprep.subr.mxu0 0.0
        %3491 = vmatpush2.msra.mxu0 0.0
        %3492 = vmatprep.subr.mxu0 0.0
        %3493 = vmatpush2.msra.mxu0 0.0
        %3494 = vmatprep.subr.mxu0 0.0
        %3495 = vmatpush2.msra.mxu0 0.0
        %3496 = vmatprep.subr.mxu0 0.0
        %3497 = vmatpush2.msra.mxu0 0.0
        %3498 = vmatprep.subr.mxu0 0.0
        %3499 = vmatpush2.msra.mxu0 0.0
        %3500 = vmatprep.subr.mxu0 0.0
        %3501 = vmatpush2.msra.mxu0 0.0
        %3502 = vmatprep.subr.mxu0 0.0
        %3503 = vmatpush2.msra.mxu0 0.0
        %3504 = vmatprep.subr.mxu0 0.0
        %3505 = vmatpush2.msra.mxu0 0.0
        %3506 = vmatprep.subr.mxu0 0.0
        %3507 = vmatpush2.msra.mxu0 0.0
        %3508 = vmatprep.subr.mxu0 0.0
        %3509 = vmatpush2.msra.mxu0 0.0
        %3510 = vmatprep.mubr.f32.mxu0 0.0
        %3511 = vmatmul.mubr.f32.gmra.mxu0 %v3441
        %v3512 = vpop.f32.mrf.mxu0
        %v3513 = vadd.f32 0.0, %v3512
        %v3514 = vpop.f32.mrf.mxu0
        %3515 = vmatprep.mubr.f32.mxu0 0.0
        %3516 = vmatmul.mubr.f32.gmra.mxu0 %v3444
        %v3517 = vpop.f32.mrf.mxu0
        %v3518 = vadd.f32 0.0, %v3517
        %v3519 = vpop.f32.mrf.mxu0
        %3520 = vdwg.mxu0
        %3521 = vrot.lane.b32.xlu0 %v448, 40
        %v3522 = vpop.permute.xlu0 %3521
        %3523 = vrot.lane.b32.xlu0 %v453, 40
        %v3524 = vpop.permute.xlu0 %3523
        %v3528 = vsel %vm831, %v3343, 0
        %v3531 = vsel %vm831, %v3344, 0
        %3533 = vmatprep.subr.mxu0 0.0
        %3534 = vmatpush1.msra.mxu0 0.0
        %3535 = vmatprep.subr.mxu0 0.0
        %3536 = vmatpush1.msra.mxu0 0.0
        %3537 = vmatprep.subr.mxu0 0.0
        %3538 = vmatpush1.msra.mxu0 0.0
        %3539 = vmatprep.subr.mxu0 0.0
        %3540 = vmatpush1.msra.mxu0 0.0
        %3541 = vmatprep.subr.mxu0 0.0
        %3542 = vmatpush1.msra.mxu0 0.0
        %3543 = vmatprep.subr.mxu0 0.0
        %3544 = vmatpush1.msra.mxu0 0.0
        %3545 = vmatprep.subr.mxu0 0.0
        %3546 = vmatpush1.msra.mxu0 0.0
        %3547 = vmatprep.subr.mxu0 0.0
        %3548 = vmatpush1.msra.mxu0 0.0
        %3549 = vmatprep.subr.mxu0 0.0
        %3550 = vmatpush1.msra.mxu0 0.0
        %3551 = vmatprep.subr.mxu0 0.0
        %3552 = vmatpush1.msra.mxu0 0.0
        %3553 = vmatprep.subr.mxu0 0.0
        %3554 = vmatpush1.msra.mxu0 0.0
        %3555 = vmatprep.subr.mxu0 0.0
        %3556 = vmatpush1.msra.mxu0 0.0
        %3557 = vmatprep.subr.mxu0 0.0
        %3558 = vmatpush1.msra.mxu0 0.0
        %3559 = vmatprep.subr.mxu0 0.0
        %3560 = vmatpush1.msra.mxu0 0.0
        %3561 = vmatprep.subr.mxu0 0.0
        %3562 = vmatpush1.msra.mxu0 %v3524
        %3563 = vmatprep.subr.mxu0 0.0
        %3564 = vmatpush1.msra.mxu0 %v3522
        %3565 = vmatprep.subr.mxu0 0.0
        %3566 = vmatpush2.msra.mxu0 0.0
        %3567 = vmatprep.subr.mxu0 0.0
        %3568 = vmatpush2.msra.mxu0 0.0
        %3569 = vmatprep.subr.mxu0 0.0
        %3570 = vmatpush2.msra.mxu0 0.0
        %3571 = vmatprep.subr.mxu0 0.0
        %3572 = vmatpush2.msra.mxu0 0.0
        %3573 = vmatprep.subr.mxu0 0.0
        %3574 = vmatpush2.msra.mxu0 0.0
        %3575 = vmatprep.subr.mxu0 0.0
        %3576 = vmatpush2.msra.mxu0 0.0
        %3577 = vmatprep.subr.mxu0 0.0
        %3578 = vmatpush2.msra.mxu0 0.0
        %3579 = vmatprep.subr.mxu0 0.0
        %3580 = vmatpush2.msra.mxu0 0.0
        %3581 = vmatprep.subr.mxu0 0.0
        %3582 = vmatpush2.msra.mxu0 0.0
        %3583 = vmatprep.subr.mxu0 0.0
        %3584 = vmatpush2.msra.mxu0 0.0
        %3585 = vmatprep.subr.mxu0 0.0
        %3586 = vmatpush2.msra.mxu0 0.0
        %3587 = vmatprep.subr.mxu0 0.0
        %3588 = vmatpush2.msra.mxu0 0.0
        %3589 = vmatprep.subr.mxu0 0.0
        %3590 = vmatpush2.msra.mxu0 0.0
        %3591 = vmatprep.subr.mxu0 0.0
        %3592 = vmatpush2.msra.mxu0 0.0
        %3593 = vmatprep.subr.mxu0 0.0
        %3594 = vmatpush2.msra.mxu0 0.0
        %3595 = vmatprep.subr.mxu0 0.0
        %3596 = vmatpush2.msra.mxu0 0.0
        %3597 = vmatprep.mubr.f32.mxu0 0.0
        %3598 = vmatmul.mubr.f32.gmra.mxu0 %v3528
        %v3599 = vpop.f32.mrf.mxu0
        %v3600 = vadd.f32 0.0, %v3599
        %v3601 = vpop.f32.mrf.mxu0
        %3602 = vmatprep.mubr.f32.mxu0 0.0
        %3603 = vmatmul.mubr.f32.gmra.mxu0 %v3531
        %v3604 = vpop.f32.mrf.mxu0
        %v3605 = vadd.f32 0.0, %v3604
        %v3606 = vpop.f32.mrf.mxu0
        %3607 = vdwg.mxu0
        %3608 = vrot.lane.b32.xlu0 %v458, 40
        %v3609 = vpop.permute.xlu0 %3608
        %3610 = vrot.lane.b32.xlu0 %v463, 40
        %v3611 = vpop.permute.xlu0 %3610
        %v3615 = vsel %vm831, %v3345, 0
        %v3618 = vsel %vm831, %v3346, 0
        %3620 = vmatprep.subr.mxu0 0.0
        %3621 = vmatpush1.msra.mxu0 0.0
        %3622 = vmatprep.subr.mxu0 0.0
        %3623 = vmatpush1.msra.mxu0 0.0
        %3624 = vmatprep.subr.mxu0 0.0
        %3625 = vmatpush1.msra.mxu0 0.0
        %3626 = vmatprep.subr.mxu0 0.0
        %3627 = vmatpush1.msra.mxu0 0.0
        %3628 = vmatprep.subr.mxu0 0.0
        %3629 = vmatpush1.msra.mxu0 0.0
        %3630 = vmatprep.subr.mxu0 0.0
        %3631 = vmatpush1.msra.mxu0 0.0
        %3632 = vmatprep.subr.mxu0 0.0
        %3633 = vmatpush1.msra.mxu0 0.0
        %3634 = vmatprep.subr.mxu0 0.0
        %3635 = vmatpush1.msra.mxu0 0.0
        %3636 = vmatprep.subr.mxu0 0.0
        %3637 = vmatpush1.msra.mxu0 0.0
        %3638 = vmatprep.subr.mxu0 0.0
        %3639 = vmatpush1.msra.mxu0 0.0
        %3640 = vmatprep.subr.mxu0 0.0
        %3641 = vmatpush1.msra.mxu0 0.0
        %3642 = vmatprep.subr.mxu0 0.0
        %3643 = vmatpush1.msra.mxu0 0.0
        %3644 = vmatprep.subr.mxu0 0.0
        %3645 = vmatpush1.msra.mxu0 0.0
        %3646 = vmatprep.subr.mxu0 0.0
        %3647 = vmatpush1.msra.mxu0 0.0
        %3648 = vmatprep.subr.mxu0 0.0
        %3649 = vmatpush1.msra.mxu0 %v3611
        %3650 = vmatprep.subr.mxu0 0.0
        %3651 = vmatpush1.msra.mxu0 %v3609
        %3652 = vmatprep.subr.mxu0 0.0
        %3653 = vmatpush2.msra.mxu0 0.0
        %3654 = vmatprep.subr.mxu0 0.0
        %3655 = vmatpush2.msra.mxu0 0.0
        %3656 = vmatprep.subr.mxu0 0.0
        %3657 = vmatpush2.msra.mxu0 0.0
        %3658 = vmatprep.subr.mxu0 0.0
        %3659 = vmatpush2.msra.mxu0 0.0
        %3660 = vmatprep.subr.mxu0 0.0
        %3661 = vmatpush2.msra.mxu0 0.0
        %3662 = vmatprep.subr.mxu0 0.0
        %3663 = vmatpush2.msra.mxu0 0.0
        %3664 = vmatprep.subr.mxu0 0.0
        %3665 = vmatpush2.msra.mxu0 0.0
        %3666 = vmatprep.subr.mxu0 0.0
        %3667 = vmatpush2.msra.mxu0 0.0
        %3668 = vmatprep.subr.mxu0 0.0
        %3669 = vmatpush2.msra.mxu0 0.0
        %3670 = vmatprep.subr.mxu0 0.0
        %3671 = vmatpush2.msra.mxu0 0.0
        %3672 = vmatprep.subr.mxu0 0.0
        %3673 = vmatpush2.msra.mxu0 0.0
        %3674 = vmatprep.subr.mxu0 0.0
        %3675 = vmatpush2.msra.mxu0 0.0
        %3676 = vmatprep.subr.mxu0 0.0
        %3677 = vmatpush2.msra.mxu0 0.0
        %3678 = vmatprep.subr.mxu0 0.0
        %3679 = vmatpush2.msra.mxu0 0.0
        %3680 = vmatprep.subr.mxu0 0.0
        %3681 = vmatpush2.msra.mxu0 0.0
        %3682 = vmatprep.subr.mxu0 0.0
        %3683 = vmatpush2.msra.mxu0 0.0
        %3684 = vmatprep.mubr.f32.mxu0 0.0
        %3685 = vmatmul.mubr.f32.gmra.mxu0 %v3615
        %v3686 = vpop.f32.mrf.mxu0
        %v3687 = vadd.f32 0.0, %v3686
        %v3688 = vpop.f32.mrf.mxu0
        %3689 = vmatprep.mubr.f32.mxu0 0.0
        %3690 = vmatmul.mubr.f32.gmra.mxu0 %v3618
        %v3691 = vpop.f32.mrf.mxu0
        %v3692 = vadd.f32 0.0, %v3691
        %v3693 = vpop.f32.mrf.mxu0
        %3694 = vdwg.mxu0
        %3703 = vrot.lane.b32.xlu0 %v1808, 8
        %v3704 = vpop.permute.xlu0 %3703
        %3705 = vrot.lane.b32.xlu0 %v1813, 8
        %v3706 = vpop.permute.xlu0 %3705
        %3707 = vrot.lane.b32.xlu0 %v1895, 8
        %v3708 = vpop.permute.xlu0 %3707
        %3709 = vrot.lane.b32.xlu0 %v1900, 8
        %v3710 = vpop.permute.xlu0 %3709
        %3711 = vrot.lane.b32.xlu0 %v1982, 8
        %v3712 = vpop.permute.xlu0 %3711
        %3713 = vrot.lane.b32.xlu0 %v1987, 8
        %v3714 = vpop.permute.xlu0 %3713
        %3715 = vrot.lane.b32.xlu0 %v2069, 8
        %v3716 = vpop.permute.xlu0 %3715
        %3717 = vrot.lane.b32.xlu0 %v2074, 8
        %v3718 = vpop.permute.xlu0 %3717
        %3735 = vrot.lane.b32.xlu0 %v2617, 16
        %v3736 = vpop.permute.xlu0 %3735
        %3737 = vrot.lane.b32.xlu0 %v2622, 16
        %v3738 = vpop.permute.xlu0 %3737
        %3739 = vrot.lane.b32.xlu0 %v2704, 16
        %v3740 = vpop.permute.xlu0 %3739
        %3741 = vrot.lane.b32.xlu0 %v2709, 16
        %v3742 = vpop.permute.xlu0 %3741
        %3743 = vrot.lane.b32.xlu0 %v2791, 16
        %v3744 = vpop.permute.xlu0 %3743
        %3745 = vrot.lane.b32.xlu0 %v2796, 16
        %v3746 = vpop.permute.xlu0 %3745
        %3747 = vrot.lane.b32.xlu0 %v2878, 16
        %v3748 = vpop.permute.xlu0 %3747
        %3749 = vrot.lane.b32.xlu0 %v2883, 16
        %v3750 = vpop.permute.xlu0 %3749
        %3767 = vrot.lane.b32.xlu0 %v3426, 24
        %v3768 = vpop.permute.xlu0 %3767
        %3769 = vrot.lane.b32.xlu0 %v3431, 24
        %v3770 = vpop.permute.xlu0 %3769
        %3771 = vrot.lane.b32.xlu0 %v3513, 24
        %v3772 = vpop.permute.xlu0 %3771
        %3773 = vrot.lane.b32.xlu0 %v3518, 24
        %v3774 = vpop.permute.xlu0 %3773
        %3775 = vrot.lane.b32.xlu0 %v3600, 24
        %v3776 = vpop.permute.xlu0 %3775
        %3777 = vrot.lane.b32.xlu0 %v3605, 24
        %v3778 = vpop.permute.xlu0 %3777
        %3779 = vrot.lane.b32.xlu0 %v3687, 24
        %v3780 = vpop.permute.xlu0 %3779
        %3781 = vrot.lane.b32.xlu0 %v3692, 24
        %v3782 = vpop.permute.xlu0 %3781
        %v3791 = vsel %vm480, %v999, %v3704
        %v3792 = vsel %vm480, %v1004, %v3706
        %v3793 = vsel %vm480, %v1086, %v3708
        %v3794 = vsel %vm480, %v1091, %v3710
        %v3795 = vsel %vm480, %v1173, %v3712
        %v3796 = vsel %vm480, %v1178, %v3714
        %v3797 = vsel %vm480, %v1260, %v3716
        %v3798 = vsel %vm480, %v1265, %v3718
        %v3799 = vsel %vm831, %v3791, %v3736
        %v3800 = vsel %vm831, %v3792, %v3738
        %v3801 = vsel %vm831, %v3793, %v3740
        %v3802 = vsel %vm831, %v3794, %v3742
        %v3803 = vsel %vm831, %v3795, %v3744
        %v3804 = vsel %vm831, %v3796, %v3746
        %v3805 = vsel %vm831, %v3797, %v3748
        %v3806 = vsel %vm831, %v3798, %v3750
        %vm3807 = vcmask 195584
        %v3808 = vsel %vm3807, %v3799, %v3768
        %v3809 = vsel %vm3807, %v3800, %v3770
        %v3810 = vsel %vm3807, %v3801, %v3772
        %v3811 = vsel %vm3807, %v3802, %v3774
        %v3812 = vsel %vm3807, %v3803, %v3776
        %v3813 = vsel %vm3807, %v3804, %v3778
        %v3814 = vsel %vm3807, %v3805, %v3780
        %v3815 = vsel %vm3807, %v3806, %v3782
        %v3816 = vld [vmem:[#allocation7] sm:$0xff]
        %v3817 = vld [vmem:[#allocation7 + $0x8] sm:$0xff]
        %v3818 = vld [vmem:[#allocation7 + $0x10] sm:$0xff]
        %v3819 = vld [vmem:[#allocation7 + $0x18] sm:$0xff]
        %v3820 = vld [vmem:[%s4] sm:$0x1]
        %v3822 = vlaneseq
        %v3823 = vshrl.u32 %v3822, 7
        %v3824 = vsub.s32 0, %v3823
        %v3825 = vrot.slane %v3820, %v3824
        %v3828 = vsel %vm336, %v3808, 0
        %v3831 = vsel %vm336, %v3809, 0
        %v3834 = vsel %vm336, %v3810, 0
        %v3837 = vsel %vm336, %v3811, 0
        %v3840 = vsel %vm336, %v3812, 0
        %v3843 = vsel %vm336, %v3813, 0
        %v3846 = vsel %vm336, %v3814, 0
        %v3849 = vsel %vm336, %v3815, 0
        %3851 = vmatprep.subr.mxu0 0.0
        %3852 = vmatpush1.msra.mxu0 0.0
        %3853 = vmatprep.subr.mxu0 0.0
        %3854 = vmatpush1.msra.mxu0 0.0
        %3855 = vmatprep.subr.mxu0 0.0
        %3856 = vmatpush1.msra.mxu0 0.0
        %3857 = vmatprep.subr.mxu0 0.0
        %3858 = vmatpush1.msra.mxu0 0.0
        %3859 = vmatprep.subr.mxu0 0.0
        %3860 = vmatpush1.msra.mxu0 0.0
        %3861 = vmatprep.subr.mxu0 0.0
        %3862 = vmatpush1.msra.mxu0 0.0
        %3863 = vmatprep.subr.mxu0 0.0
        %3864 = vmatpush1.msra.mxu0 0.0
        %3865 = vmatprep.subr.mxu0 0.0
        %3866 = vmatpush1.msra.mxu0 0.0
        %3867 = vmatprep.subr.mxu0 0.0
        %3868 = vmatpush1.msra.mxu0 0.0
        %3869 = vmatprep.subr.mxu0 0.0
        %3870 = vmatpush1.msra.mxu0 0.0
        %3871 = vmatprep.subr.mxu0 0.0
        %3872 = vmatpush1.msra.mxu0 0.0
        %3873 = vmatprep.subr.mxu0 0.0
        %3874 = vmatpush1.msra.mxu0 0.0
        %3875 = vmatprep.subr.mxu0 0.0
        %3876 = vmatpush1.msra.mxu0 %v3819
        %3877 = vmatprep.subr.mxu0 0.0
        %3878 = vmatpush1.msra.mxu0 %v3818
        %3879 = vmatprep.subr.mxu0 0.0
        %3880 = vmatpush1.msra.mxu0 %v3817
        %3881 = vmatprep.subr.mxu0 0.0
        %3882 = vmatpush1.msra.mxu0 %v3816
        %3883 = vmatprep.subr.mxu0 0.0
        %3884 = vmatpush2.msra.mxu0 0.0
        %3885 = vmatprep.subr.mxu0 0.0
        %3886 = vmatpush2.msra.mxu0 0.0
        %3887 = vmatprep.subr.mxu0 0.0
        %3888 = vmatpush2.msra.mxu0 0.0
        %3889 = vmatprep.subr.mxu0 0.0
        %3890 = vmatpush2.msra.mxu0 0.0
        %3891 = vmatprep.subr.mxu0 0.0
        %3892 = vmatpush2.msra.mxu0 0.0
        %3893 = vmatprep.subr.mxu0 0.0
        %3894 = vmatpush2.msra.mxu0 0.0
        %3895 = vmatprep.subr.mxu0 0.0
        %3896 = vmatpush2.msra.mxu0 0.0
        %3897 = vmatprep.subr.mxu0 0.0
        %3898 = vmatpush2.msra.mxu0 0.0
        %3899 = vmatprep.subr.mxu0 0.0
        %3900 = vmatpush2.msra.mxu0 0.0
        %3901 = vmatprep.subr.mxu0 0.0
        %3902 = vmatpush2.msra.mxu0 0.0
        %3903 = vmatprep.subr.mxu0 0.0
        %3904 = vmatpush2.msra.mxu0 0.0
        %3905 = vmatprep.subr.mxu0 0.0
        %3906 = vmatpush2.msra.mxu0 0.0
        %3907 = vmatprep.subr.mxu0 0.0
        %3908 = vmatpush2.msra.mxu0 0.0
        %3909 = vmatprep.subr.mxu0 0.0
        %3910 = vmatpush2.msra.mxu0 0.0
        %3911 = vmatprep.subr.mxu0 0.0
        %3912 = vmatpush2.msra.mxu0 0.0
        %3913 = vmatprep.subr.mxu0 0.0
        %3914 = vmatpush2.msra.mxu0 0.0
        %3915 = vmatprep.mubr.f32.mxu0 0.0
        %3916 = vmatmul.mubr.f32.gmra.mxu0 %v3828
        %v3917 = vpop.f32.mrf.mxu0
        %v3918 = vadd.f32 %v3825, %v3917
        %v3919 = vpop.f32.mrf.mxu0
        %3920 = vmatprep.mubr.f32.mxu0 0.0
        %3921 = vmatmul.mubr.f32.gmra.mxu0 %v3831
        %v3922 = vpop.f32.mrf.mxu0
        %v3923 = vadd.f32 %v3825, %v3922
        %v3924 = vpop.f32.mrf.mxu0
        %3925 = vmatprep.mubr.f32.mxu0 0.0
        %3926 = vmatmul.mubr.f32.gmra.mxu0 %v3834
        %v3927 = vpop.f32.mrf.mxu0
        %v3928 = vadd.f32 %v3825, %v3927
        %v3929 = vpop.f32.mrf.mxu0
        %3930 = vmatprep.mubr.f32.mxu0 0.0
        %3931 = vmatmul.mubr.f32.gmra.mxu0 %v3837
        %v3932 = vpop.f32.mrf.mxu0
        %v3933 = vadd.f32 %v3825, %v3932
        %v3934 = vpop.f32.mrf.mxu0
        %3935 = vmatprep.mubr.f32.mxu0 0.0
        %3936 = vmatmul.mubr.f32.gmra.mxu0 %v3840
        %v3937 = vpop.f32.mrf.mxu0
        %v3938 = vadd.f32 %v3825, %v3937
        %v3939 = vpop.f32.mrf.mxu0
        %3940 = vmatprep.mubr.f32.mxu0 0.0
        %3941 = vmatmul.mubr.f32.gmra.mxu0 %v3843
        %v3942 = vpop.f32.mrf.mxu0
        %v3943 = vadd.f32 %v3825, %v3942
        %v3944 = vpop.f32.mrf.mxu0
        %3945 = vmatprep.mubr.f32.mxu0 0.0
        %3946 = vmatmul.mubr.f32.gmra.mxu0 %v3846
        %v3947 = vpop.f32.mrf.mxu0
        %v3948 = vadd.f32 %v3825, %v3947
        %v3949 = vpop.f32.mrf.mxu0
        %3950 = vmatprep.mubr.f32.mxu0 0.0
        %3951 = vmatmul.mubr.f32.gmra.mxu0 %v3849
        %v3952 = vpop.f32.mrf.mxu0
        %v3953 = vadd.f32 %v3825, %v3952
        %v3954 = vpop.f32.mrf.mxu0
        %3955 = vdwg.mxu0
        %3956 = vst.msk [vmem:[%s314] sm:$0xff] %vm336, %v3918
        %3957 = vst.msk [vmem:[%s314 + $0x8] sm:$0xff] %vm336, %v3923
        %3958 = vst.msk [vmem:[%s314 + $0x10] sm:$0xff] %vm336, %v3928
        %3959 = vst.msk [vmem:[%s314 + $0x18] sm:$0xff] %vm336, %v3933
        %3960 = vst.msk [vmem:[%s314 + $0x20] sm:$0xff] %vm336, %v3938
        %3961 = vst.msk [vmem:[%s314 + $0x28] sm:$0xff] %vm336, %v3943
        %3962 = vst.msk [vmem:[%s314 + $0x30] sm:$0xff] %vm336, %v3948
        %3963 = vst.msk [vmem:[%s314 + $0x38] sm:$0xff] %vm336, %v3953
        %s3964 = sand.u32 %s164, 1
        %s3965 = scalar_lea.sflag [#allocation4], %s3964
        %s3966 = sand.u32 %s164, 1
        %s3967 = smul.addr %s3966, 64
        %s3968 = scalar_lea.vmem [#allocation10], %s3967
        // Predicated region
        $region61: #{window_attention_pallas.1} parent=43 // pred_check
          %p3969 = pneg %p174
        $region62: #{window_attention_pallas.1} parent=43 // pred_check_branch
          %3971 = sbr.rel (%p3969) target = $region64
        $region63: #{window_attention_pallas.1} parent=43 // pred_region
          %s3972 = smul.u32 4, %s25
          %s3974 = ssub.s32 1024, 1024
          %3975 = vsyncadd %s3965, %s3974
          %s3976 = smul.addr %s3972, 2
          %s3977 = smul.addr %s3976, 128
          %s3978 = scalar_lea.hbm %s6, %s3977
          %s3979 = sshll.u32 %s3968, 4
          %s3980 = int_to_ptr.vmem [resolvable:$true] %s3979
          %3985 = dma.vmem_to_hbm [thread:$0]  %s3980, 1024, %s3978, %s3965, 128, 128, 8
        $region64: #{window_attention_pallas.1} parent=43 // pred_fallthru
          _
      $region44: #{window_attention_pallas.1} parent=5 // pred_fallthru
        _
      %p3986 = scmp.le.s32.totalorder 2, %s20
      // Predicated region
      $region65: #{window_attention_pallas.1} parent=5 // pred_check
        %p3987 = pneg %p3986
      $region66: #{window_attention_pallas.1} parent=5 // pred_check_branch
        %3989 = sbr.rel (%p3987) target = $region68
      $region67: #{window_attention_pallas.1} parent=5 // pred_region
        %s3990 = ssub.s32 %s20, 2
        // Predicated region
        $region69: #{window_attention_pallas.1} parent=67 // pred_check
          %p3991 = pneg %p180
        $region70: #{window_attention_pallas.1} parent=67 // pred_check_branch
          %3993 = sbr.rel (%p3991) target = $region72
        $region71: #{window_attention_pallas.1} parent=67 // pred_region
          %s3994 = sand.u32 %s165, 1
          %s3995 = scalar_lea.sflag [#allocation4], %s3994
          %s3996 = sand.u32 %s165, 1
          %s3997 = smul.addr %s3996, 64
          %s3998 = scalar_lea.vmem [#allocation10], %s3997
          %3999 = dma.done %s3995, 1024
        $region72: #{window_attention_pallas.1} parent=67 // pred_fallthru
          _
      $region68: #{window_attention_pallas.1} parent=5 // pred_fallthru
        _
    $region6: #{window_attention_pallas.1} parent=1 // loop_footer
      %s24 = sadd.s32 1, %s20
    $region7: #{window_attention_pallas.1} parent=1 // loop_footer_branch
      %19 = sbr.rel target = $region3
    $region8: #{window_attention_pallas.1} parent=1 // loop_exit
      _
    %4000 = vsyncpa [#allocation3], 1
    %s4001 = scalar_lea.sflag [#allocation3], 1
    %4002 = vsyncpa %s4001, 1
    %4003 = vsyncpa [#allocation6], 1
    %4004 = vsyncpa [#allocation9], 1
    %4005 = vsyncpa [#allocation4], 1
    %s4006 = scalar_lea.sflag [#allocation4], 1
    %4007 = vsyncpa %s4006, 1

</llo_original>
